<compile_context>
chip_gen: v7x
topology: tpu7x:2x2x1
jax: 0.10.0
libtpu: 0.0.40
codegen_flags: <defaults>
</compile_context>

<pallas_src>
import functools
import math

import jax
import jax.numpy as jnp
from jax.experimental import pallas as pl
from jax.experimental.pallas import tpu as pltpu


def _round_up(x, m):
    return (x + m - 1) // m * m


# --------------------------- fused BasicBlock kernel ------------------------ #

def _make_block_kernel(taps1, res_tap, Ho, Wo, k2, planes_p, has_shortcut,
                       res_cin):
    """One program = one batch image.  conv1+bn1+htanh -> VMEM scratch ->
    conv2+bn2 -> (+ fused 1x1-conv/bn shortcut or identity) -> htanh."""
    m = Ho * Wo
    taps2 = [(dh, dw) for dh in range(k2) for dw in range(k2)]

    def kernel(x_ref, w1_ref, s1_ref, w2_ref, s2_ref, *rest):
        if has_shortcut:
            wsc_ref, ssc_ref, o_ref, mid_ref = rest
        else:
            o_ref, mid_ref = rest
        cin = x_ref.shape[-1]

        def accum(win_fn, w_ref, ntaps, kblk):
            acc = None
            for r in range(ntaps):
                # bf16 A operand straight from VMEM (no f32 round-trip),
                # bf16 weights, f32 MXU accumulator.
                d = jnp.dot(win_fn(r), w_ref[r * kblk:(r + 1) * kblk, :],
                            preferred_element_type=jnp.float32)
                acc = d if acc is None else acc + d
            return acc

        # ---- conv1 + bn1(scale folded) + Hardtanh : implicit GEMM per tap ----
        def win1(r):
            p, dh, dw = taps1[r]
            return x_ref[p, dh:dh + Ho, dw:dw + Wo, :].reshape(m, cin)

        y1 = jnp.clip(accum(win1, w1_ref, len(taps1), cin) + s1_ref[...],
                      -1.0, 1.0)
        # QuantizedActivation(quantization=None) is the identity.

        # conv1 output -> zero-haloed VMEM scratch (never touches HBM)
        mid_ref[...] = jnp.zeros_like(mid_ref)
        mid_ref[1:1 + Ho, 1:1 + Wo, :] = (
            y1.reshape(Ho, Wo, planes_p).astype(mid_ref.dtype))

        # ---- conv2 + bn2(scale folded) ----
        def win2(r):
            dh, dw = taps2[r]
            return mid_ref[dh:dh + Ho, dw:dw + Wo, :].reshape(m, planes_p)

        y = accum(win2, w2_ref, len(taps2), planes_p) + s2_ref[...]

        # ---- shortcut (1x1 conv + bn fused here — no extra call / HBM trip) ----
        p, dh, dw = res_tap
        xres = x_ref[p, dh:dh + Ho, dw:dw + Wo, :].reshape(m, cin)
        if has_shortcut:
            y = y + (jnp.dot(xres, wsc_ref[...],
                             preferred_element_type=jnp.float32) + ssc_ref[...])
        else:
            r32 = xres.astype(jnp.float32)
            if planes_p != res_cin:      # zero-pad identity residual channels
                r32 = jnp.concatenate(
                    [r32, jnp.zeros((m, planes_p - res_cin), jnp.float32)],
                    axis=1)
            y = y + r32
        o_ref[...] = jnp.clip(y, -1.0, 1.0).astype(o_ref.dtype)   # final Hardtanh

    return kernel


# ------------------------------ host-side helpers ---------------------------- #

def fold_bn(gamma, beta, mean, var, eps=1e-5):
    scale = gamma / jnp.sqrt(var + eps)
    return scale, beta - mean * scale


def _fold_weight(w, scale, cin_pad, cout_pad):
    """Torch-layout conv weight (Cout,Cin,kh,kw) -> bf16 GEMM matrix
    (kh*kw*(Cin+cin_pad), Cout+cout_pad) with the BN scale folded in."""
    cout, cin, kh, kw = w.shape
    wt = jnp.transpose(w, (2, 3, 1, 0)).astype(jnp.float32) * scale  # (kh,kw,cin,cout)
    wt = jnp.pad(wt, ((0, 0), (0, 0), (0, cin_pad), (0, cout_pad)))
    return wt.reshape(kh * kw * (cin + cin_pad),
                      cout + cout_pad).astype(jnp.bfloat16)


def _parity_slabs(x_pad, stride):
    """(B,Hp,Wp,C) -> (P,B,Hs,Ws,C), P=s*s, so every conv tap is a contiguous
    window of one slab even for strided convs (HBM traffic ~1x, no im2col)."""
    s = stride
    if s == 1:
        return x_pad[None]
    parts = [x_pad[:, pr::s, pc::s, :] for pr in range(s) for pc in range(s)]
    Hs = max(p.shape[1] for p in parts)
    Ws = max(p.shape[2] for p in parts)
    parts = [jnp.pad(p, ((0, 0), (0, Hs - p.shape[1]),
                         (0, Ws - p.shape[2]), (0, 0))) for p in parts]
    return jnp.stack(parts, axis=0)


# ------------------------------- BasicBlock ---------------------------------- #

def basic_block_forward(params, x_nhwc, *, stride, has_shortcut,
                        out_dtype=jnp.bfloat16):
    """out = htanh(bn2(conv2(htanh(bn1(conv1(x))))) + shortcut(x)),
    entirely inside one pallas_call."""
    B, H, W, Cin = x_nhwc.shape
    w1, w2 = params['conv1'], params['conv2']
    planes = w1.shape[0]
    k1, k2 = w1.shape[2], w2.shape[2]
    pad, s = 1, stride
    assert k2 == 3, "conv2 scratch halo assumes a 3x3 / pad=1 second conv"

    Ho = (H + 2 * pad - k1) // s + 1
    Wo = (W + 2 * pad - k1) // s + 1
    m = Ho * Wo

    planes_p = _round_up(planes, 128)       # lane-dense C_out (slice off after)
    cpad = planes_p - planes

    # Fold BN scale into weights on the host; only the shift enters the kernel.
    sc1, sh1 = fold_bn(**params['bn1'])
    sc2, sh2 = fold_bn(**params['bn2'])
    w1m = _fold_weight(w1, sc1, 0, cpad)                  # (k1*k1*Cin, planes_p)
    w2m = _fold_weight(w2, sc2, cpad, cpad)               # (k2*k2*planes_p, planes_p)
    pad_shift = lambda sh: jnp.pad(sh, (0, cpad)).reshape(1, planes_p).astype(jnp.float32)
    sh1p, sh2p = pad_shift(sh1), pad_shift(sh2)

    # bf16 cast BEFORE pad / parity decomposition (halves prologue HBM traffic).
    x_pad = jnp.pad(x_nhwc.astype(jnp.bfloat16),
                    ((0, 0), (pad, pad), (pad, pad), (0, 0)))
    xs = _parity_slabs(x_pad, s)                          # (P, B, Hs, Ws, Cin)
    P, _, Hs, Ws, _ = xs.shape

    taps1 = [((di % s) * s + (dj % s), di // s, dj // s)
             for di in range(k1) for dj in range(k1)]
    res_tap = ((pad % s) * s + (pad % s), pad // s, pad // s)   # x[h*s, w*s]

    kernel = _make_block_kernel(taps1, res_tap, Ho, Wo, k2, planes_p,
                                has_shortcut, Cin)

    in_specs = [
        pl.BlockSpec((P, None, Hs, Ws, Cin), lambda b: (0, b, 0, 0, 0)),
        pl.BlockSpec((k1 * k1 * Cin, planes_p), lambda b: (0, 0)),
        pl.BlockSpec((1, planes_p), lambda b: (0, 0)),
        pl.BlockSpec((k2 * k2 * planes_p, planes_p), lambda b: (0, 0)),
        pl.BlockSpec((1, planes_p), lambda b: (0, 0)),
    ]
    args = [xs, w1m, sh1p, w2m, sh2p]
    if has_shortcut:
        scs, shs = fold_bn(**params['sc_bn'])
        args += [_fold_weight(params['sc_conv'], scs, 0, cpad), pad_shift(shs)]
        in_specs += [pl.BlockSpec((Cin, planes_p), lambda b: (0, 0)),
                     pl.BlockSpec((1, planes_p), lambda b: (0, 0))]

    out = pl.pallas_call(
        kernel,
        out_shape=jax.ShapeDtypeStruct((B, m, planes_p), out_dtype),
        grid_spec=pltpu.PrefetchScalarGridSpec(
            num_scalar_prefetch=0,
            grid=(B,),
            in_specs=in_specs,
            out_specs=pl.BlockSpec((None, m, planes_p), lambda b: (b, 0, 0)),
            scratch_shapes=[pltpu.VMEM((Ho + 2, Wo + 2, planes_p),
                                       jnp.bfloat16)],
        ),
        compiler_params=pltpu.CompilerParams(
            dimension_semantics=("parallel",),
        ),
    )(*args)

    out = out[..., :planes] if cpad else out
    return out.reshape(B, Ho, Wo, planes)


# ------------------------------ parameter init ------------------------------ #

def init_conv(key, c_out, c_in, k):
    fan = c_in * k * k
    return jax.random.normal(key, (c_out, c_in, k, k), jnp.float32) / math.sqrt(fan)


def init_bn(key, c):
    k1, k2, k3 = jax.random.split(key, 3)
    return dict(
        gamma=1.0 + 0.1 * jax.random.normal(k1, (c,), jnp.float32),
        beta=0.1 * jax.random.normal(k2, (c,), jnp.float32),
        mean=0.1 * jax.random.normal(k3, (c,), jnp.float32),
        var=jnp.ones((c,), jnp.float32),
    )  # BatchNorm2d in eval (inference) mode with synthetic running stats


def init_basic_block(key, in_planes, planes, stride):
    ks = jax.random.split(key, 6)
    p = dict(
        conv1=init_conv(ks[0], planes, in_planes, 3),
        bn1=init_bn(ks[1], planes),
        conv2=init_conv(ks[2], planes, planes, 3),
        bn2=init_bn(ks[3], planes),
    )
    has_shortcut = (stride != 1) or (in_planes != planes)
    if has_shortcut:
        p['sc_conv'] = init_conv(ks[4], planes, in_planes, 1)
        p['sc_bn'] = init_bn(ks[5], planes)
    return p, has_shortcut


# ------------------------------- pure-JAX ref -------------------------------- #

def _conv_ref(x, w, stride, pad):
    return jax.lax.conv_general_dilated(
        x, jnp.transpose(w, (2, 3, 1, 0)), window_strides=(stride, stride),
        padding=[(pad, pad), (pad, pad)],
        dimension_numbers=('NHWC', 'HWIO', 'NHWC'))


def _bn_ref(x, bn, eps=1e-5):
    return (x - bn['mean']) / jnp.sqrt(bn['var'] + eps) * bn['gamma'] + bn['beta']


def basic_block_ref(params, x, *, stride, has_shortcut):
    out = jnp.clip(_bn_ref(_conv_ref(x, params['conv1'], stride, 1),
                           params['bn1']), -1.0, 1.0)
    out = _bn_ref(_conv_ref(out, params['conv2'], 1, 1), params['bn2'])
    short = (_bn_ref(_conv_ref(x, params['sc_conv'], stride, 0), params['sc_bn'])
             if has_shortcut else x)
    return jnp.clip(out + short, -1.0, 1.0)


# ----------------------------------- main ------------------------------------ #

if __name__ == "__main__":
    # TODO(synk): racetrack fault-injection (test_rtm / bitflips / misalignments)
    # and quantization hooks are inactive in the reference forward with default
    # args and are not modeled.
    key = jax.random.PRNGKey(0)
    kp, kx = jax.random.split(key)

    # Small-but-representative downsampling BasicBlock (exercises the fused
    # 1x1 conv+BN shortcut path).
    B, H, W = 2, 16, 16
    in_planes, planes, stride = 64, 128, 2

    params, has_shortcut = init_basic_block(kp, in_planes, planes, stride)
    x_nchw = jax.random.normal(kx, (B, in_planes, H, W), jnp.float32)
    x = jnp.transpose(x_nchw, (0, 2, 3, 1))               # NCHW -> NHWC

    fwd = jax.jit(functools.partial(basic_block_forward, stride=stride,
                                    has_shortcut=has_shortcut))
    out = jax.block_until_ready(fwd(params, x))
    assert out.shape == (B, H // stride, W // stride, planes), out.shape

    # f32 reference (kernel uses bf16 MXU operands -> loose tolerance).
    ref = basic_block_ref(params, x, stride=stride, has_shortcut=has_shortcut)
    err = float(jnp.max(jnp.abs(out.astype(jnp.float32) - ref)))
    assert err < 0.1, f"max |err| = {err}"
    print("KERNEL_OK")
</pallas_src>

<mosaic_0001>
module attributes {stable_mosaic.version = 11 : i64} {
  func.func @kernel(%arg0: i32, %arg1: memref<4x1x9x9x64xbf16, #tpu.memory_space<vmem>>, %arg2: memref<576x128xbf16, #tpu.memory_space<vmem>>, %arg3: memref<1x128xf32, #tpu.memory_space<vmem>>, %arg4: memref<1152x128xbf16, #tpu.memory_space<vmem>>, %arg5: memref<1x128xf32, #tpu.memory_space<vmem>>, %arg6: memref<64x128xbf16, #tpu.memory_space<vmem>>, %arg7: memref<1x128xf32, #tpu.memory_space<vmem>>, %arg8: memref<1x64x128xbf16, #tpu.memory_space<vmem>>, %arg9: memref<10x10x128xbf16, #tpu.memory_space<vmem>>) attributes {dimension_semantics = [#tpu.dimension_semantics<parallel>], iteration_bounds = array<i64: 2>, scalar_prefetch = 0 : i64, scratch_operands = 1 : i64, tpu.core_type = #tpu.core_type<tc>, window_params = [{transform_indices = @transform_0, window_bounds = array<i64: 4, 1, 9, 9, 64>}, {pipeline_mode = #tpu.pipeline_mode<synchronous>, transform_indices = @transform_1, window_bounds = array<i64: 576, 128>}, {pipeline_mode = #tpu.pipeline_mode<synchronous>, transform_indices = @transform_2, window_bounds = array<i64: 1, 128>}, {pipeline_mode = #tpu.pipeline_mode<synchronous>, transform_indices = @transform_3, window_bounds = array<i64: 1152, 128>}, {pipeline_mode = #tpu.pipeline_mode<synchronous>, transform_indices = @transform_4, window_bounds = array<i64: 1, 128>}, {pipeline_mode = #tpu.pipeline_mode<synchronous>, transform_indices = @transform_5, window_bounds = array<i64: 64, 128>}, {pipeline_mode = #tpu.pipeline_mode<synchronous>, transform_indices = @transform_6, window_bounds = array<i64: 1, 128>}, {transform_indices = @transform_7, window_bounds = array<i64: 1, 64, 128>}]} {
    %c0 = arith.constant 0 : index
    %c0_0 = arith.constant 0 : index
    %c0_1 = arith.constant 0 : index
    %c0_2 = arith.constant 0 : index
    %c0_3 = arith.constant 0 : index
    %0 = vector.load %arg1[%c0, %c0_0, %c0_1, %c0_2, %c0_3] : memref<4x1x9x9x64xbf16, #tpu.memory_space<vmem>>, vector<1x1x8x8x64xbf16>
    %1 = vector.shape_cast %0 : vector<1x1x8x8x64xbf16> to vector<8x8x64xbf16>
    %2 = vector.shape_cast %1 : vector<8x8x64xbf16> to vector<64x64xbf16>
    %c0_4 = arith.constant 0 : index
    %c0_5 = arith.constant 0 : index
    %3 = vector.load %arg2[%c0_4, %c0_5] : memref<576x128xbf16, #tpu.memory_space<vmem>>, vector<64x128xbf16>
    %cst = arith.constant dense<0.000000e+00> : vector<64x128xf32>
    %4 = tpu.matmul %2, %3, %cst {dimension_numbers = #tpu.dot_dimension_numbers<[1], [0], [0], [1], [0, 0, 1, 1], [], []>} : vector<64x64xbf16>, vector<64x128xbf16>, vector<64x128xf32> -> vector<64x128xf32>
    %c1 = arith.constant 1 : index
    %c0_6 = arith.constant 0 : index
    %c0_7 = arith.constant 0 : index
    %c0_8 = arith.constant 0 : index
    %c0_9 = arith.constant 0 : index
    %5 = vector.load %arg1[%c1, %c0_6, %c0_7, %c0_8, %c0_9] : memref<4x1x9x9x64xbf16, #tpu.memory_space<vmem>>, vector<1x1x8x8x64xbf16>
    %6 = vector.shape_cast %5 : vector<1x1x8x8x64xbf16> to vector<8x8x64xbf16>
    %7 = vector.shape_cast %6 : vector<8x8x64xbf16> to vector<64x64xbf16>
    %c64 = arith.constant 64 : index
    %c0_10 = arith.constant 0 : index
    %8 = vector.load %arg2[%c64, %c0_10] : memref<576x128xbf16, #tpu.memory_space<vmem>>, vector<64x128xbf16>
    %cst_11 = arith.constant dense<0.000000e+00> : vector<64x128xf32>
    %9 = tpu.matmul %7, %8, %cst_11 {dimension_numbers = #tpu.dot_dimension_numbers<[1], [0], [0], [1], [0, 0, 1, 1], [], []>} : vector<64x64xbf16>, vector<64x128xbf16>, vector<64x128xf32> -> vector<64x128xf32>
    %10 = arith.addf %4, %9 : vector<64x128xf32>
    %c0_12 = arith.constant 0 : index
    %c0_13 = arith.constant 0 : index
    %c0_14 = arith.constant 0 : index
    %c1_15 = arith.constant 1 : index
    %c0_16 = arith.constant 0 : index
    %11 = vector.load %arg1[%c0_12, %c0_13, %c0_14, %c1_15, %c0_16] : memref<4x1x9x9x64xbf16, #tpu.memory_space<vmem>>, vector<1x1x8x8x64xbf16>
    %12 = vector.shape_cast %11 : vector<1x1x8x8x64xbf16> to vector<8x8x64xbf16>
    %13 = vector.shape_cast %12 : vector<8x8x64xbf16> to vector<64x64xbf16>
    %c128 = arith.constant 128 : index
    %c0_17 = arith.constant 0 : index
    %14 = vector.load %arg2[%c128, %c0_17] : memref<576x128xbf16, #tpu.memory_space<vmem>>, vector<64x128xbf16>
    %cst_18 = arith.constant dense<0.000000e+00> : vector<64x128xf32>
    %15 = tpu.matmul %13, %14, %cst_18 {dimension_numbers = #tpu.dot_dimension_numbers<[1], [0], [0], [1], [0, 0, 1, 1], [], []>} : vector<64x64xbf16>, vector<64x128xbf16>, vector<64x128xf32> -> vector<64x128xf32>
    %16 = arith.addf %10, %15 : vector<64x128xf32>
    %c2 = arith.constant 2 : index
    %c0_19 = arith.constant 0 : index
    %c0_20 = arith.constant 0 : index
    %c0_21 = arith.constant 0 : index
    %c0_22 = arith.constant 0 : index
    %17 = vector.load %arg1[%c2, %c0_19, %c0_20, %c0_21, %c0_22] : memref<4x1x9x9x64xbf16, #tpu.memory_space<vmem>>, vector<1x1x8x8x64xbf16>
    %18 = vector.shape_cast %17 : vector<1x1x8x8x64xbf16> to vector<8x8x64xbf16>
    %19 = vector.shape_cast %18 : vector<8x8x64xbf16> to vector<64x64xbf16>
    %c192 = arith.constant 192 : index
    %c0_23 = arith.constant 0 : index
    %20 = vector.load %arg2[%c192, %c0_23] : memref<576x128xbf16, #tpu.memory_space<vmem>>, vector<64x128xbf16>
    %cst_24 = arith.constant dense<0.000000e+00> : vector<64x128xf32>
    %21 = tpu.matmul %19, %20, %cst_24 {dimension_numbers = #tpu.dot_dimension_numbers<[1], [0], [0], [1], [0, 0, 1, 1], [], []>} : vector<64x64xbf16>, vector<64x128xbf16>, vector<64x128xf32> -> vector<64x128xf32>
    %22 = arith.addf %16, %21 : vector<64x128xf32>
    %c3 = arith.constant 3 : index
    %c0_25 = arith.constant 0 : index
    %c0_26 = arith.constant 0 : index
    %c0_27 = arith.constant 0 : index
    %c0_28 = arith.constant 0 : index
    %23 = vector.load %arg1[%c3, %c0_25, %c0_26, %c0_27, %c0_28] : memref<4x1x9x9x64xbf16, #tpu.memory_space<vmem>>, vector<1x1x8x8x64xbf16>
    %24 = vector.shape_cast %23 : vector<1x1x8x8x64xbf16> to vector<8x8x64xbf16>
    %25 = vector.shape_cast %24 : vector<8x8x64xbf16> to vector<64x64xbf16>
    %c256 = arith.constant 256 : index
    %c0_29 = arith.constant 0 : index
    %26 = vector.load %arg2[%c256, %c0_29] : memref<576x128xbf16, #tpu.memory_space<vmem>>, vector<64x128xbf16>
    %cst_30 = arith.constant dense<0.000000e+00> : vector<64x128xf32>
    %27 = tpu.matmul %25, %26, %cst_30 {dimension_numbers = #tpu.dot_dimension_numbers<[1], [0], [0], [1], [0, 0, 1, 1], [], []>} : vector<64x64xbf16>, vector<64x128xbf16>, vector<64x128xf32> -> vector<64x128xf32>
    %28 = arith.addf %22, %27 : vector<64x128xf32>
    %c2_31 = arith.constant 2 : index
    %c0_32 = arith.constant 0 : index
    %c0_33 = arith.constant 0 : index
    %c1_34 = arith.constant 1 : index
    %c0_35 = arith.constant 0 : index
    %29 = vector.load %arg1[%c2_31, %c0_32, %c0_33, %c1_34, %c0_35] : memref<4x1x9x9x64xbf16, #tpu.memory_space<vmem>>, vector<1x1x8x8x64xbf16>
    %30 = vector.shape_cast %29 : vector<1x1x8x8x64xbf16> to vector<8x8x64xbf16>
    %31 = vector.shape_cast %30 : vector<8x8x64xbf16> to vector<64x64xbf16>
    %c320 = arith.constant 320 : index
    %c0_36 = arith.constant 0 : index
    %32 = vector.load %arg2[%c320, %c0_36] : memref<576x128xbf16, #tpu.memory_space<vmem>>, vector<64x128xbf16>
    %cst_37 = arith.constant dense<0.000000e+00> : vector<64x128xf32>
    %33 = tpu.matmul %31, %32, %cst_37 {dimension_numbers = #tpu.dot_dimension_numbers<[1], [0], [0], [1], [0, 0, 1, 1], [], []>} : vector<64x64xbf16>, vector<64x128xbf16>, vector<64x128xf32> -> vector<64x128xf32>
    %34 = arith.addf %28, %33 : vector<64x128xf32>
    %c0_38 = arith.constant 0 : index
    %c0_39 = arith.constant 0 : index
    %c1_40 = arith.constant 1 : index
    %c0_41 = arith.constant 0 : index
    %c0_42 = arith.constant 0 : index
    %35 = vector.load %arg1[%c0_38, %c0_39, %c1_40, %c0_41, %c0_42] : memref<4x1x9x9x64xbf16, #tpu.memory_space<vmem>>, vector<1x1x8x8x64xbf16>
    %36 = vector.shape_cast %35 : vector<1x1x8x8x64xbf16> to vector<8x8x64xbf16>
    %37 = vector.shape_cast %36 : vector<8x8x64xbf16> to vector<64x64xbf16>
    %c384 = arith.constant 384 : index
    %c0_43 = arith.constant 0 : index
    %38 = vector.load %arg2[%c384, %c0_43] : memref<576x128xbf16, #tpu.memory_space<vmem>>, vector<64x128xbf16>
    %cst_44 = arith.constant dense<0.000000e+00> : vector<64x128xf32>
    %39 = tpu.matmul %37, %38, %cst_44 {dimension_numbers = #tpu.dot_dimension_numbers<[1], [0], [0], [1], [0, 0, 1, 1], [], []>} : vector<64x64xbf16>, vector<64x128xbf16>, vector<64x128xf32> -> vector<64x128xf32>
    %40 = arith.addf %34, %39 : vector<64x128xf32>
    %c1_45 = arith.constant 1 : index
    %c0_46 = arith.constant 0 : index
    %c1_47 = arith.constant 1 : index
    %c0_48 = arith.constant 0 : index
    %c0_49 = arith.constant 0 : index
    %41 = vector.load %arg1[%c1_45, %c0_46, %c1_47, %c0_48, %c0_49] : memref<4x1x9x9x64xbf16, #tpu.memory_space<vmem>>, vector<1x1x8x8x64xbf16>
    %42 = vector.shape_cast %41 : vector<1x1x8x8x64xbf16> to vector<8x8x64xbf16>
    %43 = vector.shape_cast %42 : vector<8x8x64xbf16> to vector<64x64xbf16>
    %c448 = arith.constant 448 : index
    %c0_50 = arith.constant 0 : index
    %44 = vector.load %arg2[%c448, %c0_50] : memref<576x128xbf16, #tpu.memory_space<vmem>>, vector<64x128xbf16>
    %cst_51 = arith.constant dense<0.000000e+00> : vector<64x128xf32>
    %45 = tpu.matmul %43, %44, %cst_51 {dimension_numbers = #tpu.dot_dimension_numbers<[1], [0], [0], [1], [0, 0, 1, 1], [], []>} : vector<64x64xbf16>, vector<64x128xbf16>, vector<64x128xf32> -> vector<64x128xf32>
    %46 = arith.addf %40, %45 : vector<64x128xf32>
    %c0_52 = arith.constant 0 : index
    %c0_53 = arith.constant 0 : index
    %c1_54 = arith.constant 1 : index
    %c1_55 = arith.constant 1 : index
    %c0_56 = arith.constant 0 : index
    %47 = vector.load %arg1[%c0_52, %c0_53, %c1_54, %c1_55, %c0_56] : memref<4x1x9x9x64xbf16, #tpu.memory_space<vmem>>, vector<1x1x8x8x64xbf16>
    %48 = vector.shape_cast %47 : vector<1x1x8x8x64xbf16> to vector<8x8x64xbf16>
    %49 = vector.shape_cast %48 : vector<8x8x64xbf16> to vector<64x64xbf16>
    %c512 = arith.constant 512 : index
    %c0_57 = arith.constant 0 : index
    %50 = vector.load %arg2[%c512, %c0_57] : memref<576x128xbf16, #tpu.memory_space<vmem>>, vector<64x128xbf16>
    %cst_58 = arith.constant dense<0.000000e+00> : vector<64x128xf32>
    %51 = tpu.matmul %49, %50, %cst_58 {dimension_numbers = #tpu.dot_dimension_numbers<[1], [0], [0], [1], [0, 0, 1, 1], [], []>} : vector<64x64xbf16>, vector<64x128xbf16>, vector<64x128xf32> -> vector<64x128xf32>
    %52 = arith.addf %46, %51 : vector<64x128xf32>
    %c0_59 = arith.constant 0 : index
    %c0_60 = arith.constant 0 : index
    %53 = vector.load %arg3[%c0_59, %c0_60] : memref<1x128xf32, #tpu.memory_space<vmem>>, vector<1x128xf32>
    %54 = vector.broadcast %53 : vector<1x128xf32> to vector<64x128xf32>
    %55 = arith.addf %52, %54 : vector<64x128xf32>
    %cst_61 = arith.constant -1.000000e+00 : f32
    %cst_62 = arith.constant 1.000000e+00 : f32
    %56 = vector.broadcast %cst_61 : f32 to vector<64x128xf32>
    %57 = arith.maximumf %56, %55 : vector<64x128xf32>
    %58 = vector.broadcast %cst_62 : f32 to vector<64x128xf32>
    %59 = arith.minimumf %58, %57 : vector<64x128xf32>
    %cst_63 = arith.constant 0.000000e+00 : bf16
    %60 = vector.broadcast %cst_63 : bf16 to vector<10x10x128xbf16>
    %c0_64 = arith.constant 0 : index
    %c0_65 = arith.constant 0 : index
    %c0_66 = arith.constant 0 : index
    %61 = vector.load %arg9[%c0_64, %c0_65, %c0_66] : memref<10x10x128xbf16, #tpu.memory_space<vmem>>, vector<10x10x128xbf16>
    tpu.vector_store %arg9[%c0_64, %c0_65, %c0_66], %60 {strides = array<i32>} : memref<10x10x128xbf16, #tpu.memory_space<vmem>>, vector<10x10x128xbf16>,
    %62 = vector.shape_cast %59 : vector<64x128xf32> to vector<8x8x128xf32>
    %63 = arith.truncf %62 : vector<8x8x128xf32> to vector<8x8x128xbf16>
    %c1_67 = arith.constant 1 : index
    %c1_68 = arith.constant 1 : index
    %c0_69 = arith.constant 0 : index
    %64 = vector.load %arg9[%c1_67, %c1_68, %c0_69] : memref<10x10x128xbf16, #tpu.memory_space<vmem>>, vector<8x8x128xbf16>
    tpu.vector_store %arg9[%c1_67, %c1_68, %c0_69], %63 {strides = array<i32>} : memref<10x10x128xbf16, #tpu.memory_space<vmem>>, vector<8x8x128xbf16>,
    %c0_70 = arith.constant 0 : index
    %c0_71 = arith.constant 0 : index
    %c0_72 = arith.constant 0 : index
    %65 = vector.load %arg9[%c0_70, %c0_71, %c0_72] : memref<10x10x128xbf16, #tpu.memory_space<vmem>>, vector<8x8x128xbf16>
    %66 = vector.shape_cast %65 : vector<8x8x128xbf16> to vector<64x128xbf16>
    %c0_73 = arith.constant 0 : index
    %c0_74 = arith.constant 0 : index
    %67 = vector.load %arg4[%c0_73, %c0_74] : memref<1152x128xbf16, #tpu.memory_space<vmem>>, vector<128x128xbf16>
    %cst_75 = arith.constant dense<0.000000e+00> : vector<64x128xf32>
    %68 = tpu.matmul %66, %67, %cst_75 {dimension_numbers = #tpu.dot_dimension_numbers<[1], [0], [0], [1], [0, 0, 1, 1], [], []>} : vector<64x128xbf16>, vector<128x128xbf16>, vector<64x128xf32> -> vector<64x128xf32>
    %c0_76 = arith.constant 0 : index
    %c1_77 = arith.constant 1 : index
    %c0_78 = arith.constant 0 : index
    %69 = vector.load %arg9[%c0_76, %c1_77, %c0_78] : memref<10x10x128xbf16, #tpu.memory_space<vmem>>, vector<8x8x128xbf16>
    %70 = vector.shape_cast %69 : vector<8x8x128xbf16> to vector<64x128xbf16>
    %c128_79 = arith.constant 128 : index
    %c0_80 = arith.constant 0 : index
    %71 = vector.load %arg4[%c128_79, %c0_80] : memref<1152x128xbf16, #tpu.memory_space<vmem>>, vector<128x128xbf16>
    %cst_81 = arith.constant dense<0.000000e+00> : vector<64x128xf32>
    %72 = tpu.matmul %70, %71, %cst_81 {dimension_numbers = #tpu.dot_dimension_numbers<[1], [0], [0], [1], [0, 0, 1, 1], [], []>} : vector<64x128xbf16>, vector<128x128xbf16>, vector<64x128xf32> -> vector<64x128xf32>
    %73 = arith.addf %68, %72 : vector<64x128xf32>
    %c0_82 = arith.constant 0 : index
    %c2_83 = arith.constant 2 : index
    %c0_84 = arith.constant 0 : index
    %74 = vector.load %arg9[%c0_82, %c2_83, %c0_84] : memref<10x10x128xbf16, #tpu.memory_space<vmem>>, vector<8x8x128xbf16>
    %75 = vector.shape_cast %74 : vector<8x8x128xbf16> to vector<64x128xbf16>
    %c256_85 = arith.constant 256 : index
    %c0_86 = arith.constant 0 : index
    %76 = vector.load %arg4[%c256_85, %c0_86] : memref<1152x128xbf16, #tpu.memory_space<vmem>>, vector<128x128xbf16>
    %cst_87 = arith.constant dense<0.000000e+00> : vector<64x128xf32>
    %77 = tpu.matmul %75, %76, %cst_87 {dimension_numbers = #tpu.dot_dimension_numbers<[1], [0], [0], [1], [0, 0, 1, 1], [], []>} : vector<64x128xbf16>, vector<128x128xbf16>, vector<64x128xf32> -> vector<64x128xf32>
    %78 = arith.addf %73, %77 : vector<64x128xf32>
    %c1_88 = arith.constant 1 : index
    %c0_89 = arith.constant 0 : index
    %c0_90 = arith.constant 0 : index
    %79 = vector.load %arg9[%c1_88, %c0_89, %c0_90] : memref<10x10x128xbf16, #tpu.memory_space<vmem>>, vector<8x8x128xbf16>
    %80 = vector.shape_cast %79 : vector<8x8x128xbf16> to vector<64x128xbf16>
    %c384_91 = arith.constant 384 : index
    %c0_92 = arith.constant 0 : index
    %81 = vector.load %arg4[%c384_91, %c0_92] : memref<1152x128xbf16, #tpu.memory_space<vmem>>, vector<128x128xbf16>
    %cst_93 = arith.constant dense<0.000000e+00> : vector<64x128xf32>
    %82 = tpu.matmul %80, %81, %cst_93 {dimension_numbers = #tpu.dot_dimension_numbers<[1], [0], [0], [1], [0, 0, 1, 1], [], []>} : vector<64x128xbf16>, vector<128x128xbf16>, vector<64x128xf32> -> vector<64x128xf32>
    %83 = arith.addf %78, %82 : vector<64x128xf32>
    %c1_94 = arith.constant 1 : index
    %c1_95 = arith.constant 1 : index
    %c0_96 = arith.constant 0 : index
    %84 = vector.load %arg9[%c1_94, %c1_95, %c0_96] : memref<10x10x128xbf16, #tpu.memory_space<vmem>>, vector<8x8x128xbf16>
    %85 = vector.shape_cast %84 : vector<8x8x128xbf16> to vector<64x128xbf16>
    %c512_97 = arith.constant 512 : index
    %c0_98 = arith.constant 0 : index
    %86 = vector.load %arg4[%c512_97, %c0_98] : memref<1152x128xbf16, #tpu.memory_space<vmem>>, vector<128x128xbf16>
    %cst_99 = arith.constant dense<0.000000e+00> : vector<64x128xf32>
    %87 = tpu.matmul %85, %86, %cst_99 {dimension_numbers = #tpu.dot_dimension_numbers<[1], [0], [0], [1], [0, 0, 1, 1], [], []>} : vector<64x128xbf16>, vector<128x128xbf16>, vector<64x128xf32> -> vector<64x128xf32>
    %88 = arith.addf %83, %87 : vector<64x128xf32>
    %c1_100 = arith.constant 1 : index
    %c2_101 = arith.constant 2 : index
    %c0_102 = arith.constant 0 : index
    %89 = vector.load %arg9[%c1_100, %c2_101, %c0_102] : memref<10x10x128xbf16, #tpu.memory_space<vmem>>, vector<8x8x128xbf16>
    %90 = vector.shape_cast %89 : vector<8x8x128xbf16> to vector<64x128xbf16>
    %c640 = arith.constant 640 : index
    %c0_103 = arith.constant 0 : index
    %91 = vector.load %arg4[%c640, %c0_103] : memref<1152x128xbf16, #tpu.memory_space<vmem>>, vector<128x128xbf16>
    %cst_104 = arith.constant dense<0.000000e+00> : vector<64x128xf32>
    %92 = tpu.matmul %90, %91, %cst_104 {dimension_numbers = #tpu.dot_dimension_numbers<[1], [0], [0], [1], [0, 0, 1, 1], [], []>} : vector<64x128xbf16>, vector<128x128xbf16>, vector<64x128xf32> -> vector<64x128xf32>
    %93 = arith.addf %88, %92 : vector<64x128xf32>
    %c2_105 = arith.constant 2 : index
    %c0_106 = arith.constant 0 : index
    %c0_107 = arith.constant 0 : index
    %94 = vector.load %arg9[%c2_105, %c0_106, %c0_107] : memref<10x10x128xbf16, #tpu.memory_space<vmem>>, vector<8x8x128xbf16>
    %95 = vector.shape_cast %94 : vector<8x8x128xbf16> to vector<64x128xbf16>
    %c768 = arith.constant 768 : index
    %c0_108 = arith.constant 0 : index
    %96 = vector.load %arg4[%c768, %c0_108] : memref<1152x128xbf16, #tpu.memory_space<vmem>>, vector<128x128xbf16>
    %cst_109 = arith.constant dense<0.000000e+00> : vector<64x128xf32>
    %97 = tpu.matmul %95, %96, %cst_109 {dimension_numbers = #tpu.dot_dimension_numbers<[1], [0], [0], [1], [0, 0, 1, 1], [], []>} : vector<64x128xbf16>, vector<128x128xbf16>, vector<64x128xf32> -> vector<64x128xf32>
    %98 = arith.addf %93, %97 : vector<64x128xf32>
    %c2_110 = arith.constant 2 : index
    %c1_111 = arith.constant 1 : index
    %c0_112 = arith.constant 0 : index
    %99 = vector.load %arg9[%c2_110, %c1_111, %c0_112] : memref<10x10x128xbf16, #tpu.memory_space<vmem>>, vector<8x8x128xbf16>
    %100 = vector.shape_cast %99 : vector<8x8x128xbf16> to vector<64x128xbf16>
    %c896 = arith.constant 896 : index
    %c0_113 = arith.constant 0 : index
    %101 = vector.load %arg4[%c896, %c0_113] : memref<1152x128xbf16, #tpu.memory_space<vmem>>, vector<128x128xbf16>
    %cst_114 = arith.constant dense<0.000000e+00> : vector<64x128xf32>
    %102 = tpu.matmul %100, %101, %cst_114 {dimension_numbers = #tpu.dot_dimension_numbers<[1], [0], [0], [1], [0, 0, 1, 1], [], []>} : vector<64x128xbf16>, vector<128x128xbf16>, vector<64x128xf32> -> vector<64x128xf32>
    %103 = arith.addf %98, %102 : vector<64x128xf32>
    %c2_115 = arith.constant 2 : index
    %c2_116 = arith.constant 2 : index
    %c0_117 = arith.constant 0 : index
    %104 = vector.load %arg9[%c2_115, %c2_116, %c0_117] : memref<10x10x128xbf16, #tpu.memory_space<vmem>>, vector<8x8x128xbf16>
    %105 = vector.shape_cast %104 : vector<8x8x128xbf16> to vector<64x128xbf16>
    %c1024 = arith.constant 1024 : index
    %c0_118 = arith.constant 0 : index
    %106 = vector.load %arg4[%c1024, %c0_118] : memref<1152x128xbf16, #tpu.memory_space<vmem>>, vector<128x128xbf16>
    %cst_119 = arith.constant dense<0.000000e+00> : vector<64x128xf32>
    %107 = tpu.matmul %105, %106, %cst_119 {dimension_numbers = #tpu.dot_dimension_numbers<[1], [0], [0], [1], [0, 0, 1, 1], [], []>} : vector<64x128xbf16>, vector<128x128xbf16>, vector<64x128xf32> -> vector<64x128xf32>
    %108 = arith.addf %103, %107 : vector<64x128xf32>
    %c0_120 = arith.constant 0 : index
    %c0_121 = arith.constant 0 : index
    %109 = vector.load %arg5[%c0_120, %c0_121] : memref<1x128xf32, #tpu.memory_space<vmem>>, vector<1x128xf32>
    %110 = vector.broadcast %109 : vector<1x128xf32> to vector<64x128xf32>
    %111 = arith.addf %108, %110 : vector<64x128xf32>
    %c3_122 = arith.constant 3 : index
    %c0_123 = arith.constant 0 : index
    %c0_124 = arith.constant 0 : index
    %c0_125 = arith.constant 0 : index
    %c0_126 = arith.constant 0 : index
    %112 = vector.load %arg1[%c3_122, %c0_123, %c0_124, %c0_125, %c0_126] : memref<4x1x9x9x64xbf16, #tpu.memory_space<vmem>>, vector<1x1x8x8x64xbf16>
    %113 = vector.shape_cast %112 : vector<1x1x8x8x64xbf16> to vector<8x8x64xbf16>
    %114 = vector.shape_cast %113 : vector<8x8x64xbf16> to vector<64x64xbf16>
    %c0_127 = arith.constant 0 : index
    %c0_128 = arith.constant 0 : index
    %115 = vector.load %arg6[%c0_127, %c0_128] : memref<64x128xbf16, #tpu.memory_space<vmem>>, vector<64x128xbf16>
    %cst_129 = arith.constant dense<0.000000e+00> : vector<64x128xf32>
    %116 = tpu.matmul %114, %115, %cst_129 {dimension_numbers = #tpu.dot_dimension_numbers<[1], [0], [0], [1], [0, 0, 1, 1], [], []>} : vector<64x64xbf16>, vector<64x128xbf16>, vector<64x128xf32> -> vector<64x128xf32>
    %c0_130 = arith.constant 0 : index
    %c0_131 = arith.constant 0 : index
    %117 = vector.load %arg7[%c0_130, %c0_131] : memref<1x128xf32, #tpu.memory_space<vmem>>, vector<1x128xf32>
    %118 = vector.broadcast %117 : vector<1x128xf32> to vector<64x128xf32>
    %119 = arith.addf %116, %118 : vector<64x128xf32>
    %120 = arith.addf %111, %119 : vector<64x128xf32>
    %cst_132 = arith.constant -1.000000e+00 : f32
    %cst_133 = arith.constant 1.000000e+00 : f32
    %121 = vector.broadcast %cst_132 : f32 to vector<64x128xf32>
    %122 = arith.maximumf %121, %120 : vector<64x128xf32>
    %123 = vector.broadcast %cst_133 : f32 to vector<64x128xf32>
    %124 = arith.minimumf %123, %122 : vector<64x128xf32>
    %125 = arith.truncf %124 : vector<64x128xf32> to vector<64x128xbf16>
    %c0_134 = arith.constant 0 : index
    %c0_135 = arith.constant 0 : index
    %c0_136 = arith.constant 0 : index
    %126 = vector.load %arg8[%c0_134, %c0_135, %c0_136] : memref<1x64x128xbf16, #tpu.memory_space<vmem>>, vector<1x64x128xbf16>
    %127 = vector.shape_cast %126 : vector<1x64x128xbf16> to vector<64x128xbf16>
    %128 = vector.shape_cast %125 : vector<64x128xbf16> to vector<1x64x128xbf16>
    tpu.vector_store %arg8[%c0_134, %c0_135, %c0_136], %128 {strides = array<i32>} : memref<1x64x128xbf16, #tpu.memory_space<vmem>>, vector<1x64x128xbf16>,
    return
  }
  func.func @transform_0(%arg0: i32) -> (i32, i32, i32, i32, i32) {
    %c0_i32 = arith.constant 0 : i32
    %c0_i32_0 = arith.constant 0 : i32
    %c0_i32_1 = arith.constant 0 : i32
    %c0_i32_2 = arith.constant 0 : i32
    %c0_i32_3 = arith.constant 0 : i32
    return %c0_i32, %arg0, %c0_i32_0, %c0_i32_1, %c0_i32_2 : i32, i32, i32, i32, i32
  }
  func.func @transform_1(%arg0: i32) -> (i32, i32) {
    %c0_i32 = arith.constant 0 : i32
    %c0_i32_0 = arith.constant 0 : i32
    %c0_i32_1 = arith.constant 0 : i32
    return %c0_i32, %c0_i32_0 : i32, i32
  }
  func.func @transform_2(%arg0: i32) -> (i32, i32) {
    %c0_i32 = arith.constant 0 : i32
    %c0_i32_0 = arith.constant 0 : i32
    %c0_i32_1 = arith.constant 0 : i32
    return %c0_i32, %c0_i32_0 : i32, i32
  }
  func.func @transform_3(%arg0: i32) -> (i32, i32) {
    %c0_i32 = arith.constant 0 : i32
    %c0_i32_0 = arith.constant 0 : i32
    %c0_i32_1 = arith.constant 0 : i32
    return %c0_i32, %c0_i32_0 : i32, i32
  }
  func.func @transform_4(%arg0: i32) -> (i32, i32) {
    %c0_i32 = arith.constant 0 : i32
    %c0_i32_0 = arith.constant 0 : i32
    %c0_i32_1 = arith.constant 0 : i32
    return %c0_i32, %c0_i32_0 : i32, i32
  }
  func.func @transform_5(%arg0: i32) -> (i32, i32) {
    %c0_i32 = arith.constant 0 : i32
    %c0_i32_0 = arith.constant 0 : i32
    %c0_i32_1 = arith.constant 0 : i32
    return %c0_i32, %c0_i32_0 : i32, i32
  }
  func.func @transform_6(%arg0: i32) -> (i32, i32) {
    %c0_i32 = arith.constant 0 : i32
    %c0_i32_0 = arith.constant 0 : i32
    %c0_i32_1 = arith.constant 0 : i32
    return %c0_i32, %c0_i32_0 : i32, i32
  }
  func.func @transform_7(%arg0: i32) -> (i32, i32, i32) {
    %c0_i32 = arith.constant 0 : i32
    %c0_i32_0 = arith.constant 0 : i32
    %c0_i32_1 = arith.constant 0 : i32
    return %arg0, %c0_i32, %c0_i32_0 : i32, i32, i32
  }
}

</mosaic_0001>

<llo_original>
// kernel: basic_block_forward.1
$region0: #{basic_block_forward.1}
  #allocation0 [shape = 'u32[]', space=smem, size = 0x4, offset = 0x4, fixed_abs, tag = 'smem constant byte address 0x4 - core index']
  #allocation1 [shape = 'u32[144,128]{1,0:T(1,128)}', space=vmem, size = 0x12000, scoped, tag = 'internal scratch']
  #allocation2 [shape = 'bf16[10,10,128]{2,1,0:T(8,128)(2,1)}', space=vmem, size = 0xa000, scoped, tag = 'scratch operand']
  %s0 = inlined_call_operand.vmem [shape: bf16[4,2,9,9,64], index: 0, kind: input, shape index: {}]
  %s1 = inlined_call_operand.vmem [shape: bf16[576,128], index: 1, kind: input, shape index: {}]
  %s2 = inlined_call_operand.vmem [shape: f32[1,128], index: 2, kind: input, shape index: {}]
  %s3 = inlined_call_operand.vmem [shape: bf16[1152,128], index: 3, kind: input, shape index: {}]
  %s4 = inlined_call_operand.vmem [shape: f32[1,128], index: 4, kind: input, shape index: {}]
  %s5 = inlined_call_operand.vmem [shape: bf16[64,128], index: 5, kind: input, shape index: {}]
  %s6 = inlined_call_operand.vmem [shape: f32[1,128], index: 6, kind: input, shape index: {}]
  %s7 = inlined_call_operand.hbm [shape: bf16[2,64,128], index: 7, kind: output, shape index: {}]
  %s8 = sld [smem:[#allocation0]]
  $region102: #{basic_block_forward.1} parent=0
    _
  %s10 = ssub.s32 1, %s8
  %s11 = scalar_select 0, %s10, %s8
  $region1: #{basic_block_forward.1} parent=0
    #allocation3 [shape = 'u8[294912]{0}', space=vmem, size = 0x48000, scoped, tag = 'input window, operand 0']
    #allocation4 [shape = 'u8[32768]{0}', space=vmem, size = 0x8000, scoped, tag = 'output window, operand 0']
    #allocation5 [shape = 's32[2]{0}', space=sflag, size = 0x8, scoped, tag = 'scoped memory for basic_block_forward.1']
    %12 = vsyncpa [#allocation5], 0
    %s13 = scalar_lea.sflag [#allocation5], 1
    %14 = vsyncpa %s13, 0
    loop: start=0, step=1, limit=4
    $region2: #{basic_block_forward.1} parent=1 // loop_pre_header
      _
    $region3: #{basic_block_forward.1} parent=1 // loop_header
      %s16 = sphi 0, %s20
      %p17 = scmp.ge.s32.totalorder %s16, 4
      %s26 = sphi 0, %s28
      %s29 = sphi 0, %s26
      %s30 = sphi 0, %s29
      %s46 = sphi 0, %s30
      %s50 = sphi 0, %s50
      %s52 = sphi 0, %s50
      %s53 = sphi 0, %s52
      %s67 = sphi 0, %s53
      %s71 = sphi 0, %s71
      %s73 = sphi 0, %s71
      %s74 = sphi 0, %s73
      %s88 = sphi 0, %s74
      %s92 = sphi 0, %s92
      %s94 = sphi 0, %s92
      %s95 = sphi 0, %s94
      %s109 = sphi 0, %s95
      %s113 = sphi 0, %s113
      %s115 = sphi 0, %s113
      %s116 = sphi 0, %s115
      %s130 = sphi 0, %s116
      %s134 = sphi 0, %s134
      %s136 = sphi 0, %s134
      %s137 = sphi 0, %s136
      %s151 = sphi 0, %s137
      %s155 = sphi 0, %s155
      %s157 = sphi 0, %s155
      %s158 = sphi 0, %s157
      %s172 = sphi 0, %s158
      %s178 = sphi 0, %s180
      %s181 = sphi 0, %s178
      %s182 = sphi 0, %s181
      %s198 = sphi 0, %s182
    $region4: #{basic_block_forward.1} parent=1 // loop_header_branch
      %19 = sbr.rel (%p17) target = $region8
    $region5: #{basic_block_forward.1} parent=1 // loop_body
      %s21 = ssub.s32 %s16, 1
      %s22 = ssub.s32 %s16, 2
      %s23 = sadd.s32 %s16, 1
      %s24 = ssub.s32 %s16, %s23
      %p25 = scmp.eq.s32.totalorder %s24, 0
      %s27 = sadd.s32 %s26, 1
      %s28 = scalar_select %p25, %s26, %s27
      %p31 = pneg %p25
      %p32 = scmp.eq.s32.totalorder %s16, 1
      %p33 = por %p31, %p32
      %p34 = scmp.ne.s32.totalorder %s26, %s29
      %p35 = scmp.eq.s32.totalorder %s16, 0
      %p36 = por %p34, %p35
      %p37 = scmp.ne.s32.totalorder %s26, %s29
      %p38 = scmp.eq.s32.totalorder %s21, 1
      %p39 = por %p37, %p38
      %p40 = scmp.ne.s32.totalorder %s29, %s30
      %p41 = scmp.eq.s32.totalorder %s21, 0
      %p42 = por %p40, %p41
      %p43 = scmp.ne.s32.totalorder %s29, %s30
      %p44 = scmp.eq.s32.totalorder %s22, 1
      %p45 = por %p43, %p44
      %p47 = scmp.ne.s32.totalorder %s30, %s46
      %p48 = scmp.eq.s32.totalorder %s22, 0
      %p49 = por %p47, %p48
      %s51 = sadd.s32 %s50, 1
      %p54 = scmp.eq.s32.totalorder %s16, 1
      %p55 = scmp.ne.s32.totalorder %s50, %s52
      %p56 = scmp.eq.s32.totalorder %s16, 0
      %p57 = por %p55, %p56
      %p58 = scmp.ne.s32.totalorder %s50, %s52
      %p59 = scmp.eq.s32.totalorder %s21, 1
      %p60 = por %p58, %p59
      %p61 = scmp.ne.s32.totalorder %s52, %s53
      %p62 = scmp.eq.s32.totalorder %s21, 0
      %p63 = por %p61, %p62
      %p64 = scmp.ne.s32.totalorder %s52, %s53
      %p65 = scmp.eq.s32.totalorder %s22, 1
      %p66 = por %p64, %p65
      %p68 = scmp.ne.s32.totalorder %s53, %s67
      %p69 = scmp.eq.s32.totalorder %s22, 0
      %p70 = por %p68, %p69
      %s72 = sadd.s32 %s71, 1
      %p75 = scmp.eq.s32.totalorder %s16, 1
      %p76 = scmp.ne.s32.totalorder %s71, %s73
      %p77 = scmp.eq.s32.totalorder %s16, 0
      %p78 = por %p76, %p77
      %p79 = scmp.ne.s32.totalorder %s71, %s73
      %p80 = scmp.eq.s32.totalorder %s21, 1
      %p81 = por %p79, %p80
      %p82 = scmp.ne.s32.totalorder %s73, %s74
      %p83 = scmp.eq.s32.totalorder %s21, 0
      %p84 = por %p82, %p83
      %p85 = scmp.ne.s32.totalorder %s73, %s74
      %p86 = scmp.eq.s32.totalorder %s22, 1
      %p87 = por %p85, %p86
      %p89 = scmp.ne.s32.totalorder %s74, %s88
      %p90 = scmp.eq.s32.totalorder %s22, 0
      %p91 = por %p89, %p90
      %s93 = sadd.s32 %s92, 1
      %p96 = scmp.eq.s32.totalorder %s16, 1
      %p97 = scmp.ne.s32.totalorder %s92, %s94
      %p98 = scmp.eq.s32.totalorder %s16, 0
      %p99 = por %p97, %p98
      %p100 = scmp.ne.s32.totalorder %s92, %s94
      %p101 = scmp.eq.s32.totalorder %s21, 1
      %p102 = por %p100, %p101
      %p103 = scmp.ne.s32.totalorder %s94, %s95
      %p104 = scmp.eq.s32.totalorder %s21, 0
      %p105 = por %p103, %p104
      %p106 = scmp.ne.s32.totalorder %s94, %s95
      %p107 = scmp.eq.s32.totalorder %s22, 1
      %p108 = por %p106, %p107
      %p110 = scmp.ne.s32.totalorder %s95, %s109
      %p111 = scmp.eq.s32.totalorder %s22, 0
      %p112 = por %p110, %p111
      %s114 = sadd.s32 %s113, 1
      %p117 = scmp.eq.s32.totalorder %s16, 1
      %p118 = scmp.ne.s32.totalorder %s113, %s115
      %p119 = scmp.eq.s32.totalorder %s16, 0
      %p120 = por %p118, %p119
      %p121 = scmp.ne.s32.totalorder %s113, %s115
      %p122 = scmp.eq.s32.totalorder %s21, 1
      %p123 = por %p121, %p122
      %p124 = scmp.ne.s32.totalorder %s115, %s116
      %p125 = scmp.eq.s32.totalorder %s21, 0
      %p126 = por %p124, %p125
      %p127 = scmp.ne.s32.totalorder %s115, %s116
      %p128 = scmp.eq.s32.totalorder %s22, 1
      %p129 = por %p127, %p128
      %p131 = scmp.ne.s32.totalorder %s116, %s130
      %p132 = scmp.eq.s32.totalorder %s22, 0
      %p133 = por %p131, %p132
      %s135 = sadd.s32 %s134, 1
      %p138 = scmp.eq.s32.totalorder %s16, 1
      %p139 = scmp.ne.s32.totalorder %s134, %s136
      %p140 = scmp.eq.s32.totalorder %s16, 0
      %p141 = por %p139, %p140
      %p142 = scmp.ne.s32.totalorder %s134, %s136
      %p143 = scmp.eq.s32.totalorder %s21, 1
      %p144 = por %p142, %p143
      %p145 = scmp.ne.s32.totalorder %s136, %s137
      %p146 = scmp.eq.s32.totalorder %s21, 0
      %p147 = por %p145, %p146
      %p148 = scmp.ne.s32.totalorder %s136, %s137
      %p149 = scmp.eq.s32.totalorder %s22, 1
      %p150 = por %p148, %p149
      %p152 = scmp.ne.s32.totalorder %s137, %s151
      %p153 = scmp.eq.s32.totalorder %s22, 0
      %p154 = por %p152, %p153
      %s156 = sadd.s32 %s155, 1
      %p159 = scmp.eq.s32.totalorder %s16, 1
      %p160 = scmp.ne.s32.totalorder %s155, %s157
      %p161 = scmp.eq.s32.totalorder %s16, 0
      %p162 = por %p160, %p161
      %p163 = scmp.ne.s32.totalorder %s155, %s157
      %p164 = scmp.eq.s32.totalorder %s21, 1
      %p165 = por %p163, %p164
      %p166 = scmp.ne.s32.totalorder %s157, %s158
      %p167 = scmp.eq.s32.totalorder %s21, 0
      %p168 = por %p166, %p167
      %p169 = scmp.ne.s32.totalorder %s157, %s158
      %p170 = scmp.eq.s32.totalorder %s22, 1
      %p171 = por %p169, %p170
      %p173 = scmp.ne.s32.totalorder %s158, %s172
      %p174 = scmp.eq.s32.totalorder %s22, 0
      %p175 = por %p173, %p174
      %s176 = ssub.s32 %s16, %s23
      %p177 = scmp.eq.s32.totalorder %s176, 0
      %s179 = sadd.s32 %s178, 1
      %s180 = scalar_select %p177, %s178, %s179
      %p183 = pneg %p177
      %p184 = scmp.eq.s32.totalorder %s16, 1
      %p185 = por %p183, %p184
      %p186 = scmp.ne.s32.totalorder %s178, %s181
      %p187 = scmp.eq.s32.totalorder %s16, 0
      %p188 = por %p186, %p187
      %p189 = scmp.ne.s32.totalorder %s178, %s181
      %p190 = scmp.eq.s32.totalorder %s21, 1
      %p191 = por %p189, %p190
      %p192 = scmp.ne.s32.totalorder %s181, %s182
      %p193 = scmp.eq.s32.totalorder %s21, 0
      %p194 = por %p192, %p193
      %p195 = scmp.ne.s32.totalorder %s181, %s182
      %p196 = scmp.eq.s32.totalorder %s22, 1
      %p197 = por %p195, %p196
      %p199 = scmp.ne.s32.totalorder %s182, %s198
      %p200 = scmp.eq.s32.totalorder %s22, 0
      %p201 = por %p199, %p200
      %p202 = scmp.le.s32.totalorder 1, %s16
      %p203 = scmp.lt.s32.totalorder %s16, 3
      %p204 = pnand %p202, %p203
      %p205 = pneg %p204
      // Predicated region
      $region9: #{basic_block_forward.1} parent=5 // pred_check
        _
      $region10: #{basic_block_forward.1} parent=5 // pred_check_branch
        %207 = sbr.rel (%p204) target = $region12
      $region11: #{basic_block_forward.1} parent=5 // pred_region
        %s208 = ssub.s32 %s16, 1
        // Predicated region
        $region13: #{basic_block_forward.1} parent=11 // pred_check
          %p209 = pneg %p63
        $region14: #{basic_block_forward.1} parent=11 // pred_check_branch
          %211 = sbr.rel (%p209) target = $region16
        $region15: #{basic_block_forward.1} parent=11 // pred_region
          _
        $region16: #{basic_block_forward.1} parent=11 // pred_fallthru
          _
        // Predicated region
        $region17: #{basic_block_forward.1} parent=11 // pred_check
          %p212 = pneg %p84
        $region18: #{basic_block_forward.1} parent=11 // pred_check_branch
          %214 = sbr.rel (%p212) target = $region20
        $region19: #{basic_block_forward.1} parent=11 // pred_region
          _
        $region20: #{basic_block_forward.1} parent=11 // pred_fallthru
          _
        // Predicated region
        $region21: #{basic_block_forward.1} parent=11 // pred_check
          %p215 = pneg %p105
        $region22: #{basic_block_forward.1} parent=11 // pred_check_branch
          %217 = sbr.rel (%p215) target = $region24
        $region23: #{basic_block_forward.1} parent=11 // pred_region
          _
        $region24: #{basic_block_forward.1} parent=11 // pred_fallthru
          _
        // Predicated region
        $region25: #{basic_block_forward.1} parent=11 // pred_check
          %p218 = pneg %p126
        $region26: #{basic_block_forward.1} parent=11 // pred_check_branch
          %220 = sbr.rel (%p218) target = $region28
        $region27: #{basic_block_forward.1} parent=11 // pred_region
          _
        $region28: #{basic_block_forward.1} parent=11 // pred_fallthru
          _
        // Predicated region
        $region29: #{basic_block_forward.1} parent=11 // pred_check
          %p221 = pneg %p147
        $region30: #{basic_block_forward.1} parent=11 // pred_check_branch
          %223 = sbr.rel (%p221) target = $region32
        $region31: #{basic_block_forward.1} parent=11 // pred_region
          _
        $region32: #{basic_block_forward.1} parent=11 // pred_fallthru
          _
        // Predicated region
        $region33: #{basic_block_forward.1} parent=11 // pred_check
          %p224 = pneg %p168
        $region34: #{basic_block_forward.1} parent=11 // pred_check_branch
          %226 = sbr.rel (%p224) target = $region36
        $region35: #{basic_block_forward.1} parent=11 // pred_region
          _
        $region36: #{basic_block_forward.1} parent=11 // pred_fallthru
          _
      $region12: #{basic_block_forward.1} parent=5 // pred_fallthru
        _
      %p227 = scmp.lt.s32.totalorder %s16, 2
      // Predicated region
      $region37: #{basic_block_forward.1} parent=5 // pred_check
        %p228 = pneg %p227
      $region38: #{basic_block_forward.1} parent=5 // pred_check_branch
        %230 = sbr.rel (%p228) target = $region40
      $region39: #{basic_block_forward.1} parent=5 // pred_region
        // Predicated region
        $region41: #{basic_block_forward.1} parent=39 // pred_check
          %p231 = pneg %p36
        $region42: #{basic_block_forward.1} parent=39 // pred_check_branch
          %233 = sbr.rel (%p231) target = $region44
        $region43: #{basic_block_forward.1} parent=39 // pred_region
          %s234 = sand.u32 %s26, 1
          %s235 = sand.u32 %s26, 1
          %s236 = smul.addr %s235, 288
          %s237 = scalar_lea.vmem [#allocation3], %s236
          %s238 = smul.addr %s16, 18
          %s239 = smul.addr %s238, 4
          %s240 = scalar_lea.vmem %s0, %s239
          // Predicated region
          $region45: #{basic_block_forward.1} parent=43 // pred_check
            _
          $region46: #{basic_block_forward.1} parent=43 // pred_check_branch
            %242 = sbr.rel (0) target = $region48
          $region47: #{basic_block_forward.1} parent=43 // pred_region
            // Predicated region
            $region49: #{basic_block_forward.1} parent=47 // pred_check
              _
            $region50: #{basic_block_forward.1} parent=47 // pred_check_branch
              %244 = sbr.rel target = $region52
            $region51: #{basic_block_forward.1} parent=47 // pred_region
              // Predicated region
              $region64: #{basic_block_forward.1} parent=51 // pred_check
                _
              $region65: #{basic_block_forward.1} parent=51 // pred_check_branch
                %401 = sbr.rel (0) target = $region67
              $region66: #{basic_block_forward.1} parent=51 // pred_region
                loop: start=0, step=1, limit=1
                $region68: #{basic_block_forward.1} parent=66 // loop_pre_header
                  _
                $region69: #{basic_block_forward.1} parent=66 // loop_header
                  %s403 = sphi 0, %s407
                  %p404 = scmp.ge.s32.totalorder %s403, 1
                  %s408 = sphi %s240, %s240
                  %s409 = sphi %s237, %s237
                $region70: #{basic_block_forward.1} parent=66 // loop_header_branch
                  %406 = sbr.rel (%p404) target = $region74
                $region71: #{basic_block_forward.1} parent=66 // loop_body
                  _
                $region72: #{basic_block_forward.1} parent=66 // loop_footer
                  %s407 = sadd.s32 1, %s403
                $region73: #{basic_block_forward.1} parent=66 // loop_footer_branch
                  %402 = sbr.rel target = $region69
                $region74: #{basic_block_forward.1} parent=66 // loop_exit
                  _
                loop: start=0, step=1, limit=1
                $region75: #{basic_block_forward.1} parent=66 // loop_pre_header
                  _
                $region76: #{basic_block_forward.1} parent=66 // loop_header
                  %s412 = sphi 0, %s416
                  %p413 = scmp.ge.s32.totalorder %s412, 1
                  %s417 = sphi %s240, %s240
                  %s418 = sphi %s237, %s237
                $region77: #{basic_block_forward.1} parent=66 // loop_header_branch
                  %415 = sbr.rel (%p413) target = $region81
                $region78: #{basic_block_forward.1} parent=66 // loop_body
                  %v419 = vld [vmem:[%s417] sm:$0xf]
                  %420 = vst [vmem:[%s418] sm:$0xf] %v419
                  %v421 = vld [vmem:[%s417 + $0x4] sm:$0xf]
                  %422 = vst [vmem:[%s418 + $0x4] sm:$0xf] %v421
                  %v423 = vld [vmem:[%s417 + $0x8] sm:$0xf]
                  %424 = vst [vmem:[%s418 + $0x8] sm:$0xf] %v423
                  %v425 = vld [vmem:[%s417 + $0xc] sm:$0xf]
                  %426 = vst [vmem:[%s418 + $0xc] sm:$0xf] %v425
                  %v427 = vld [vmem:[%s417 + $0x10] sm:$0xf]
                  %428 = vst [vmem:[%s418 + $0x10] sm:$0xf] %v427
                  %v429 = vld [vmem:[%s417 + $0x14] sm:$0xf]
                  %430 = vst [vmem:[%s418 + $0x14] sm:$0xf] %v429
                  %v431 = vld [vmem:[%s417 + $0x18] sm:$0xf]
                  %432 = vst [vmem:[%s418 + $0x18] sm:$0xf] %v431
                  %v433 = vld [vmem:[%s417 + $0x1c] sm:$0xf]
                  %434 = vst [vmem:[%s418 + $0x1c] sm:$0xf] %v433
                  %v435 = vld [vmem:[%s417 + $0x20] sm:$0xf]
                  %436 = vst [vmem:[%s418 + $0x20] sm:$0xf] %v435
                  %v437 = vld [vmem:[%s417 + $0x24] sm:$0xf]
                  %438 = vst [vmem:[%s418 + $0x24] sm:$0xf] %v437
                  %v439 = vld [vmem:[%s417 + $0x28] sm:$0xf]
                  %440 = vst [vmem:[%s418 + $0x28] sm:$0xf] %v439
                  %v441 = vld [vmem:[%s417 + $0x2c] sm:$0xf]
                  %442 = vst [vmem:[%s418 + $0x2c] sm:$0xf] %v441
                  %v443 = vld [vmem:[%s417 + $0x30] sm:$0xf]
                  %444 = vst [vmem:[%s418 + $0x30] sm:$0xf] %v443
                  %v445 = vld [vmem:[%s417 + $0x34] sm:$0xf]
                  %446 = vst [vmem:[%s418 + $0x34] sm:$0xf] %v445
                  %v447 = vld [vmem:[%s417 + $0x38] sm:$0xf]
                  %448 = vst [vmem:[%s418 + $0x38] sm:$0xf] %v447
                  %v449 = vld [vmem:[%s417 + $0x3c] sm:$0xf]
                  %450 = vst [vmem:[%s418 + $0x3c] sm:$0xf] %v449
                  %v451 = vld [vmem:[%s417 + $0x40] sm:$0xf]
                  %452 = vst [vmem:[%s418 + $0x40] sm:$0xf] %v451
                  %v453 = vld [vmem:[%s417 + $0x44] sm:$0xf]
                  %454 = vst [vmem:[%s418 + $0x44] sm:$0xf] %v453
                  %v455 = vld [vmem:[%s417 + $0x90] sm:$0xf]
                  %456 = vst [vmem:[%s418 + $0x48] sm:$0xf] %v455
                  %v457 = vld [vmem:[%s417 + $0x94] sm:$0xf]
                  %458 = vst [vmem:[%s418 + $0x4c] sm:$0xf] %v457
                  %v459 = vld [vmem:[%s417 + $0x98] sm:$0xf]
                  %460 = vst [vmem:[%s418 + $0x50] sm:$0xf] %v459
                  %v461 = vld [vmem:[%s417 + $0x9c] sm:$0xf]
                  %462 = vst [vmem:[%s418 + $0x54] sm:$0xf] %v461
                  %v463 = vld [vmem:[%s417 + $0xa0] sm:$0xf]
                  %464 = vst [vmem:[%s418 + $0x58] sm:$0xf] %v463
                  %v465 = vld [vmem:[%s417 + $0xa4] sm:$0xf]
                  %466 = vst [vmem:[%s418 + $0x5c] sm:$0xf] %v465
                  %v467 = vld [vmem:[%s417 + $0xa8] sm:$0xf]
                  %468 = vst [vmem:[%s418 + $0x60] sm:$0xf] %v467
                  %v469 = vld [vmem:[%s417 + $0xac] sm:$0xf]
                  %470 = vst [vmem:[%s418 + $0x64] sm:$0xf] %v469
                  %v471 = vld [vmem:[%s417 + $0xb0] sm:$0xf]
                  %472 = vst [vmem:[%s418 + $0x68] sm:$0xf] %v471
                  %v473 = vld [vmem:[%s417 + $0xb4] sm:$0xf]
                  %474 = vst [vmem:[%s418 + $0x6c] sm:$0xf] %v473
                  %v475 = vld [vmem:[%s417 + $0xb8] sm:$0xf]
                  %476 = vst [vmem:[%s418 + $0x70] sm:$0xf] %v475
                  %v477 = vld [vmem:[%s417 + $0xbc] sm:$0xf]
                  %478 = vst [vmem:[%s418 + $0x74] sm:$0xf] %v477
                  %v479 = vld [vmem:[%s417 + $0xc0] sm:$0xf]
                  %480 = vst [vmem:[%s418 + $0x78] sm:$0xf] %v479
                  %v481 = vld [vmem:[%s417 + $0xc4] sm:$0xf]
                  %482 = vst [vmem:[%s418 + $0x7c] sm:$0xf] %v481
                  %v483 = vld [vmem:[%s417 + $0xc8] sm:$0xf]
                  %484 = vst [vmem:[%s418 + $0x80] sm:$0xf] %v483
                  %v485 = vld [vmem:[%s417 + $0xcc] sm:$0xf]
                  %486 = vst [vmem:[%s418 + $0x84] sm:$0xf] %v485
                  %v487 = vld [vmem:[%s417 + $0xd0] sm:$0xf]
                  %488 = vst [vmem:[%s418 + $0x88] sm:$0xf] %v487
                  %v489 = vld [vmem:[%s417 + $0xd4] sm:$0xf]
                  %490 = vst [vmem:[%s418 + $0x8c] sm:$0xf] %v489
                  %v491 = vld [vmem:[%s417 + $0x120] sm:$0xf]
                  %492 = vst [vmem:[%s418 + $0x90] sm:$0xf] %v491
                  %v493 = vld [vmem:[%s417 + $0x124] sm:$0xf]
                  %494 = vst [vmem:[%s418 + $0x94] sm:$0xf] %v493
                  %v495 = vld [vmem:[%s417 + $0x128] sm:$0xf]
                  %496 = vst [vmem:[%s418 + $0x98] sm:$0xf] %v495
                  %v497 = vld [vmem:[%s417 + $0x12c] sm:$0xf]
                  %498 = vst [vmem:[%s418 + $0x9c] sm:$0xf] %v497
                  %v499 = vld [vmem:[%s417 + $0x130] sm:$0xf]
                  %500 = vst [vmem:[%s418 + $0xa0] sm:$0xf] %v499
                  %v501 = vld [vmem:[%s417 + $0x134] sm:$0xf]
                  %502 = vst [vmem:[%s418 + $0xa4] sm:$0xf] %v501
                  %v503 = vld [vmem:[%s417 + $0x138] sm:$0xf]
                  %504 = vst [vmem:[%s418 + $0xa8] sm:$0xf] %v503
                  %v505 = vld [vmem:[%s417 + $0x13c] sm:$0xf]
                  %506 = vst [vmem:[%s418 + $0xac] sm:$0xf] %v505
                  %v507 = vld [vmem:[%s417 + $0x140] sm:$0xf]
                  %508 = vst [vmem:[%s418 + $0xb0] sm:$0xf] %v507
                  %v509 = vld [vmem:[%s417 + $0x144] sm:$0xf]
                  %510 = vst [vmem:[%s418 + $0xb4] sm:$0xf] %v509
                  %v511 = vld [vmem:[%s417 + $0x148] sm:$0xf]
                  %512 = vst [vmem:[%s418 + $0xb8] sm:$0xf] %v511
                  %v513 = vld [vmem:[%s417 + $0x14c] sm:$0xf]
                  %514 = vst [vmem:[%s418 + $0xbc] sm:$0xf] %v513
                  %v515 = vld [vmem:[%s417 + $0x150] sm:$0xf]
                  %516 = vst [vmem:[%s418 + $0xc0] sm:$0xf] %v515
                  %v517 = vld [vmem:[%s417 + $0x154] sm:$0xf]
                  %518 = vst [vmem:[%s418 + $0xc4] sm:$0xf] %v517
                  %v519 = vld [vmem:[%s417 + $0x158] sm:$0xf]
                  %520 = vst [vmem:[%s418 + $0xc8] sm:$0xf] %v519
                  %v521 = vld [vmem:[%s417 + $0x15c] sm:$0xf]
                  %522 = vst [vmem:[%s418 + $0xcc] sm:$0xf] %v521
                  %v523 = vld [vmem:[%s417 + $0x160] sm:$0xf]
                  %524 = vst [vmem:[%s418 + $0xd0] sm:$0xf] %v523
                  %v525 = vld [vmem:[%s417 + $0x164] sm:$0xf]
                  %526 = vst [vmem:[%s418 + $0xd4] sm:$0xf] %v525
                  %v527 = vld [vmem:[%s417 + $0x1b0] sm:$0xf]
                  %528 = vst [vmem:[%s418 + $0xd8] sm:$0xf] %v527
                  %v529 = vld [vmem:[%s417 + $0x1b4] sm:$0xf]
                  %530 = vst [vmem:[%s418 + $0xdc] sm:$0xf] %v529
                  %v531 = vld [vmem:[%s417 + $0x1b8] sm:$0xf]
                  %532 = vst [vmem:[%s418 + $0xe0] sm:$0xf] %v531
                  %v533 = vld [vmem:[%s417 + $0x1bc] sm:$0xf]
                  %534 = vst [vmem:[%s418 + $0xe4] sm:$0xf] %v533
                  %v535 = vld [vmem:[%s417 + $0x1c0] sm:$0xf]
                  %536 = vst [vmem:[%s418 + $0xe8] sm:$0xf] %v535
                  %v537 = vld [vmem:[%s417 + $0x1c4] sm:$0xf]
                  %538 = vst [vmem:[%s418 + $0xec] sm:$0xf] %v537
                  %v539 = vld [vmem:[%s417 + $0x1c8] sm:$0xf]
                  %540 = vst [vmem:[%s418 + $0xf0] sm:$0xf] %v539
                  %v541 = vld [vmem:[%s417 + $0x1cc] sm:$0xf]
                  %542 = vst [vmem:[%s418 + $0xf4] sm:$0xf] %v541
                  %v543 = vld [vmem:[%s417 + $0x1d0] sm:$0xf]
                  %544 = vst [vmem:[%s418 + $0xf8] sm:$0xf] %v543
                  %v545 = vld [vmem:[%s417 + $0x1d4] sm:$0xf]
                  %546 = vst [vmem:[%s418 + $0xfc] sm:$0xf] %v545
                  %v547 = vld [vmem:[%s417 + $0x1d8] sm:$0xf]
                  %548 = vst [vmem:[%s418 + $0x100] sm:$0xf] %v547
                  %v549 = vld [vmem:[%s417 + $0x1dc] sm:$0xf]
                  %550 = vst [vmem:[%s418 + $0x104] sm:$0xf] %v549
                  %v551 = vld [vmem:[%s417 + $0x1e0] sm:$0xf]
                  %552 = vst [vmem:[%s418 + $0x108] sm:$0xf] %v551
                  %v553 = vld [vmem:[%s417 + $0x1e4] sm:$0xf]
                  %554 = vst [vmem:[%s418 + $0x10c] sm:$0xf] %v553
                  %v555 = vld [vmem:[%s417 + $0x1e8] sm:$0xf]
                  %556 = vst [vmem:[%s418 + $0x110] sm:$0xf] %v555
                  %v557 = vld [vmem:[%s417 + $0x1ec] sm:$0xf]
                  %558 = vst [vmem:[%s418 + $0x114] sm:$0xf] %v557
                  %v559 = vld [vmem:[%s417 + $0x1f0] sm:$0xf]
                  %560 = vst [vmem:[%s418 + $0x118] sm:$0xf] %v559
                  %v561 = vld [vmem:[%s417 + $0x1f4] sm:$0xf]
                  %562 = vst [vmem:[%s418 + $0x11c] sm:$0xf] %v561
                $region79: #{basic_block_forward.1} parent=66 // loop_footer
                  %s416 = sadd.s32 1, %s412
                $region80: #{basic_block_forward.1} parent=66 // loop_footer_branch
                  %411 = sbr.rel target = $region76
                $region81: #{basic_block_forward.1} parent=66 // loop_exit
                  _
              $region67: #{basic_block_forward.1} parent=51 // pred_fallthru
                _
            $region52: #{basic_block_forward.1} parent=47 // pred_fallthru
              _
            // Predicated region
            $region53: #{basic_block_forward.1} parent=47 // pred_check
              _
            $region54: #{basic_block_forward.1} parent=47 // pred_check_branch
              %246 = sbr.rel (0) target = $region56
            $region55: #{basic_block_forward.1} parent=47 // pred_region
              loop: start=0, step=1, limit=1
              $region57: #{basic_block_forward.1} parent=55 // loop_pre_header
                _
              $region58: #{basic_block_forward.1} parent=55 // loop_header
                %s249 = sphi 0, %s253
                %p250 = scmp.ge.s32.totalorder %s249, 1
                %s254 = sphi %s240, %s240
                %s255 = sphi %s237, %s237
              $region59: #{basic_block_forward.1} parent=55 // loop_header_branch
                %252 = sbr.rel (%p250) target = $region63
              $region60: #{basic_block_forward.1} parent=55 // loop_body
                %v256 = vld [vmem:[%s254] sm:$0xf]
                %257 = vst [vmem:[%s255] sm:$0xf] %v256
                %v258 = vld [vmem:[%s254 + $0x4] sm:$0xf]
                %259 = vst [vmem:[%s255 + $0x4] sm:$0xf] %v258
                %v260 = vld [vmem:[%s254 + $0x8] sm:$0xf]
                %261 = vst [vmem:[%s255 + $0x8] sm:$0xf] %v260
                %v262 = vld [vmem:[%s254 + $0xc] sm:$0xf]
                %263 = vst [vmem:[%s255 + $0xc] sm:$0xf] %v262
                %v264 = vld [vmem:[%s254 + $0x10] sm:$0xf]
                %265 = vst [vmem:[%s255 + $0x10] sm:$0xf] %v264
                %v266 = vld [vmem:[%s254 + $0x14] sm:$0xf]
                %267 = vst [vmem:[%s255 + $0x14] sm:$0xf] %v266
                %v268 = vld [vmem:[%s254 + $0x18] sm:$0xf]
                %269 = vst [vmem:[%s255 + $0x18] sm:$0xf] %v268
                %v270 = vld [vmem:[%s254 + $0x1c] sm:$0xf]
                %271 = vst [vmem:[%s255 + $0x1c] sm:$0xf] %v270
                %v272 = vld [vmem:[%s254 + $0x20] sm:$0xf]
                %273 = vst [vmem:[%s255 + $0x20] sm:$0xf] %v272
                %v274 = vld [vmem:[%s254 + $0x24] sm:$0xf]
                %275 = vst [vmem:[%s255 + $0x24] sm:$0xf] %v274
                %v276 = vld [vmem:[%s254 + $0x28] sm:$0xf]
                %277 = vst [vmem:[%s255 + $0x28] sm:$0xf] %v276
                %v278 = vld [vmem:[%s254 + $0x2c] sm:$0xf]
                %279 = vst [vmem:[%s255 + $0x2c] sm:$0xf] %v278
                %v280 = vld [vmem:[%s254 + $0x30] sm:$0xf]
                %281 = vst [vmem:[%s255 + $0x30] sm:$0xf] %v280
                %v282 = vld [vmem:[%s254 + $0x34] sm:$0xf]
                %283 = vst [vmem:[%s255 + $0x34] sm:$0xf] %v282
                %v284 = vld [vmem:[%s254 + $0x38] sm:$0xf]
                %285 = vst [vmem:[%s255 + $0x38] sm:$0xf] %v284
                %v286 = vld [vmem:[%s254 + $0x3c] sm:$0xf]
                %287 = vst [vmem:[%s255 + $0x3c] sm:$0xf] %v286
                %v288 = vld [vmem:[%s254 + $0x40] sm:$0xf]
                %289 = vst [vmem:[%s255 + $0x40] sm:$0xf] %v288
                %v290 = vld [vmem:[%s254 + $0x44] sm:$0xf]
                %291 = vst [vmem:[%s255 + $0x44] sm:$0xf] %v290
                %v292 = vld [vmem:[%s254 + $0x90] sm:$0xf]
                %293 = vst [vmem:[%s255 + $0x48] sm:$0xf] %v292
                %v294 = vld [vmem:[%s254 + $0x94] sm:$0xf]
                %295 = vst [vmem:[%s255 + $0x4c] sm:$0xf] %v294
                %v296 = vld [vmem:[%s254 + $0x98] sm:$0xf]
                %297 = vst [vmem:[%s255 + $0x50] sm:$0xf] %v296
                %v298 = vld [vmem:[%s254 + $0x9c] sm:$0xf]
                %299 = vst [vmem:[%s255 + $0x54] sm:$0xf] %v298
                %v300 = vld [vmem:[%s254 + $0xa0] sm:$0xf]
                %301 = vst [vmem:[%s255 + $0x58] sm:$0xf] %v300
                %v302 = vld [vmem:[%s254 + $0xa4] sm:$0xf]
                %303 = vst [vmem:[%s255 + $0x5c] sm:$0xf] %v302
                %v304 = vld [vmem:[%s254 + $0xa8] sm:$0xf]
                %305 = vst [vmem:[%s255 + $0x60] sm:$0xf] %v304
                %v306 = vld [vmem:[%s254 + $0xac] sm:$0xf]
                %307 = vst [vmem:[%s255 + $0x64] sm:$0xf] %v306
                %v308 = vld [vmem:[%s254 + $0xb0] sm:$0xf]
                %309 = vst [vmem:[%s255 + $0x68] sm:$0xf] %v308
                %v310 = vld [vmem:[%s254 + $0xb4] sm:$0xf]
                %311 = vst [vmem:[%s255 + $0x6c] sm:$0xf] %v310
                %v312 = vld [vmem:[%s254 + $0xb8] sm:$0xf]
                %313 = vst [vmem:[%s255 + $0x70] sm:$0xf] %v312
                %v314 = vld [vmem:[%s254 + $0xbc] sm:$0xf]
                %315 = vst [vmem:[%s255 + $0x74] sm:$0xf] %v314
                %v316 = vld [vmem:[%s254 + $0xc0] sm:$0xf]
                %317 = vst [vmem:[%s255 + $0x78] sm:$0xf] %v316
                %v318 = vld [vmem:[%s254 + $0xc4] sm:$0xf]
                %319 = vst [vmem:[%s255 + $0x7c] sm:$0xf] %v318
                %v320 = vld [vmem:[%s254 + $0xc8] sm:$0xf]
                %321 = vst [vmem:[%s255 + $0x80] sm:$0xf] %v320
                %v322 = vld [vmem:[%s254 + $0xcc] sm:$0xf]
                %323 = vst [vmem:[%s255 + $0x84] sm:$0xf] %v322
                %v324 = vld [vmem:[%s254 + $0xd0] sm:$0xf]
                %325 = vst [vmem:[%s255 + $0x88] sm:$0xf] %v324
                %v326 = vld [vmem:[%s254 + $0xd4] sm:$0xf]
                %327 = vst [vmem:[%s255 + $0x8c] sm:$0xf] %v326
                %v328 = vld [vmem:[%s254 + $0x120] sm:$0xf]
                %329 = vst [vmem:[%s255 + $0x90] sm:$0xf] %v328
                %v330 = vld [vmem:[%s254 + $0x124] sm:$0xf]
                %331 = vst [vmem:[%s255 + $0x94] sm:$0xf] %v330
                %v332 = vld [vmem:[%s254 + $0x128] sm:$0xf]
                %333 = vst [vmem:[%s255 + $0x98] sm:$0xf] %v332
                %v334 = vld [vmem:[%s254 + $0x12c] sm:$0xf]
                %335 = vst [vmem:[%s255 + $0x9c] sm:$0xf] %v334
                %v336 = vld [vmem:[%s254 + $0x130] sm:$0xf]
                %337 = vst [vmem:[%s255 + $0xa0] sm:$0xf] %v336
                %v338 = vld [vmem:[%s254 + $0x134] sm:$0xf]
                %339 = vst [vmem:[%s255 + $0xa4] sm:$0xf] %v338
                %v340 = vld [vmem:[%s254 + $0x138] sm:$0xf]
                %341 = vst [vmem:[%s255 + $0xa8] sm:$0xf] %v340
                %v342 = vld [vmem:[%s254 + $0x13c] sm:$0xf]
                %343 = vst [vmem:[%s255 + $0xac] sm:$0xf] %v342
                %v344 = vld [vmem:[%s254 + $0x140] sm:$0xf]
                %345 = vst [vmem:[%s255 + $0xb0] sm:$0xf] %v344
                %v346 = vld [vmem:[%s254 + $0x144] sm:$0xf]
                %347 = vst [vmem:[%s255 + $0xb4] sm:$0xf] %v346
                %v348 = vld [vmem:[%s254 + $0x148] sm:$0xf]
                %349 = vst [vmem:[%s255 + $0xb8] sm:$0xf] %v348
                %v350 = vld [vmem:[%s254 + $0x14c] sm:$0xf]
                %351 = vst [vmem:[%s255 + $0xbc] sm:$0xf] %v350
                %v352 = vld [vmem:[%s254 + $0x150] sm:$0xf]
                %353 = vst [vmem:[%s255 + $0xc0] sm:$0xf] %v352
                %v354 = vld [vmem:[%s254 + $0x154] sm:$0xf]
                %355 = vst [vmem:[%s255 + $0xc4] sm:$0xf] %v354
                %v356 = vld [vmem:[%s254 + $0x158] sm:$0xf]
                %357 = vst [vmem:[%s255 + $0xc8] sm:$0xf] %v356
                %v358 = vld [vmem:[%s254 + $0x15c] sm:$0xf]
                %359 = vst [vmem:[%s255 + $0xcc] sm:$0xf] %v358
                %v360 = vld [vmem:[%s254 + $0x160] sm:$0xf]
                %361 = vst [vmem:[%s255 + $0xd0] sm:$0xf] %v360
                %v362 = vld [vmem:[%s254 + $0x164] sm:$0xf]
                %363 = vst [vmem:[%s255 + $0xd4] sm:$0xf] %v362
                %v364 = vld [vmem:[%s254 + $0x1b0] sm:$0xf]
                %365 = vst [vmem:[%s255 + $0xd8] sm:$0xf] %v364
                %v366 = vld [vmem:[%s254 + $0x1b4] sm:$0xf]
                %367 = vst [vmem:[%s255 + $0xdc] sm:$0xf] %v366
                %v368 = vld [vmem:[%s254 + $0x1b8] sm:$0xf]
                %369 = vst [vmem:[%s255 + $0xe0] sm:$0xf] %v368
                %v370 = vld [vmem:[%s254 + $0x1bc] sm:$0xf]
                %371 = vst [vmem:[%s255 + $0xe4] sm:$0xf] %v370
                %v372 = vld [vmem:[%s254 + $0x1c0] sm:$0xf]
                %373 = vst [vmem:[%s255 + $0xe8] sm:$0xf] %v372
                %v374 = vld [vmem:[%s254 + $0x1c4] sm:$0xf]
                %375 = vst [vmem:[%s255 + $0xec] sm:$0xf] %v374
                %v376 = vld [vmem:[%s254 + $0x1c8] sm:$0xf]
                %377 = vst [vmem:[%s255 + $0xf0] sm:$0xf] %v376
                %v378 = vld [vmem:[%s254 + $0x1cc] sm:$0xf]
                %379 = vst [vmem:[%s255 + $0xf4] sm:$0xf] %v378
                %v380 = vld [vmem:[%s254 + $0x1d0] sm:$0xf]
                %381 = vst [vmem:[%s255 + $0xf8] sm:$0xf] %v380
                %v382 = vld [vmem:[%s254 + $0x1d4] sm:$0xf]
                %383 = vst [vmem:[%s255 + $0xfc] sm:$0xf] %v382
                %v384 = vld [vmem:[%s254 + $0x1d8] sm:$0xf]
                %385 = vst [vmem:[%s255 + $0x100] sm:$0xf] %v384
                %v386 = vld [vmem:[%s254 + $0x1dc] sm:$0xf]
                %387 = vst [vmem:[%s255 + $0x104] sm:$0xf] %v386
                %v388 = vld [vmem:[%s254 + $0x1e0] sm:$0xf]
                %389 = vst [vmem:[%s255 + $0x108] sm:$0xf] %v388
                %v390 = vld [vmem:[%s254 + $0x1e4] sm:$0xf]
                %391 = vst [vmem:[%s255 + $0x10c] sm:$0xf] %v390
                %v392 = vld [vmem:[%s254 + $0x1e8] sm:$0xf]
                %393 = vst [vmem:[%s255 + $0x110] sm:$0xf] %v392
                %v394 = vld [vmem:[%s254 + $0x1ec] sm:$0xf]
                %395 = vst [vmem:[%s255 + $0x114] sm:$0xf] %v394
                %v396 = vld [vmem:[%s254 + $0x1f0] sm:$0xf]
                %397 = vst [vmem:[%s255 + $0x118] sm:$0xf] %v396
                %v398 = vld [vmem:[%s254 + $0x1f4] sm:$0xf]
                %399 = vst [vmem:[%s255 + $0x11c] sm:$0xf] %v398
              $region61: #{basic_block_forward.1} parent=55 // loop_footer
                %s253 = sadd.s32 1, %s249
              $region62: #{basic_block_forward.1} parent=55 // loop_footer_branch
                %248 = sbr.rel target = $region58
              $region63: #{basic_block_forward.1} parent=55 // loop_exit
                _
            $region56: #{basic_block_forward.1} parent=47 // pred_fallthru
              _
          $region48: #{basic_block_forward.1} parent=43 // pred_fallthru
            _
          %563 = vnop
        $region44: #{basic_block_forward.1} parent=39 // pred_fallthru
          _
      $region40: #{basic_block_forward.1} parent=5 // pred_fallthru
        _
      %p564 = scmp.le.s32.totalorder 1, %s16
      %p565 = scmp.lt.s32.totalorder %s16, 3
      %p566 = pnand %p564, %p565
      %p567 = pneg %p566
      // Predicated region
      $region82: #{basic_block_forward.1} parent=5 // pred_check
        _
      $region83: #{basic_block_forward.1} parent=5 // pred_check_branch
        %569 = sbr.rel (%p566) target = $region85
      $region84: #{basic_block_forward.1} parent=5 // pred_region
        %s570 = ssub.s32 %s16, 1
        %s571 = sand.u32 %s29, 1
        %s572 = sand.u32 %s29, 1
        %s573 = smul.addr %s572, 288
        %s574 = scalar_lea.vmem [#allocation3], %s573
        // Predicated region
        $region86: #{basic_block_forward.1} parent=84 // pred_check
          %p575 = pneg %p42
        $region87: #{basic_block_forward.1} parent=84 // pred_check_branch
          %577 = sbr.rel (%p575) target = $region89
        $region88: #{basic_block_forward.1} parent=84 // pred_region
          _
        $region89: #{basic_block_forward.1} parent=84 // pred_fallthru
          _
        %s578 = sand.u32 %s29, 1
        %s579 = sand.u32 %s29, 1
        %s580 = smul.addr %s579, 288
        %s581 = scalar_lea.vmem [#allocation3], %s580
        %p582 = pneg %p42
        %p583 = pneg %p39
        %p584 = pneg %p63
        %p585 = pneg %p60
        %p586 = pneg %p84
        %p587 = pneg %p81
        %p588 = pneg %p105
        %p589 = pneg %p102
        %p590 = pneg %p126
        %p591 = pneg %p123
        %p592 = pneg %p147
        %p593 = pneg %p144
        %p594 = pneg %p168
        %p595 = pneg %p165
        %p596 = pneg %p194
        %p597 = pneg %p191
        %s598 = sand.u32 %s181, 1
        %s599 = scalar_lea.sflag [#allocation5], %s598
        %s600 = sand.u32 %s181, 1
        %s601 = smul.addr %s600, 32
        %s602 = scalar_lea.vmem [#allocation4], %s601
        %v604 = vld [vmem:[%s574] sm:$0xf]
        %v605 = vld [vmem:[%s574 + $0x8] sm:$0xf]
        %v606 = vld [vmem:[%s574 + $0x10] sm:$0xf]
        %v607 = vld [vmem:[%s574 + $0x18] sm:$0xf]
        %v608 = vld [vmem:[%s574 + $0x20] sm:$0xf]
        %v609 = vld [vmem:[%s574 + $0x28] sm:$0xf]
        %v610 = vld [vmem:[%s574 + $0x30] sm:$0xf]
        %v611 = vld [vmem:[%s574 + $0x38] sm:$0xf]
        %v612 = vld [vmem:[%s1] sm:$0xf]
        %v613 = vld [vmem:[%s1 + $0x4] sm:$0xf]
        %v614 = vld [vmem:[%s1 + $0x8] sm:$0xf]
        %v615 = vld [vmem:[%s1 + $0xc] sm:$0xf]
        %v616 = vld [vmem:[%s1 + $0x10] sm:$0xf]
        %v617 = vld [vmem:[%s1 + $0x14] sm:$0xf]
        %v618 = vld [vmem:[%s1 + $0x18] sm:$0xf]
        %v619 = vld [vmem:[%s1 + $0x1c] sm:$0xf]
        %s620 = scalar_lea.vmem %s574, 72 [#allocation3]
        %v621 = vld [vmem:[%s620] sm:$0xf]
        %v622 = vld [vmem:[%s620 + $0x8] sm:$0xf]
        %v623 = vld [vmem:[%s620 + $0x10] sm:$0xf]
        %v624 = vld [vmem:[%s620 + $0x18] sm:$0xf]
        %v625 = vld [vmem:[%s620 + $0x20] sm:$0xf]
        %v626 = vld [vmem:[%s620 + $0x28] sm:$0xf]
        %v627 = vld [vmem:[%s620 + $0x30] sm:$0xf]
        %v628 = vld [vmem:[%s620 + $0x38] sm:$0xf]
        %v629 = vld [vmem:[%s1 + $0x20] sm:$0xf]
        %v630 = vld [vmem:[%s1 + $0x24] sm:$0xf]
        %v631 = vld [vmem:[%s1 + $0x28] sm:$0xf]
        %v632 = vld [vmem:[%s1 + $0x2c] sm:$0xf]
        %v633 = vld [vmem:[%s1 + $0x30] sm:$0xf]
        %v634 = vld [vmem:[%s1 + $0x34] sm:$0xf]
        %v635 = vld [vmem:[%s1 + $0x38] sm:$0xf]
        %v636 = vld [vmem:[%s1 + $0x3c] sm:$0xf]
        %v645 = vunpack.c.l.b16 %v621
        %v646 = vunpack.c.l.b16 %v622
        %v647 = vunpack.c.l.b16 %v623
        %v648 = vunpack.c.l.b16 %v624
        %v649 = vunpack.c.l.b16 %v625
        %v650 = vunpack.c.l.b16 %v626
        %v651 = vunpack.c.l.b16 %v627
        %v652 = vunpack.c.l.b16 %v628
        %v653 = vpack.c.b16 %v646, %v645
        %v654 = vpack.c.b16 %v648, %v647
        %v655 = vpack.c.b16 %v650, %v649
        %v656 = vpack.c.b16 %v652, %v651
        %v665 = vunpack.c.l.b16 %v629
        %v666 = vunpack.c.l.b16 %v630
        %v667 = vunpack.c.l.b16 %v631
        %v668 = vunpack.c.l.b16 %v632
        %v669 = vunpack.c.l.b16 %v633
        %v670 = vunpack.c.l.b16 %v634
        %v671 = vunpack.c.l.b16 %v635
        %v672 = vunpack.c.l.b16 %v636
        %v673 = vpack.c.b16 %v666, %v665
        %v674 = vpack.c.b16 %v668, %v667
        %v675 = vpack.c.b16 %v670, %v669
        %v676 = vpack.c.b16 %v672, %v671
        %vm681 = vcmask 523264
        %v683 = vsel %vm681, %v653, 0
        %v686 = vsel %vm681, %v654, 0
        %v689 = vsel %vm681, %v655, 0
        %v692 = vsel %vm681, %v656, 0
        %694 = vmatprep.subr.bf16.mxu0 0
        %695 = vmatpush1.bf16.msra.mxu0 %v673
        %696 = vmatprep.subr.bf16.mxu0 0
        %697 = vmatpush1.bf16.msra.mxu0 %v674
        %698 = vmatprep.subr.bf16.mxu0 0
        %699 = vmatpush1.bf16.msra.mxu0 %v675
        %700 = vmatprep.subr.bf16.mxu0 0
        %701 = vmatpush1.bf16.msra.mxu0 %v676
        %702 = vmatprep.subr.bf16.mxu0 0
        %703 = vmatpush1.bf16.msra.mxu0 0
        %704 = vmatprep.subr.bf16.mxu0 0
        %705 = vmatpush1.bf16.msra.mxu0 0
        %706 = vmatprep.subr.bf16.mxu0 0
        %707 = vmatpush1.bf16.msra.mxu0 0
        %708 = vmatprep.subr.bf16.mxu0 0
        %709 = vmatpush1.bf16.msra.mxu0 0
        %710 = vmatprep.subr.bf16.mxu0 0
        %711 = vmatpush1.bf16.msra.mxu0 0
        %712 = vmatprep.subr.bf16.mxu0 0
        %713 = vmatpush1.bf16.msra.mxu0 0
        %714 = vmatprep.subr.bf16.mxu0 0
        %715 = vmatpush1.bf16.msra.mxu0 0
        %716 = vmatprep.subr.bf16.mxu0 0
        %717 = vmatpush1.bf16.msra.mxu0 0
        %718 = vmatprep.subr.bf16.mxu0 0
        %719 = vmatpush1.bf16.msra.mxu0 0
        %720 = vmatprep.subr.bf16.mxu0 0
        %721 = vmatpush1.bf16.msra.mxu0 0
        %722 = vmatprep.subr.bf16.mxu0 0
        %723 = vmatpush1.bf16.msra.mxu0 0
        %724 = vmatprep.subr.bf16.mxu0 0
        %725 = vmatpush1.bf16.msra.mxu0 0
        %726 = vmatprep.mubr.bf16.mxu0 0
        %727 = vmatmul.mubr.bf16.gmra.mrb[0].mxu0 %v683
        %v728 = vpop.f32.mrb[0].mxu0
        %v729 = vadd.f32 0.0, %v728
        %v730 = vpop.f32.mrb[0].mxu0
        %v731 = vpop.f32.mrb[0].mxu0
        %v732 = vadd.f32 0.0, %v731
        %v733 = vpop.f32.mrb[0].mxu0
        %734 = vmatprep.mubr.bf16.mxu0 0
        %735 = vmatmul.mubr.bf16.gmra.mrb[0].mxu0 %v686
        %v736 = vpop.f32.mrb[0].mxu0
        %v737 = vadd.f32 0.0, %v736
        %v738 = vpop.f32.mrb[0].mxu0
        %v739 = vpop.f32.mrb[0].mxu0
        %v740 = vadd.f32 0.0, %v739
        %v741 = vpop.f32.mrb[0].mxu0
        %742 = vmatprep.mubr.bf16.mxu0 0
        %743 = vmatmul.mubr.bf16.gmra.mrb[0].mxu0 %v689
        %v744 = vpop.f32.mrb[0].mxu0
        %v745 = vadd.f32 0.0, %v744
        %v746 = vpop.f32.mrb[0].mxu0
        %v747 = vpop.f32.mrb[0].mxu0
        %v748 = vadd.f32 0.0, %v747
        %v749 = vpop.f32.mrb[0].mxu0
        %750 = vmatprep.mubr.bf16.mxu0 0
        %751 = vmatmul.mubr.bf16.gmra.mrb[0].mxu0 %v692
        %v752 = vpop.f32.mrb[0].mxu0
        %v753 = vadd.f32 0.0, %v752
        %v754 = vpop.f32.mrb[0].mxu0
        %v755 = vpop.f32.mrb[0].mxu0
        %v756 = vadd.f32 0.0, %v755
        %v757 = vpop.f32.mrb[0].mxu0
        %758 = vdwg.mxu0
        %v767 = vunpack.c.l.b16 %v604
        %v768 = vunpack.c.l.b16 %v605
        %v769 = vunpack.c.l.b16 %v606
        %v770 = vunpack.c.l.b16 %v607
        %v771 = vunpack.c.l.b16 %v608
        %v772 = vunpack.c.l.b16 %v609
        %v773 = vunpack.c.l.b16 %v610
        %v774 = vunpack.c.l.b16 %v611
        %v775 = vpack.c.b16 %v768, %v767
        %v776 = vpack.c.b16 %v770, %v769
        %v777 = vpack.c.b16 %v772, %v771
        %v778 = vpack.c.b16 %v774, %v773
        %v787 = vunpack.c.l.b16 %v612
        %v788 = vunpack.c.l.b16 %v613
        %v789 = vunpack.c.l.b16 %v614
        %v790 = vunpack.c.l.b16 %v615
        %v791 = vunpack.c.l.b16 %v616
        %v792 = vunpack.c.l.b16 %v617
        %v793 = vunpack.c.l.b16 %v618
        %v794 = vunpack.c.l.b16 %v619
        %v795 = vpack.c.b16 %v788, %v787
        %v796 = vpack.c.b16 %v790, %v789
        %v797 = vpack.c.b16 %v792, %v791
        %v798 = vpack.c.b16 %v794, %v793
        %v804 = vsel %vm681, %v775, 0
        %v807 = vsel %vm681, %v776, 0
        %v810 = vsel %vm681, %v777, 0
        %v813 = vsel %vm681, %v778, 0
        %815 = vmatprep.subr.bf16.mxu0 0
        %816 = vmatpush1.bf16.msra.mxu0 %v795
        %817 = vmatprep.subr.bf16.mxu0 0
        %818 = vmatpush1.bf16.msra.mxu0 %v796
        %819 = vmatprep.subr.bf16.mxu0 0
        %820 = vmatpush1.bf16.msra.mxu0 %v797
        %821 = vmatprep.subr.bf16.mxu0 0
        %822 = vmatpush1.bf16.msra.mxu0 %v798
        %823 = vmatprep.subr.bf16.mxu0 0
        %824 = vmatpush1.bf16.msra.mxu0 0
        %825 = vmatprep.subr.bf16.mxu0 0
        %826 = vmatpush1.bf16.msra.mxu0 0
        %827 = vmatprep.subr.bf16.mxu0 0
        %828 = vmatpush1.bf16.msra.mxu0 0
        %829 = vmatprep.subr.bf16.mxu0 0
        %830 = vmatpush1.bf16.msra.mxu0 0
        %831 = vmatprep.subr.bf16.mxu0 0
        %832 = vmatpush1.bf16.msra.mxu0 0
        %833 = vmatprep.subr.bf16.mxu0 0
        %834 = vmatpush1.bf16.msra.mxu0 0
        %835 = vmatprep.subr.bf16.mxu0 0
        %836 = vmatpush1.bf16.msra.mxu0 0
        %837 = vmatprep.subr.bf16.mxu0 0
        %838 = vmatpush1.bf16.msra.mxu0 0
        %839 = vmatprep.subr.bf16.mxu0 0
        %840 = vmatpush1.bf16.msra.mxu0 0
        %841 = vmatprep.subr.bf16.mxu0 0
        %842 = vmatpush1.bf16.msra.mxu0 0
        %843 = vmatprep.subr.bf16.mxu0 0
        %844 = vmatpush1.bf16.msra.mxu0 0
        %845 = vmatprep.subr.bf16.mxu0 0
        %846 = vmatpush1.bf16.msra.mxu0 0
        %847 = vmatprep.mubr.bf16.mxu0 0
        %848 = vmatmul.mubr.bf16.gmra.mrb[0].mxu0 %v804
        %v849 = vpop.f32.mrb[0].mxu0
        %v850 = vadd.f32 %v729, %v849
        %v851 = vpop.f32.mrb[0].mxu0
        %v852 = vpop.f32.mrb[0].mxu0
        %v853 = vadd.f32 %v732, %v852
        %v854 = vpop.f32.mrb[0].mxu0
        %855 = vmatprep.mubr.bf16.mxu0 0
        %856 = vmatmul.mubr.bf16.gmra.mrb[0].mxu0 %v807
        %v857 = vpop.f32.mrb[0].mxu0
        %v858 = vadd.f32 %v737, %v857
        %v859 = vpop.f32.mrb[0].mxu0
        %v860 = vpop.f32.mrb[0].mxu0
        %v861 = vadd.f32 %v740, %v860
        %v862 = vpop.f32.mrb[0].mxu0
        %863 = vmatprep.mubr.bf16.mxu0 0
        %864 = vmatmul.mubr.bf16.gmra.mrb[0].mxu0 %v810
        %v865 = vpop.f32.mrb[0].mxu0
        %v866 = vadd.f32 %v745, %v865
        %v867 = vpop.f32.mrb[0].mxu0
        %v868 = vpop.f32.mrb[0].mxu0
        %v869 = vadd.f32 %v748, %v868
        %v870 = vpop.f32.mrb[0].mxu0
        %871 = vmatprep.mubr.bf16.mxu0 0
        %872 = vmatmul.mubr.bf16.gmra.mrb[0].mxu0 %v813
        %v873 = vpop.f32.mrb[0].mxu0
        %v874 = vadd.f32 %v753, %v873
        %v875 = vpop.f32.mrb[0].mxu0
        %v876 = vpop.f32.mrb[0].mxu0
        %v877 = vadd.f32 %v756, %v876
        %v878 = vpop.f32.mrb[0].mxu0
        %879 = vdwg.mxu0
        %v880 = vld [vmem:[%s574] sm:$0xf]
        %v881 = vld [vmem:[%s574 + $0x4] sm:$0x1]
        %v882 = vld [vmem:[%s574 + $0x8] sm:$0xf]
        %v883 = vld [vmem:[%s574 + $0xc] sm:$0x1]
        %v884 = vld [vmem:[%s574 + $0x10] sm:$0xf]
        %v885 = vld [vmem:[%s574 + $0x14] sm:$0x1]
        %v886 = vld [vmem:[%s574 + $0x18] sm:$0xf]
        %v887 = vld [vmem:[%s574 + $0x1c] sm:$0x1]
        %v888 = vld [vmem:[%s574 + $0x20] sm:$0xf]
        %v889 = vld [vmem:[%s574 + $0x24] sm:$0x1]
        %v890 = vld [vmem:[%s574 + $0x28] sm:$0xf]
        %v891 = vld [vmem:[%s574 + $0x2c] sm:$0x1]
        %v892 = vld [vmem:[%s574 + $0x30] sm:$0xf]
        %v893 = vld [vmem:[%s574 + $0x34] sm:$0x1]
        %v894 = vld [vmem:[%s574 + $0x38] sm:$0xf]
        %v895 = vld [vmem:[%s574 + $0x3c] sm:$0x1]
        %vm896 = vsmask.f32 3328
        %vm897 = vsmask.f32 7440
        %vm898 = vmor %vm896, %vm897
        %v900 = vshrl.u32 %v880, 16
        %v902 = vrot.slane %v900, 4
        %v903 = vshll.u32 %v880, 16
        %v905 = vrot.slane %v903, 5
        %v906 = vor.u32 %v902, %v905
        %v907 = vrot.slane %v906, 4
        %v909 = vshll.u32 %v881, 16
        %v911 = vrot.slane %v909, 5
        %v912 = vsel %vm898, %v907, %v911
        %v914 = vshrl.u32 %v882, 16
        %v916 = vrot.slane %v914, 4
        %v917 = vshll.u32 %v882, 16
        %v919 = vrot.slane %v917, 5
        %v920 = vor.u32 %v916, %v919
        %v921 = vrot.slane %v920, 4
        %v923 = vshll.u32 %v883, 16
        %v925 = vrot.slane %v923, 5
        %v926 = vsel %vm898, %v921, %v925
        %v928 = vshrl.u32 %v884, 16
        %v930 = vrot.slane %v928, 4
        %v931 = vshll.u32 %v884, 16
        %v933 = vrot.slane %v931, 5
        %v934 = vor.u32 %v930, %v933
        %v935 = vrot.slane %v934, 4
        %v937 = vshll.u32 %v885, 16
        %v939 = vrot.slane %v937, 5
        %v940 = vsel %vm898, %v935, %v939
        %v942 = vshrl.u32 %v886, 16
        %v944 = vrot.slane %v942, 4
        %v945 = vshll.u32 %v886, 16
        %v947 = vrot.slane %v945, 5
        %v948 = vor.u32 %v944, %v947
        %v949 = vrot.slane %v948, 4
        %v951 = vshll.u32 %v887, 16
        %v953 = vrot.slane %v951, 5
        %v954 = vsel %vm898, %v949, %v953
        %v956 = vshrl.u32 %v888, 16
        %v958 = vrot.slane %v956, 4
        %v959 = vshll.u32 %v888, 16
        %v961 = vrot.slane %v959, 5
        %v962 = vor.u32 %v958, %v961
        %v963 = vrot.slane %v962, 4
        %v965 = vshll.u32 %v889, 16
        %v967 = vrot.slane %v965, 5
        %v968 = vsel %vm898, %v963, %v967
        %v970 = vshrl.u32 %v890, 16
        %v972 = vrot.slane %v970, 4
        %v973 = vshll.u32 %v890, 16
        %v975 = vrot.slane %v973, 5
        %v976 = vor.u32 %v972, %v975
        %v977 = vrot.slane %v976, 4
        %v979 = vshll.u32 %v891, 16
        %v981 = vrot.slane %v979, 5
        %v982 = vsel %vm898, %v977, %v981
        %v984 = vshrl.u32 %v892, 16
        %v986 = vrot.slane %v984, 4
        %v987 = vshll.u32 %v892, 16
        %v989 = vrot.slane %v987, 5
        %v990 = vor.u32 %v986, %v989
        %v991 = vrot.slane %v990, 4
        %v993 = vshll.u32 %v893, 16
        %v995 = vrot.slane %v993, 5
        %v996 = vsel %vm898, %v991, %v995
        %v998 = vshrl.u32 %v894, 16
        %v1000 = vrot.slane %v998, 4
        %v1001 = vshll.u32 %v894, 16
        %v1003 = vrot.slane %v1001, 5
        %v1004 = vor.u32 %v1000, %v1003
        %v1005 = vrot.slane %v1004, 4
        %v1007 = vshll.u32 %v895, 16
        %v1009 = vrot.slane %v1007, 5
        %v1010 = vsel %vm898, %v1005, %v1009
        %v1011 = vld [vmem:[%s1 + $0x40] sm:$0xf]
        %v1012 = vld [vmem:[%s1 + $0x44] sm:$0xf]
        %v1013 = vld [vmem:[%s1 + $0x48] sm:$0xf]
        %v1014 = vld [vmem:[%s1 + $0x4c] sm:$0xf]
        %v1015 = vld [vmem:[%s1 + $0x50] sm:$0xf]
        %v1016 = vld [vmem:[%s1 + $0x54] sm:$0xf]
        %v1017 = vld [vmem:[%s1 + $0x58] sm:$0xf]
        %v1018 = vld [vmem:[%s1 + $0x5c] sm:$0xf]
        %v1019 = vunpack.c.l.b16 %v912
        %v1020 = vunpack.c.l.b16 %v926
        %v1021 = vunpack.c.l.b16 %v940
        %v1022 = vunpack.c.l.b16 %v954
        %v1023 = vunpack.c.l.b16 %v968
        %v1024 = vunpack.c.l.b16 %v982
        %v1025 = vunpack.c.l.b16 %v996
        %v1026 = vunpack.c.l.b16 %v1010
        %v1027 = vpack.c.b16 %v1020, %v1019
        %v1028 = vpack.c.b16 %v1022, %v1021
        %v1029 = vpack.c.b16 %v1024, %v1023
        %v1030 = vpack.c.b16 %v1026, %v1025
        %v1039 = vunpack.c.l.b16 %v1011
        %v1040 = vunpack.c.l.b16 %v1012
        %v1041 = vunpack.c.l.b16 %v1013
        %v1042 = vunpack.c.l.b16 %v1014
        %v1043 = vunpack.c.l.b16 %v1015
        %v1044 = vunpack.c.l.b16 %v1016
        %v1045 = vunpack.c.l.b16 %v1017
        %v1046 = vunpack.c.l.b16 %v1018
        %v1047 = vpack.c.b16 %v1040, %v1039
        %v1048 = vpack.c.b16 %v1042, %v1041
        %v1049 = vpack.c.b16 %v1044, %v1043
        %v1050 = vpack.c.b16 %v1046, %v1045
        %v1056 = vsel %vm681, %v1027, 0
        %v1059 = vsel %vm681, %v1028, 0
        %v1062 = vsel %vm681, %v1029, 0
        %v1065 = vsel %vm681, %v1030, 0
        %1067 = vmatprep.subr.bf16.mxu0 0
        %1068 = vmatpush1.bf16.msra.mxu0 %v1047
        %1069 = vmatprep.subr.bf16.mxu0 0
        %1070 = vmatpush1.bf16.msra.mxu0 %v1048
        %1071 = vmatprep.subr.bf16.mxu0 0
        %1072 = vmatpush1.bf16.msra.mxu0 %v1049
        %1073 = vmatprep.subr.bf16.mxu0 0
        %1074 = vmatpush1.bf16.msra.mxu0 %v1050
        %1075 = vmatprep.subr.bf16.mxu0 0
        %1076 = vmatpush1.bf16.msra.mxu0 0
        %1077 = vmatprep.subr.bf16.mxu0 0
        %1078 = vmatpush1.bf16.msra.mxu0 0
        %1079 = vmatprep.subr.bf16.mxu0 0
        %1080 = vmatpush1.bf16.msra.mxu0 0
        %1081 = vmatprep.subr.bf16.mxu0 0
        %1082 = vmatpush1.bf16.msra.mxu0 0
        %1083 = vmatprep.subr.bf16.mxu0 0
        %1084 = vmatpush1.bf16.msra.mxu0 0
        %1085 = vmatprep.subr.bf16.mxu0 0
        %1086 = vmatpush1.bf16.msra.mxu0 0
        %1087 = vmatprep.subr.bf16.mxu0 0
        %1088 = vmatpush1.bf16.msra.mxu0 0
        %1089 = vmatprep.subr.bf16.mxu0 0
        %1090 = vmatpush1.bf16.msra.mxu0 0
        %1091 = vmatprep.subr.bf16.mxu0 0
        %1092 = vmatpush1.bf16.msra.mxu0 0
        %1093 = vmatprep.subr.bf16.mxu0 0
        %1094 = vmatpush1.bf16.msra.mxu0 0
        %1095 = vmatprep.subr.bf16.mxu0 0
        %1096 = vmatpush1.bf16.msra.mxu0 0
        %1097 = vmatprep.subr.bf16.mxu0 0
        %1098 = vmatpush1.bf16.msra.mxu0 0
        %1099 = vmatprep.mubr.bf16.mxu0 0
        %1100 = vmatmul.mubr.bf16.gmra.mrb[0].mxu0 %v1056
        %v1101 = vpop.f32.mrb[0].mxu0
        %v1102 = vadd.f32 0.0, %v1101
        %v1103 = vpop.f32.mrb[0].mxu0
        %v1104 = vpop.f32.mrb[0].mxu0
        %v1105 = vadd.f32 0.0, %v1104
        %v1106 = vpop.f32.mrb[0].mxu0
        %1107 = vmatprep.mubr.bf16.mxu0 0
        %1108 = vmatmul.mubr.bf16.gmra.mrb[0].mxu0 %v1059
        %v1109 = vpop.f32.mrb[0].mxu0
        %v1110 = vadd.f32 0.0, %v1109
        %v1111 = vpop.f32.mrb[0].mxu0
        %v1112 = vpop.f32.mrb[0].mxu0
        %v1113 = vadd.f32 0.0, %v1112
        %v1114 = vpop.f32.mrb[0].mxu0
        %1115 = vmatprep.mubr.bf16.mxu0 0
        %1116 = vmatmul.mubr.bf16.gmra.mrb[0].mxu0 %v1062
        %v1117 = vpop.f32.mrb[0].mxu0
        %v1118 = vadd.f32 0.0, %v1117
        %v1119 = vpop.f32.mrb[0].mxu0
        %v1120 = vpop.f32.mrb[0].mxu0
        %v1121 = vadd.f32 0.0, %v1120
        %v1122 = vpop.f32.mrb[0].mxu0
        %1123 = vmatprep.mubr.bf16.mxu0 0
        %1124 = vmatmul.mubr.bf16.gmra.mrb[0].mxu0 %v1065
        %v1125 = vpop.f32.mrb[0].mxu0
        %v1126 = vadd.f32 0.0, %v1125
        %v1127 = vpop.f32.mrb[0].mxu0
        %v1128 = vpop.f32.mrb[0].mxu0
        %v1129 = vadd.f32 0.0, %v1128
        %v1130 = vpop.f32.mrb[0].mxu0
        %1131 = vdwg.mxu0
        %v1132 = vadd.f32 %v850, %v1102
        %v1133 = vadd.f32 %v853, %v1105
        %v1134 = vadd.f32 %v858, %v1110
        %v1135 = vadd.f32 %v861, %v1113
        %v1136 = vadd.f32 %v866, %v1118
        %v1137 = vadd.f32 %v869, %v1121
        %v1138 = vadd.f32 %v874, %v1126
        %v1139 = vadd.f32 %v877, %v1129
        %s1140 = scalar_lea.vmem %s574, 144 [#allocation3]
        %v1141 = vld [vmem:[%s1140] sm:$0xf]
        %v1142 = vld [vmem:[%s1140 + $0x8] sm:$0xf]
        %v1143 = vld [vmem:[%s1140 + $0x10] sm:$0xf]
        %v1144 = vld [vmem:[%s1140 + $0x18] sm:$0xf]
        %v1145 = vld [vmem:[%s1140 + $0x20] sm:$0xf]
        %v1146 = vld [vmem:[%s1140 + $0x28] sm:$0xf]
        %v1147 = vld [vmem:[%s1140 + $0x30] sm:$0xf]
        %v1148 = vld [vmem:[%s1140 + $0x38] sm:$0xf]
        %v1149 = vld [vmem:[%s1 + $0x60] sm:$0xf]
        %v1150 = vld [vmem:[%s1 + $0x64] sm:$0xf]
        %v1151 = vld [vmem:[%s1 + $0x68] sm:$0xf]
        %v1152 = vld [vmem:[%s1 + $0x6c] sm:$0xf]
        %v1153 = vld [vmem:[%s1 + $0x70] sm:$0xf]
        %v1154 = vld [vmem:[%s1 + $0x74] sm:$0xf]
        %v1155 = vld [vmem:[%s1 + $0x78] sm:$0xf]
        %v1156 = vld [vmem:[%s1 + $0x7c] sm:$0xf]
        %v1165 = vunpack.c.l.b16 %v1141
        %v1166 = vunpack.c.l.b16 %v1142
        %v1167 = vunpack.c.l.b16 %v1143
        %v1168 = vunpack.c.l.b16 %v1144
        %v1169 = vunpack.c.l.b16 %v1145
        %v1170 = vunpack.c.l.b16 %v1146
        %v1171 = vunpack.c.l.b16 %v1147
        %v1172 = vunpack.c.l.b16 %v1148
        %v1173 = vpack.c.b16 %v1166, %v1165
        %v1174 = vpack.c.b16 %v1168, %v1167
        %v1175 = vpack.c.b16 %v1170, %v1169
        %v1176 = vpack.c.b16 %v1172, %v1171
        %v1185 = vunpack.c.l.b16 %v1149
        %v1186 = vunpack.c.l.b16 %v1150
        %v1187 = vunpack.c.l.b16 %v1151
        %v1188 = vunpack.c.l.b16 %v1152
        %v1189 = vunpack.c.l.b16 %v1153
        %v1190 = vunpack.c.l.b16 %v1154
        %v1191 = vunpack.c.l.b16 %v1155
        %v1192 = vunpack.c.l.b16 %v1156
        %v1193 = vpack.c.b16 %v1186, %v1185
        %v1194 = vpack.c.b16 %v1188, %v1187
        %v1195 = vpack.c.b16 %v1190, %v1189
        %v1196 = vpack.c.b16 %v1192, %v1191
        %v1202 = vsel %vm681, %v1173, 0
        %v1205 = vsel %vm681, %v1174, 0
        %v1208 = vsel %vm681, %v1175, 0
        %v1211 = vsel %vm681, %v1176, 0
        %1213 = vmatprep.subr.bf16.mxu0 0
        %1214 = vmatpush1.bf16.msra.mxu0 %v1193
        %1215 = vmatprep.subr.bf16.mxu0 0
        %1216 = vmatpush1.bf16.msra.mxu0 %v1194
        %1217 = vmatprep.subr.bf16.mxu0 0
        %1218 = vmatpush1.bf16.msra.mxu0 %v1195
        %1219 = vmatprep.subr.bf16.mxu0 0
        %1220 = vmatpush1.bf16.msra.mxu0 %v1196
        %1221 = vmatprep.subr.bf16.mxu0 0
        %1222 = vmatpush1.bf16.msra.mxu0 0
        %1223 = vmatprep.subr.bf16.mxu0 0
        %1224 = vmatpush1.bf16.msra.mxu0 0
        %1225 = vmatprep.subr.bf16.mxu0 0
        %1226 = vmatpush1.bf16.msra.mxu0 0
        %1227 = vmatprep.subr.bf16.mxu0 0
        %1228 = vmatpush1.bf16.msra.mxu0 0
        %1229 = vmatprep.subr.bf16.mxu0 0
        %1230 = vmatpush1.bf16.msra.mxu0 0
        %1231 = vmatprep.subr.bf16.mxu0 0
        %1232 = vmatpush1.bf16.msra.mxu0 0
        %1233 = vmatprep.subr.bf16.mxu0 0
        %1234 = vmatpush1.bf16.msra.mxu0 0
        %1235 = vmatprep.subr.bf16.mxu0 0
        %1236 = vmatpush1.bf16.msra.mxu0 0
        %1237 = vmatprep.subr.bf16.mxu0 0
        %1238 = vmatpush1.bf16.msra.mxu0 0
        %1239 = vmatprep.subr.bf16.mxu0 0
        %1240 = vmatpush1.bf16.msra.mxu0 0
        %1241 = vmatprep.subr.bf16.mxu0 0
        %1242 = vmatpush1.bf16.msra.mxu0 0
        %1243 = vmatprep.subr.bf16.mxu0 0
        %1244 = vmatpush1.bf16.msra.mxu0 0
        %1245 = vmatprep.mubr.bf16.mxu0 0
        %1246 = vmatmul.mubr.bf16.gmra.mrb[0].mxu0 %v1202
        %v1247 = vpop.f32.mrb[0].mxu0
        %v1248 = vadd.f32 0.0, %v1247
        %v1249 = vpop.f32.mrb[0].mxu0
        %v1250 = vpop.f32.mrb[0].mxu0
        %v1251 = vadd.f32 0.0, %v1250
        %v1252 = vpop.f32.mrb[0].mxu0
        %1253 = vmatprep.mubr.bf16.mxu0 0
        %1254 = vmatmul.mubr.bf16.gmra.mrb[0].mxu0 %v1205
        %v1255 = vpop.f32.mrb[0].mxu0
        %v1256 = vadd.f32 0.0, %v1255
        %v1257 = vpop.f32.mrb[0].mxu0
        %v1258 = vpop.f32.mrb[0].mxu0
        %v1259 = vadd.f32 0.0, %v1258
        %v1260 = vpop.f32.mrb[0].mxu0
        %1261 = vmatprep.mubr.bf16.mxu0 0
        %1262 = vmatmul.mubr.bf16.gmra.mrb[0].mxu0 %v1208
        %v1263 = vpop.f32.mrb[0].mxu0
        %v1264 = vadd.f32 0.0, %v1263
        %v1265 = vpop.f32.mrb[0].mxu0
        %v1266 = vpop.f32.mrb[0].mxu0
        %v1267 = vadd.f32 0.0, %v1266
        %v1268 = vpop.f32.mrb[0].mxu0
        %1269 = vmatprep.mubr.bf16.mxu0 0
        %1270 = vmatmul.mubr.bf16.gmra.mrb[0].mxu0 %v1211
        %v1271 = vpop.f32.mrb[0].mxu0
        %v1272 = vadd.f32 0.0, %v1271
        %v1273 = vpop.f32.mrb[0].mxu0
        %v1274 = vpop.f32.mrb[0].mxu0
        %v1275 = vadd.f32 0.0, %v1274
        %v1276 = vpop.f32.mrb[0].mxu0
        %1277 = vdwg.mxu0
        %v1278 = vadd.f32 %v1132, %v1248
        %v1279 = vadd.f32 %v1133, %v1251
        %v1280 = vadd.f32 %v1134, %v1256
        %v1281 = vadd.f32 %v1135, %v1259
        %v1282 = vadd.f32 %v1136, %v1264
        %v1283 = vadd.f32 %v1137, %v1267
        %v1284 = vadd.f32 %v1138, %v1272
        %v1285 = vadd.f32 %v1139, %v1275
        %s1286 = scalar_lea.vmem %s574, 216 [#allocation3]
        %v1287 = vld [vmem:[%s1286] sm:$0xf]
        %v1288 = vld [vmem:[%s1286 + $0x8] sm:$0xf]
        %v1289 = vld [vmem:[%s1286 + $0x10] sm:$0xf]
        %v1290 = vld [vmem:[%s1286 + $0x18] sm:$0xf]
        %v1291 = vld [vmem:[%s1286 + $0x20] sm:$0xf]
        %v1292 = vld [vmem:[%s1286 + $0x28] sm:$0xf]
        %v1293 = vld [vmem:[%s1286 + $0x30] sm:$0xf]
        %v1294 = vld [vmem:[%s1286 + $0x38] sm:$0xf]
        %v1295 = vld [vmem:[%s1 + $0x80] sm:$0xf]
        %v1296 = vld [vmem:[%s1 + $0x84] sm:$0xf]
        %v1297 = vld [vmem:[%s1 + $0x88] sm:$0xf]
        %v1298 = vld [vmem:[%s1 + $0x8c] sm:$0xf]
        %v1299 = vld [vmem:[%s1 + $0x90] sm:$0xf]
        %v1300 = vld [vmem:[%s1 + $0x94] sm:$0xf]
        %v1301 = vld [vmem:[%s1 + $0x98] sm:$0xf]
        %v1302 = vld [vmem:[%s1 + $0x9c] sm:$0xf]
        %v1311 = vunpack.c.l.b16 %v1287
        %v1312 = vunpack.c.l.b16 %v1288
        %v1313 = vunpack.c.l.b16 %v1289
        %v1314 = vunpack.c.l.b16 %v1290
        %v1315 = vunpack.c.l.b16 %v1291
        %v1316 = vunpack.c.l.b16 %v1292
        %v1317 = vunpack.c.l.b16 %v1293
        %v1318 = vunpack.c.l.b16 %v1294
        %v1319 = vpack.c.b16 %v1312, %v1311
        %v1320 = vpack.c.b16 %v1314, %v1313
        %v1321 = vpack.c.b16 %v1316, %v1315
        %v1322 = vpack.c.b16 %v1318, %v1317
        %v1331 = vunpack.c.l.b16 %v1295
        %v1332 = vunpack.c.l.b16 %v1296
        %v1333 = vunpack.c.l.b16 %v1297
        %v1334 = vunpack.c.l.b16 %v1298
        %v1335 = vunpack.c.l.b16 %v1299
        %v1336 = vunpack.c.l.b16 %v1300
        %v1337 = vunpack.c.l.b16 %v1301
        %v1338 = vunpack.c.l.b16 %v1302
        %v1339 = vpack.c.b16 %v1332, %v1331
        %v1340 = vpack.c.b16 %v1334, %v1333
        %v1341 = vpack.c.b16 %v1336, %v1335
        %v1342 = vpack.c.b16 %v1338, %v1337
        %v1348 = vsel %vm681, %v1319, 0
        %v1351 = vsel %vm681, %v1320, 0
        %v1354 = vsel %vm681, %v1321, 0
        %v1357 = vsel %vm681, %v1322, 0
        %1359 = vmatprep.subr.bf16.mxu0 0
        %1360 = vmatpush1.bf16.msra.mxu0 %v1339
        %1361 = vmatprep.subr.bf16.mxu0 0
        %1362 = vmatpush1.bf16.msra.mxu0 %v1340
        %1363 = vmatprep.subr.bf16.mxu0 0
        %1364 = vmatpush1.bf16.msra.mxu0 %v1341
        %1365 = vmatprep.subr.bf16.mxu0 0
        %1366 = vmatpush1.bf16.msra.mxu0 %v1342
        %1367 = vmatprep.subr.bf16.mxu0 0
        %1368 = vmatpush1.bf16.msra.mxu0 0
        %1369 = vmatprep.subr.bf16.mxu0 0
        %1370 = vmatpush1.bf16.msra.mxu0 0
        %1371 = vmatprep.subr.bf16.mxu0 0
        %1372 = vmatpush1.bf16.msra.mxu0 0
        %1373 = vmatprep.subr.bf16.mxu0 0
        %1374 = vmatpush1.bf16.msra.mxu0 0
        %1375 = vmatprep.subr.bf16.mxu0 0
        %1376 = vmatpush1.bf16.msra.mxu0 0
        %1377 = vmatprep.subr.bf16.mxu0 0
        %1378 = vmatpush1.bf16.msra.mxu0 0
        %1379 = vmatprep.subr.bf16.mxu0 0
        %1380 = vmatpush1.bf16.msra.mxu0 0
        %1381 = vmatprep.subr.bf16.mxu0 0
        %1382 = vmatpush1.bf16.msra.mxu0 0
        %1383 = vmatprep.subr.bf16.mxu0 0
        %1384 = vmatpush1.bf16.msra.mxu0 0
        %1385 = vmatprep.subr.bf16.mxu0 0
        %1386 = vmatpush1.bf16.msra.mxu0 0
        %1387 = vmatprep.subr.bf16.mxu0 0
        %1388 = vmatpush1.bf16.msra.mxu0 0
        %1389 = vmatprep.subr.bf16.mxu0 0
        %1390 = vmatpush1.bf16.msra.mxu0 0
        %1391 = vmatprep.mubr.bf16.mxu0 0
        %1392 = vmatmul.mubr.bf16.gmra.mrb[0].mxu0 %v1348
        %v1393 = vpop.f32.mrb[0].mxu0
        %v1394 = vadd.f32 0.0, %v1393
        %v1395 = vpop.f32.mrb[0].mxu0
        %v1396 = vpop.f32.mrb[0].mxu0
        %v1397 = vadd.f32 0.0, %v1396
        %v1398 = vpop.f32.mrb[0].mxu0
        %1399 = vmatprep.mubr.bf16.mxu0 0
        %1400 = vmatmul.mubr.bf16.gmra.mrb[0].mxu0 %v1351
        %v1401 = vpop.f32.mrb[0].mxu0
        %v1402 = vadd.f32 0.0, %v1401
        %v1403 = vpop.f32.mrb[0].mxu0
        %v1404 = vpop.f32.mrb[0].mxu0
        %v1405 = vadd.f32 0.0, %v1404
        %v1406 = vpop.f32.mrb[0].mxu0
        %1407 = vmatprep.mubr.bf16.mxu0 0
        %1408 = vmatmul.mubr.bf16.gmra.mrb[0].mxu0 %v1354
        %v1409 = vpop.f32.mrb[0].mxu0
        %v1410 = vadd.f32 0.0, %v1409
        %v1411 = vpop.f32.mrb[0].mxu0
        %v1412 = vpop.f32.mrb[0].mxu0
        %v1413 = vadd.f32 0.0, %v1412
        %v1414 = vpop.f32.mrb[0].mxu0
        %1415 = vmatprep.mubr.bf16.mxu0 0
        %1416 = vmatmul.mubr.bf16.gmra.mrb[0].mxu0 %v1357
        %v1417 = vpop.f32.mrb[0].mxu0
        %v1418 = vadd.f32 0.0, %v1417
        %v1419 = vpop.f32.mrb[0].mxu0
        %v1420 = vpop.f32.mrb[0].mxu0
        %v1421 = vadd.f32 0.0, %v1420
        %v1422 = vpop.f32.mrb[0].mxu0
        %1423 = vdwg.mxu0
        %v1424 = vadd.f32 %v1278, %v1394
        %v1425 = vadd.f32 %v1279, %v1397
        %v1426 = vadd.f32 %v1280, %v1402
        %v1427 = vadd.f32 %v1281, %v1405
        %v1428 = vadd.f32 %v1282, %v1410
        %v1429 = vadd.f32 %v1283, %v1413
        %v1430 = vadd.f32 %v1284, %v1418
        %v1431 = vadd.f32 %v1285, %v1421
        %v1432 = vld [vmem:[%s1140] sm:$0xf]
        %v1433 = vld [vmem:[%s1140 + $0x4] sm:$0x1]
        %v1434 = vld [vmem:[%s1140 + $0x8] sm:$0xf]
        %v1435 = vld [vmem:[%s1140 + $0xc] sm:$0x1]
        %v1436 = vld [vmem:[%s1140 + $0x10] sm:$0xf]
        %v1437 = vld [vmem:[%s1140 + $0x14] sm:$0x1]
        %v1438 = vld [vmem:[%s1140 + $0x18] sm:$0xf]
        %v1439 = vld [vmem:[%s1140 + $0x1c] sm:$0x1]
        %v1440 = vld [vmem:[%s1140 + $0x20] sm:$0xf]
        %v1441 = vld [vmem:[%s1140 + $0x24] sm:$0x1]
        %v1442 = vld [vmem:[%s1140 + $0x28] sm:$0xf]
        %v1443 = vld [vmem:[%s1140 + $0x2c] sm:$0x1]
        %v1444 = vld [vmem:[%s1140 + $0x30] sm:$0xf]
        %v1445 = vld [vmem:[%s1140 + $0x34] sm:$0x1]
        %v1446 = vld [vmem:[%s1140 + $0x38] sm:$0xf]
        %v1447 = vld [vmem:[%s1140 + $0x3c] sm:$0x1]
        %v1449 = vshrl.u32 %v1432, 16
        %v1451 = vrot.slane %v1449, 4
        %v1452 = vshll.u32 %v1432, 16
        %v1454 = vrot.slane %v1452, 5
        %v1455 = vor.u32 %v1451, %v1454
        %v1456 = vrot.slane %v1455, 4
        %v1458 = vshll.u32 %v1433, 16
        %v1460 = vrot.slane %v1458, 5
        %v1461 = vsel %vm898, %v1456, %v1460
        %v1463 = vshrl.u32 %v1434, 16
        %v1465 = vrot.slane %v1463, 4
        %v1466 = vshll.u32 %v1434, 16
        %v1468 = vrot.slane %v1466, 5
        %v1469 = vor.u32 %v1465, %v1468
        %v1470 = vrot.slane %v1469, 4
        %v1472 = vshll.u32 %v1435, 16
        %v1474 = vrot.slane %v1472, 5
        %v1475 = vsel %vm898, %v1470, %v1474
        %v1477 = vshrl.u32 %v1436, 16
        %v1479 = vrot.slane %v1477, 4
        %v1480 = vshll.u32 %v1436, 16
        %v1482 = vrot.slane %v1480, 5
        %v1483 = vor.u32 %v1479, %v1482
        %v1484 = vrot.slane %v1483, 4
        %v1486 = vshll.u32 %v1437, 16
        %v1488 = vrot.slane %v1486, 5
        %v1489 = vsel %vm898, %v1484, %v1488
        %v1491 = vshrl.u32 %v1438, 16
        %v1493 = vrot.slane %v1491, 4
        %v1494 = vshll.u32 %v1438, 16
        %v1496 = vrot.slane %v1494, 5
        %v1497 = vor.u32 %v1493, %v1496
        %v1498 = vrot.slane %v1497, 4
        %v1500 = vshll.u32 %v1439, 16
        %v1502 = vrot.slane %v1500, 5
        %v1503 = vsel %vm898, %v1498, %v1502
        %v1505 = vshrl.u32 %v1440, 16
        %v1507 = vrot.slane %v1505, 4
        %v1508 = vshll.u32 %v1440, 16
        %v1510 = vrot.slane %v1508, 5
        %v1511 = vor.u32 %v1507, %v1510
        %v1512 = vrot.slane %v1511, 4
        %v1514 = vshll.u32 %v1441, 16
        %v1516 = vrot.slane %v1514, 5
        %v1517 = vsel %vm898, %v1512, %v1516
        %v1519 = vshrl.u32 %v1442, 16
        %v1521 = vrot.slane %v1519, 4
        %v1522 = vshll.u32 %v1442, 16
        %v1524 = vrot.slane %v1522, 5
        %v1525 = vor.u32 %v1521, %v1524
        %v1526 = vrot.slane %v1525, 4
        %v1528 = vshll.u32 %v1443, 16
        %v1530 = vrot.slane %v1528, 5
        %v1531 = vsel %vm898, %v1526, %v1530
        %v1533 = vshrl.u32 %v1444, 16
        %v1535 = vrot.slane %v1533, 4
        %v1536 = vshll.u32 %v1444, 16
        %v1538 = vrot.slane %v1536, 5
        %v1539 = vor.u32 %v1535, %v1538
        %v1540 = vrot.slane %v1539, 4
        %v1542 = vshll.u32 %v1445, 16
        %v1544 = vrot.slane %v1542, 5
        %v1545 = vsel %vm898, %v1540, %v1544
        %v1547 = vshrl.u32 %v1446, 16
        %v1549 = vrot.slane %v1547, 4
        %v1550 = vshll.u32 %v1446, 16
        %v1552 = vrot.slane %v1550, 5
        %v1553 = vor.u32 %v1549, %v1552
        %v1554 = vrot.slane %v1553, 4
        %v1556 = vshll.u32 %v1447, 16
        %v1558 = vrot.slane %v1556, 5
        %v1559 = vsel %vm898, %v1554, %v1558
        %v1560 = vld [vmem:[%s1 + $0xa0] sm:$0xf]
        %v1561 = vld [vmem:[%s1 + $0xa4] sm:$0xf]
        %v1562 = vld [vmem:[%s1 + $0xa8] sm:$0xf]
        %v1563 = vld [vmem:[%s1 + $0xac] sm:$0xf]
        %v1564 = vld [vmem:[%s1 + $0xb0] sm:$0xf]
        %v1565 = vld [vmem:[%s1 + $0xb4] sm:$0xf]
        %v1566 = vld [vmem:[%s1 + $0xb8] sm:$0xf]
        %v1567 = vld [vmem:[%s1 + $0xbc] sm:$0xf]
        %v1568 = vunpack.c.l.b16 %v1461
        %v1569 = vunpack.c.l.b16 %v1475
        %v1570 = vunpack.c.l.b16 %v1489
        %v1571 = vunpack.c.l.b16 %v1503
        %v1572 = vunpack.c.l.b16 %v1517
        %v1573 = vunpack.c.l.b16 %v1531
        %v1574 = vunpack.c.l.b16 %v1545
        %v1575 = vunpack.c.l.b16 %v1559
        %v1576 = vpack.c.b16 %v1569, %v1568
        %v1577 = vpack.c.b16 %v1571, %v1570
        %v1578 = vpack.c.b16 %v1573, %v1572
        %v1579 = vpack.c.b16 %v1575, %v1574
        %v1588 = vunpack.c.l.b16 %v1560
        %v1589 = vunpack.c.l.b16 %v1561
        %v1590 = vunpack.c.l.b16 %v1562
        %v1591 = vunpack.c.l.b16 %v1563
        %v1592 = vunpack.c.l.b16 %v1564
        %v1593 = vunpack.c.l.b16 %v1565
        %v1594 = vunpack.c.l.b16 %v1566
        %v1595 = vunpack.c.l.b16 %v1567
        %v1596 = vpack.c.b16 %v1589, %v1588
        %v1597 = vpack.c.b16 %v1591, %v1590
        %v1598 = vpack.c.b16 %v1593, %v1592
        %v1599 = vpack.c.b16 %v1595, %v1594
        %v1605 = vsel %vm681, %v1576, 0
        %v1608 = vsel %vm681, %v1577, 0
        %v1611 = vsel %vm681, %v1578, 0
        %v1614 = vsel %vm681, %v1579, 0
        %1616 = vmatprep.subr.bf16.mxu0 0
        %1617 = vmatpush1.bf16.msra.mxu0 %v1596
        %1618 = vmatprep.subr.bf16.mxu0 0
        %1619 = vmatpush1.bf16.msra.mxu0 %v1597
        %1620 = vmatprep.subr.bf16.mxu0 0
        %1621 = vmatpush1.bf16.msra.mxu0 %v1598
        %1622 = vmatprep.subr.bf16.mxu0 0
        %1623 = vmatpush1.bf16.msra.mxu0 %v1599
        %1624 = vmatprep.subr.bf16.mxu0 0
        %1625 = vmatpush1.bf16.msra.mxu0 0
        %1626 = vmatprep.subr.bf16.mxu0 0
        %1627 = vmatpush1.bf16.msra.mxu0 0
        %1628 = vmatprep.subr.bf16.mxu0 0
        %1629 = vmatpush1.bf16.msra.mxu0 0
        %1630 = vmatprep.subr.bf16.mxu0 0
        %1631 = vmatpush1.bf16.msra.mxu0 0
        %1632 = vmatprep.subr.bf16.mxu0 0
        %1633 = vmatpush1.bf16.msra.mxu0 0
        %1634 = vmatprep.subr.bf16.mxu0 0
        %1635 = vmatpush1.bf16.msra.mxu0 0
        %1636 = vmatprep.subr.bf16.mxu0 0
        %1637 = vmatpush1.bf16.msra.mxu0 0
        %1638 = vmatprep.subr.bf16.mxu0 0
        %1639 = vmatpush1.bf16.msra.mxu0 0
        %1640 = vmatprep.subr.bf16.mxu0 0
        %1641 = vmatpush1.bf16.msra.mxu0 0
        %1642 = vmatprep.subr.bf16.mxu0 0
        %1643 = vmatpush1.bf16.msra.mxu0 0
        %1644 = vmatprep.subr.bf16.mxu0 0
        %1645 = vmatpush1.bf16.msra.mxu0 0
        %1646 = vmatprep.subr.bf16.mxu0 0
        %1647 = vmatpush1.bf16.msra.mxu0 0
        %1648 = vmatprep.mubr.bf16.mxu0 0
        %1649 = vmatmul.mubr.bf16.gmra.mrb[0].mxu0 %v1605
        %v1650 = vpop.f32.mrb[0].mxu0
        %v1651 = vadd.f32 0.0, %v1650
        %v1652 = vpop.f32.mrb[0].mxu0
        %v1653 = vpop.f32.mrb[0].mxu0
        %v1654 = vadd.f32 0.0, %v1653
        %v1655 = vpop.f32.mrb[0].mxu0
        %1656 = vmatprep.mubr.bf16.mxu0 0
        %1657 = vmatmul.mubr.bf16.gmra.mrb[0].mxu0 %v1608
        %v1658 = vpop.f32.mrb[0].mxu0
        %v1659 = vadd.f32 0.0, %v1658
        %v1660 = vpop.f32.mrb[0].mxu0
        %v1661 = vpop.f32.mrb[0].mxu0
        %v1662 = vadd.f32 0.0, %v1661
        %v1663 = vpop.f32.mrb[0].mxu0
        %1664 = vmatprep.mubr.bf16.mxu0 0
        %1665 = vmatmul.mubr.bf16.gmra.mrb[0].mxu0 %v1611
        %v1666 = vpop.f32.mrb[0].mxu0
        %v1667 = vadd.f32 0.0, %v1666
        %v1668 = vpop.f32.mrb[0].mxu0
        %v1669 = vpop.f32.mrb[0].mxu0
        %v1670 = vadd.f32 0.0, %v1669
        %v1671 = vpop.f32.mrb[0].mxu0
        %1672 = vmatprep.mubr.bf16.mxu0 0
        %1673 = vmatmul.mubr.bf16.gmra.mrb[0].mxu0 %v1614
        %v1674 = vpop.f32.mrb[0].mxu0
        %v1675 = vadd.f32 0.0, %v1674
        %v1676 = vpop.f32.mrb[0].mxu0
        %v1677 = vpop.f32.mrb[0].mxu0
        %v1678 = vadd.f32 0.0, %v1677
        %v1679 = vpop.f32.mrb[0].mxu0
        %1680 = vdwg.mxu0
        %v1681 = vadd.f32 %v1424, %v1651
        %v1682 = vadd.f32 %v1425, %v1654
        %v1683 = vadd.f32 %v1426, %v1659
        %v1684 = vadd.f32 %v1427, %v1662
        %v1685 = vadd.f32 %v1428, %v1667
        %v1686 = vadd.f32 %v1429, %v1670
        %v1687 = vadd.f32 %v1430, %v1675
        %v1688 = vadd.f32 %v1431, %v1678
        %s1689 = scalar_lea.vmem %s574, 8 [#allocation3]
        %v1690 = vld [vmem:[%s1689] sm:$0xf]
        %v1691 = vld [vmem:[%s1689 + $0x8] sm:$0xf]
        %v1692 = vld [vmem:[%s1689 + $0x10] sm:$0xf]
        %v1693 = vld [vmem:[%s1689 + $0x18] sm:$0xf]
        %v1694 = vld [vmem:[%s1689 + $0x20] sm:$0xf]
        %v1695 = vld [vmem:[%s1689 + $0x28] sm:$0xf]
        %v1696 = vld [vmem:[%s1689 + $0x30] sm:$0xf]
        %v1697 = vld [vmem:[%s1689 + $0x38] sm:$0xf]
        %v1698 = vld [vmem:[%s1 + $0xc0] sm:$0xf]
        %v1699 = vld [vmem:[%s1 + $0xc4] sm:$0xf]
        %v1700 = vld [vmem:[%s1 + $0xc8] sm:$0xf]
        %v1701 = vld [vmem:[%s1 + $0xcc] sm:$0xf]
        %v1702 = vld [vmem:[%s1 + $0xd0] sm:$0xf]
        %v1703 = vld [vmem:[%s1 + $0xd4] sm:$0xf]
        %v1704 = vld [vmem:[%s1 + $0xd8] sm:$0xf]
        %v1705 = vld [vmem:[%s1 + $0xdc] sm:$0xf]
        %v1714 = vunpack.c.l.b16 %v1690
        %v1715 = vunpack.c.l.b16 %v1691
        %v1716 = vunpack.c.l.b16 %v1692
        %v1717 = vunpack.c.l.b16 %v1693
        %v1718 = vunpack.c.l.b16 %v1694
        %v1719 = vunpack.c.l.b16 %v1695
        %v1720 = vunpack.c.l.b16 %v1696
        %v1721 = vunpack.c.l.b16 %v1697
        %v1722 = vpack.c.b16 %v1715, %v1714
        %v1723 = vpack.c.b16 %v1717, %v1716
        %v1724 = vpack.c.b16 %v1719, %v1718
        %v1725 = vpack.c.b16 %v1721, %v1720
        %v1734 = vunpack.c.l.b16 %v1698
        %v1735 = vunpack.c.l.b16 %v1699
        %v1736 = vunpack.c.l.b16 %v1700
        %v1737 = vunpack.c.l.b16 %v1701
        %v1738 = vunpack.c.l.b16 %v1702
        %v1739 = vunpack.c.l.b16 %v1703
        %v1740 = vunpack.c.l.b16 %v1704
        %v1741 = vunpack.c.l.b16 %v1705
        %v1742 = vpack.c.b16 %v1735, %v1734
        %v1743 = vpack.c.b16 %v1737, %v1736
        %v1744 = vpack.c.b16 %v1739, %v1738
        %v1745 = vpack.c.b16 %v1741, %v1740
        %v1751 = vsel %vm681, %v1722, 0
        %v1754 = vsel %vm681, %v1723, 0
        %v1757 = vsel %vm681, %v1724, 0
        %v1760 = vsel %vm681, %v1725, 0
        %1762 = vmatprep.subr.bf16.mxu0 0
        %1763 = vmatpush1.bf16.msra.mxu0 %v1742
        %1764 = vmatprep.subr.bf16.mxu0 0
        %1765 = vmatpush1.bf16.msra.mxu0 %v1743
        %1766 = vmatprep.subr.bf16.mxu0 0
        %1767 = vmatpush1.bf16.msra.mxu0 %v1744
        %1768 = vmatprep.subr.bf16.mxu0 0
        %1769 = vmatpush1.bf16.msra.mxu0 %v1745
        %1770 = vmatprep.subr.bf16.mxu0 0
        %1771 = vmatpush1.bf16.msra.mxu0 0
        %1772 = vmatprep.subr.bf16.mxu0 0
        %1773 = vmatpush1.bf16.msra.mxu0 0
        %1774 = vmatprep.subr.bf16.mxu0 0
        %1775 = vmatpush1.bf16.msra.mxu0 0
        %1776 = vmatprep.subr.bf16.mxu0 0
        %1777 = vmatpush1.bf16.msra.mxu0 0
        %1778 = vmatprep.subr.bf16.mxu0 0
        %1779 = vmatpush1.bf16.msra.mxu0 0
        %1780 = vmatprep.subr.bf16.mxu0 0
        %1781 = vmatpush1.bf16.msra.mxu0 0
        %1782 = vmatprep.subr.bf16.mxu0 0
        %1783 = vmatpush1.bf16.msra.mxu0 0
        %1784 = vmatprep.subr.bf16.mxu0 0
        %1785 = vmatpush1.bf16.msra.mxu0 0
        %1786 = vmatprep.subr.bf16.mxu0 0
        %1787 = vmatpush1.bf16.msra.mxu0 0
        %1788 = vmatprep.subr.bf16.mxu0 0
        %1789 = vmatpush1.bf16.msra.mxu0 0
        %1790 = vmatprep.subr.bf16.mxu0 0
        %1791 = vmatpush1.bf16.msra.mxu0 0
        %1792 = vmatprep.subr.bf16.mxu0 0
        %1793 = vmatpush1.bf16.msra.mxu0 0
        %1794 = vmatprep.mubr.bf16.mxu0 0
        %1795 = vmatmul.mubr.bf16.gmra.mrb[0].mxu0 %v1751
        %v1796 = vpop.f32.mrb[0].mxu0
        %v1797 = vadd.f32 0.0, %v1796
        %v1798 = vpop.f32.mrb[0].mxu0
        %v1799 = vpop.f32.mrb[0].mxu0
        %v1800 = vadd.f32 0.0, %v1799
        %v1801 = vpop.f32.mrb[0].mxu0
        %1802 = vmatprep.mubr.bf16.mxu0 0
        %1803 = vmatmul.mubr.bf16.gmra.mrb[0].mxu0 %v1754
        %v1804 = vpop.f32.mrb[0].mxu0
        %v1805 = vadd.f32 0.0, %v1804
        %v1806 = vpop.f32.mrb[0].mxu0
        %v1807 = vpop.f32.mrb[0].mxu0
        %v1808 = vadd.f32 0.0, %v1807
        %v1809 = vpop.f32.mrb[0].mxu0
        %1810 = vmatprep.mubr.bf16.mxu0 0
        %1811 = vmatmul.mubr.bf16.gmra.mrb[0].mxu0 %v1757
        %v1812 = vpop.f32.mrb[0].mxu0
        %v1813 = vadd.f32 0.0, %v1812
        %v1814 = vpop.f32.mrb[0].mxu0
        %v1815 = vpop.f32.mrb[0].mxu0
        %v1816 = vadd.f32 0.0, %v1815
        %v1817 = vpop.f32.mrb[0].mxu0
        %1818 = vmatprep.mubr.bf16.mxu0 0
        %1819 = vmatmul.mubr.bf16.gmra.mrb[0].mxu0 %v1760
        %v1820 = vpop.f32.mrb[0].mxu0
        %v1821 = vadd.f32 0.0, %v1820
        %v1822 = vpop.f32.mrb[0].mxu0
        %v1823 = vpop.f32.mrb[0].mxu0
        %v1824 = vadd.f32 0.0, %v1823
        %v1825 = vpop.f32.mrb[0].mxu0
        %1826 = vdwg.mxu0
        %v1827 = vadd.f32 %v1681, %v1797
        %v1828 = vadd.f32 %v1682, %v1800
        %v1829 = vadd.f32 %v1683, %v1805
        %v1830 = vadd.f32 %v1684, %v1808
        %v1831 = vadd.f32 %v1685, %v1813
        %v1832 = vadd.f32 %v1686, %v1816
        %v1833 = vadd.f32 %v1687, %v1821
        %v1834 = vadd.f32 %v1688, %v1824
        %s1835 = scalar_lea.vmem %s574, 80 [#allocation3]
        %v1836 = vld [vmem:[%s1835] sm:$0xf]
        %v1837 = vld [vmem:[%s1835 + $0x8] sm:$0xf]
        %v1838 = vld [vmem:[%s1835 + $0x10] sm:$0xf]
        %v1839 = vld [vmem:[%s1835 + $0x18] sm:$0xf]
        %v1840 = vld [vmem:[%s1835 + $0x20] sm:$0xf]
        %v1841 = vld [vmem:[%s1835 + $0x28] sm:$0xf]
        %v1842 = vld [vmem:[%s1835 + $0x30] sm:$0xf]
        %v1843 = vld [vmem:[%s1835 + $0x38] sm:$0xf]
        %v1844 = vld [vmem:[%s1 + $0xe0] sm:$0xf]
        %v1845 = vld [vmem:[%s1 + $0xe4] sm:$0xf]
        %v1846 = vld [vmem:[%s1 + $0xe8] sm:$0xf]
        %v1847 = vld [vmem:[%s1 + $0xec] sm:$0xf]
        %v1848 = vld [vmem:[%s1 + $0xf0] sm:$0xf]
        %v1849 = vld [vmem:[%s1 + $0xf4] sm:$0xf]
        %v1850 = vld [vmem:[%s1 + $0xf8] sm:$0xf]
        %v1851 = vld [vmem:[%s1 + $0xfc] sm:$0xf]
        %v1860 = vunpack.c.l.b16 %v1836
        %v1861 = vunpack.c.l.b16 %v1837
        %v1862 = vunpack.c.l.b16 %v1838
        %v1863 = vunpack.c.l.b16 %v1839
        %v1864 = vunpack.c.l.b16 %v1840
        %v1865 = vunpack.c.l.b16 %v1841
        %v1866 = vunpack.c.l.b16 %v1842
        %v1867 = vunpack.c.l.b16 %v1843
        %v1868 = vpack.c.b16 %v1861, %v1860
        %v1869 = vpack.c.b16 %v1863, %v1862
        %v1870 = vpack.c.b16 %v1865, %v1864
        %v1871 = vpack.c.b16 %v1867, %v1866
        %v1880 = vunpack.c.l.b16 %v1844
        %v1881 = vunpack.c.l.b16 %v1845
        %v1882 = vunpack.c.l.b16 %v1846
        %v1883 = vunpack.c.l.b16 %v1847
        %v1884 = vunpack.c.l.b16 %v1848
        %v1885 = vunpack.c.l.b16 %v1849
        %v1886 = vunpack.c.l.b16 %v1850
        %v1887 = vunpack.c.l.b16 %v1851
        %v1888 = vpack.c.b16 %v1881, %v1880
        %v1889 = vpack.c.b16 %v1883, %v1882
        %v1890 = vpack.c.b16 %v1885, %v1884
        %v1891 = vpack.c.b16 %v1887, %v1886
        %v1897 = vsel %vm681, %v1868, 0
        %v1900 = vsel %vm681, %v1869, 0
        %v1903 = vsel %vm681, %v1870, 0
        %v1906 = vsel %vm681, %v1871, 0
        %1908 = vmatprep.subr.bf16.mxu0 0
        %1909 = vmatpush1.bf16.msra.mxu0 %v1888
        %1910 = vmatprep.subr.bf16.mxu0 0
        %1911 = vmatpush1.bf16.msra.mxu0 %v1889
        %1912 = vmatprep.subr.bf16.mxu0 0
        %1913 = vmatpush1.bf16.msra.mxu0 %v1890
        %1914 = vmatprep.subr.bf16.mxu0 0
        %1915 = vmatpush1.bf16.msra.mxu0 %v1891
        %1916 = vmatprep.subr.bf16.mxu0 0
        %1917 = vmatpush1.bf16.msra.mxu0 0
        %1918 = vmatprep.subr.bf16.mxu0 0
        %1919 = vmatpush1.bf16.msra.mxu0 0
        %1920 = vmatprep.subr.bf16.mxu0 0
        %1921 = vmatpush1.bf16.msra.mxu0 0
        %1922 = vmatprep.subr.bf16.mxu0 0
        %1923 = vmatpush1.bf16.msra.mxu0 0
        %1924 = vmatprep.subr.bf16.mxu0 0
        %1925 = vmatpush1.bf16.msra.mxu0 0
        %1926 = vmatprep.subr.bf16.mxu0 0
        %1927 = vmatpush1.bf16.msra.mxu0 0
        %1928 = vmatprep.subr.bf16.mxu0 0
        %1929 = vmatpush1.bf16.msra.mxu0 0
        %1930 = vmatprep.subr.bf16.mxu0 0
        %1931 = vmatpush1.bf16.msra.mxu0 0
        %1932 = vmatprep.subr.bf16.mxu0 0
        %1933 = vmatpush1.bf16.msra.mxu0 0
        %1934 = vmatprep.subr.bf16.mxu0 0
        %1935 = vmatpush1.bf16.msra.mxu0 0
        %1936 = vmatprep.subr.bf16.mxu0 0
        %1937 = vmatpush1.bf16.msra.mxu0 0
        %1938 = vmatprep.subr.bf16.mxu0 0
        %1939 = vmatpush1.bf16.msra.mxu0 0
        %1940 = vmatprep.mubr.bf16.mxu0 0
        %1941 = vmatmul.mubr.bf16.gmra.mrb[0].mxu0 %v1897
        %v1942 = vpop.f32.mrb[0].mxu0
        %v1943 = vadd.f32 0.0, %v1942
        %v1944 = vpop.f32.mrb[0].mxu0
        %v1945 = vpop.f32.mrb[0].mxu0
        %v1946 = vadd.f32 0.0, %v1945
        %v1947 = vpop.f32.mrb[0].mxu0
        %1948 = vmatprep.mubr.bf16.mxu0 0
        %1949 = vmatmul.mubr.bf16.gmra.mrb[0].mxu0 %v1900
        %v1950 = vpop.f32.mrb[0].mxu0
        %v1951 = vadd.f32 0.0, %v1950
        %v1952 = vpop.f32.mrb[0].mxu0
        %v1953 = vpop.f32.mrb[0].mxu0
        %v1954 = vadd.f32 0.0, %v1953
        %v1955 = vpop.f32.mrb[0].mxu0
        %1956 = vmatprep.mubr.bf16.mxu0 0
        %1957 = vmatmul.mubr.bf16.gmra.mrb[0].mxu0 %v1903
        %v1958 = vpop.f32.mrb[0].mxu0
        %v1959 = vadd.f32 0.0, %v1958
        %v1960 = vpop.f32.mrb[0].mxu0
        %v1961 = vpop.f32.mrb[0].mxu0
        %v1962 = vadd.f32 0.0, %v1961
        %v1963 = vpop.f32.mrb[0].mxu0
        %1964 = vmatprep.mubr.bf16.mxu0 0
        %1965 = vmatmul.mubr.bf16.gmra.mrb[0].mxu0 %v1906
        %v1966 = vpop.f32.mrb[0].mxu0
        %v1967 = vadd.f32 0.0, %v1966
        %v1968 = vpop.f32.mrb[0].mxu0
        %v1969 = vpop.f32.mrb[0].mxu0
        %v1970 = vadd.f32 0.0, %v1969
        %v1971 = vpop.f32.mrb[0].mxu0
        %1972 = vdwg.mxu0
        %v1973 = vadd.f32 %v1827, %v1943
        %v1974 = vadd.f32 %v1828, %v1946
        %v1975 = vadd.f32 %v1829, %v1951
        %v1976 = vadd.f32 %v1830, %v1954
        %v1977 = vadd.f32 %v1831, %v1959
        %v1978 = vadd.f32 %v1832, %v1962
        %v1979 = vadd.f32 %v1833, %v1967
        %v1980 = vadd.f32 %v1834, %v1970
        %v1981 = vld [vmem:[%s1689] sm:$0xf]
        %v1982 = vld [vmem:[%s1689 + $0x4] sm:$0x1]
        %v1983 = vld [vmem:[%s1689 + $0x8] sm:$0xf]
        %v1984 = vld [vmem:[%s1689 + $0xc] sm:$0x1]
        %v1985 = vld [vmem:[%s1689 + $0x10] sm:$0xf]
        %v1986 = vld [vmem:[%s1689 + $0x14] sm:$0x1]
        %v1987 = vld [vmem:[%s1689 + $0x18] sm:$0xf]
        %v1988 = vld [vmem:[%s1689 + $0x1c] sm:$0x1]
        %v1989 = vld [vmem:[%s1689 + $0x20] sm:$0xf]
        %v1990 = vld [vmem:[%s1689 + $0x24] sm:$0x1]
        %v1991 = vld [vmem:[%s1689 + $0x28] sm:$0xf]
        %v1992 = vld [vmem:[%s1689 + $0x2c] sm:$0x1]
        %v1993 = vld [vmem:[%s1689 + $0x30] sm:$0xf]
        %v1994 = vld [vmem:[%s1689 + $0x34] sm:$0x1]
        %v1995 = vld [vmem:[%s1689 + $0x38] sm:$0xf]
        %v1996 = vld [vmem:[%s1689 + $0x3c] sm:$0x1]
        %v1998 = vshrl.u32 %v1981, 16
        %v2000 = vrot.slane %v1998, 4
        %v2001 = vshll.u32 %v1981, 16
        %v2003 = vrot.slane %v2001, 5
        %v2004 = vor.u32 %v2000, %v2003
        %v2005 = vrot.slane %v2004, 4
        %v2007 = vshll.u32 %v1982, 16
        %v2009 = vrot.slane %v2007, 5
        %v2010 = vsel %vm898, %v2005, %v2009
        %v2012 = vshrl.u32 %v1983, 16
        %v2014 = vrot.slane %v2012, 4
        %v2015 = vshll.u32 %v1983, 16
        %v2017 = vrot.slane %v2015, 5
        %v2018 = vor.u32 %v2014, %v2017
        %v2019 = vrot.slane %v2018, 4
        %v2021 = vshll.u32 %v1984, 16
        %v2023 = vrot.slane %v2021, 5
        %v2024 = vsel %vm898, %v2019, %v2023
        %v2026 = vshrl.u32 %v1985, 16
        %v2028 = vrot.slane %v2026, 4
        %v2029 = vshll.u32 %v1985, 16
        %v2031 = vrot.slane %v2029, 5
        %v2032 = vor.u32 %v2028, %v2031
        %v2033 = vrot.slane %v2032, 4
        %v2035 = vshll.u32 %v1986, 16
        %v2037 = vrot.slane %v2035, 5
        %v2038 = vsel %vm898, %v2033, %v2037
        %v2040 = vshrl.u32 %v1987, 16
        %v2042 = vrot.slane %v2040, 4
        %v2043 = vshll.u32 %v1987, 16
        %v2045 = vrot.slane %v2043, 5
        %v2046 = vor.u32 %v2042, %v2045
        %v2047 = vrot.slane %v2046, 4
        %v2049 = vshll.u32 %v1988, 16
        %v2051 = vrot.slane %v2049, 5
        %v2052 = vsel %vm898, %v2047, %v2051
        %v2054 = vshrl.u32 %v1989, 16
        %v2056 = vrot.slane %v2054, 4
        %v2057 = vshll.u32 %v1989, 16
        %v2059 = vrot.slane %v2057, 5
        %v2060 = vor.u32 %v2056, %v2059
        %v2061 = vrot.slane %v2060, 4
        %v2063 = vshll.u32 %v1990, 16
        %v2065 = vrot.slane %v2063, 5
        %v2066 = vsel %vm898, %v2061, %v2065
        %v2068 = vshrl.u32 %v1991, 16
        %v2070 = vrot.slane %v2068, 4
        %v2071 = vshll.u32 %v1991, 16
        %v2073 = vrot.slane %v2071, 5
        %v2074 = vor.u32 %v2070, %v2073
        %v2075 = vrot.slane %v2074, 4
        %v2077 = vshll.u32 %v1992, 16
        %v2079 = vrot.slane %v2077, 5
        %v2080 = vsel %vm898, %v2075, %v2079
        %v2082 = vshrl.u32 %v1993, 16
        %v2084 = vrot.slane %v2082, 4
        %v2085 = vshll.u32 %v1993, 16
        %v2087 = vrot.slane %v2085, 5
        %v2088 = vor.u32 %v2084, %v2087
        %v2089 = vrot.slane %v2088, 4
        %v2091 = vshll.u32 %v1994, 16
        %v2093 = vrot.slane %v2091, 5
        %v2094 = vsel %vm898, %v2089, %v2093
        %v2096 = vshrl.u32 %v1995, 16
        %v2098 = vrot.slane %v2096, 4
        %v2099 = vshll.u32 %v1995, 16
        %v2101 = vrot.slane %v2099, 5
        %v2102 = vor.u32 %v2098, %v2101
        %v2103 = vrot.slane %v2102, 4
        %v2105 = vshll.u32 %v1996, 16
        %v2107 = vrot.slane %v2105, 5
        %v2108 = vsel %vm898, %v2103, %v2107
        %v2109 = vld [vmem:[%s1 + $0x100] sm:$0xf]
        %v2110 = vld [vmem:[%s1 + $0x104] sm:$0xf]
        %v2111 = vld [vmem:[%s1 + $0x108] sm:$0xf]
        %v2112 = vld [vmem:[%s1 + $0x10c] sm:$0xf]
        %v2113 = vld [vmem:[%s1 + $0x110] sm:$0xf]
        %v2114 = vld [vmem:[%s1 + $0x114] sm:$0xf]
        %v2115 = vld [vmem:[%s1 + $0x118] sm:$0xf]
        %v2116 = vld [vmem:[%s1 + $0x11c] sm:$0xf]
        %v2117 = vunpack.c.l.b16 %v2010
        %v2118 = vunpack.c.l.b16 %v2024
        %v2119 = vunpack.c.l.b16 %v2038
        %v2120 = vunpack.c.l.b16 %v2052
        %v2121 = vunpack.c.l.b16 %v2066
        %v2122 = vunpack.c.l.b16 %v2080
        %v2123 = vunpack.c.l.b16 %v2094
        %v2124 = vunpack.c.l.b16 %v2108
        %v2125 = vpack.c.b16 %v2118, %v2117
        %v2126 = vpack.c.b16 %v2120, %v2119
        %v2127 = vpack.c.b16 %v2122, %v2121
        %v2128 = vpack.c.b16 %v2124, %v2123
        %v2137 = vunpack.c.l.b16 %v2109
        %v2138 = vunpack.c.l.b16 %v2110
        %v2139 = vunpack.c.l.b16 %v2111
        %v2140 = vunpack.c.l.b16 %v2112
        %v2141 = vunpack.c.l.b16 %v2113
        %v2142 = vunpack.c.l.b16 %v2114
        %v2143 = vunpack.c.l.b16 %v2115
        %v2144 = vunpack.c.l.b16 %v2116
        %v2145 = vpack.c.b16 %v2138, %v2137
        %v2146 = vpack.c.b16 %v2140, %v2139
        %v2147 = vpack.c.b16 %v2142, %v2141
        %v2148 = vpack.c.b16 %v2144, %v2143
        %v2154 = vsel %vm681, %v2125, 0
        %v2157 = vsel %vm681, %v2126, 0
        %v2160 = vsel %vm681, %v2127, 0
        %v2163 = vsel %vm681, %v2128, 0
        %2165 = vmatprep.subr.bf16.mxu0 0
        %2166 = vmatpush1.bf16.msra.mxu0 %v2145
        %2167 = vmatprep.subr.bf16.mxu0 0
        %2168 = vmatpush1.bf16.msra.mxu0 %v2146
        %2169 = vmatprep.subr.bf16.mxu0 0
        %2170 = vmatpush1.bf16.msra.mxu0 %v2147
        %2171 = vmatprep.subr.bf16.mxu0 0
        %2172 = vmatpush1.bf16.msra.mxu0 %v2148
        %2173 = vmatprep.subr.bf16.mxu0 0
        %2174 = vmatpush1.bf16.msra.mxu0 0
        %2175 = vmatprep.subr.bf16.mxu0 0
        %2176 = vmatpush1.bf16.msra.mxu0 0
        %2177 = vmatprep.subr.bf16.mxu0 0
        %2178 = vmatpush1.bf16.msra.mxu0 0
        %2179 = vmatprep.subr.bf16.mxu0 0
        %2180 = vmatpush1.bf16.msra.mxu0 0
        %2181 = vmatprep.subr.bf16.mxu0 0
        %2182 = vmatpush1.bf16.msra.mxu0 0
        %2183 = vmatprep.subr.bf16.mxu0 0
        %2184 = vmatpush1.bf16.msra.mxu0 0
        %2185 = vmatprep.subr.bf16.mxu0 0
        %2186 = vmatpush1.bf16.msra.mxu0 0
        %2187 = vmatprep.subr.bf16.mxu0 0
        %2188 = vmatpush1.bf16.msra.mxu0 0
        %2189 = vmatprep.subr.bf16.mxu0 0
        %2190 = vmatpush1.bf16.msra.mxu0 0
        %2191 = vmatprep.subr.bf16.mxu0 0
        %2192 = vmatpush1.bf16.msra.mxu0 0
        %2193 = vmatprep.subr.bf16.mxu0 0
        %2194 = vmatpush1.bf16.msra.mxu0 0
        %2195 = vmatprep.subr.bf16.mxu0 0
        %2196 = vmatpush1.bf16.msra.mxu0 0
        %2197 = vmatprep.mubr.bf16.mxu0 0
        %2198 = vmatmul.mubr.bf16.gmra.mrb[0].mxu0 %v2154
        %v2199 = vpop.f32.mrb[0].mxu0
        %v2200 = vadd.f32 0.0, %v2199
        %v2201 = vpop.f32.mrb[0].mxu0
        %v2202 = vpop.f32.mrb[0].mxu0
        %v2203 = vadd.f32 0.0, %v2202
        %v2204 = vpop.f32.mrb[0].mxu0
        %2205 = vmatprep.mubr.bf16.mxu0 0
        %2206 = vmatmul.mubr.bf16.gmra.mrb[0].mxu0 %v2157
        %v2207 = vpop.f32.mrb[0].mxu0
        %v2208 = vadd.f32 0.0, %v2207
        %v2209 = vpop.f32.mrb[0].mxu0
        %v2210 = vpop.f32.mrb[0].mxu0
        %v2211 = vadd.f32 0.0, %v2210
        %v2212 = vpop.f32.mrb[0].mxu0
        %2213 = vmatprep.mubr.bf16.mxu0 0
        %2214 = vmatmul.mubr.bf16.gmra.mrb[0].mxu0 %v2160
        %v2215 = vpop.f32.mrb[0].mxu0
        %v2216 = vadd.f32 0.0, %v2215
        %v2217 = vpop.f32.mrb[0].mxu0
        %v2218 = vpop.f32.mrb[0].mxu0
        %v2219 = vadd.f32 0.0, %v2218
        %v2220 = vpop.f32.mrb[0].mxu0
        %2221 = vmatprep.mubr.bf16.mxu0 0
        %2222 = vmatmul.mubr.bf16.gmra.mrb[0].mxu0 %v2163
        %v2223 = vpop.f32.mrb[0].mxu0
        %v2224 = vadd.f32 0.0, %v2223
        %v2225 = vpop.f32.mrb[0].mxu0
        %v2226 = vpop.f32.mrb[0].mxu0
        %v2227 = vadd.f32 0.0, %v2226
        %v2228 = vpop.f32.mrb[0].mxu0
        %2229 = vdwg.mxu0
        %v2230 = vadd.f32 %v1973, %v2200
        %v2231 = vadd.f32 %v1974, %v2203
        %v2232 = vadd.f32 %v1975, %v2208
        %v2233 = vadd.f32 %v1976, %v2211
        %v2234 = vadd.f32 %v1977, %v2216
        %v2235 = vadd.f32 %v1978, %v2219
        %v2236 = vadd.f32 %v1979, %v2224
        %v2237 = vadd.f32 %v1980, %v2227
        %v2238 = vld [vmem:[%s2] sm:$0x1]
        %v2240 = vlaneseq
        %v2241 = vshrl.u32 %v2240, 7
        %v2242 = vsub.s32 0, %v2241
        %v2243 = vrot.slane %v2238, %v2242
        %v2245 = vadd.f32 %v2230, %v2243
        %v2246 = vadd.f32 %v2231, %v2243
        %v2247 = vadd.f32 %v2232, %v2243
        %v2248 = vadd.f32 %v2233, %v2243
        %v2249 = vadd.f32 %v2234, %v2243
        %v2250 = vadd.f32 %v2235, %v2243
        %v2251 = vadd.f32 %v2236, %v2243
        %v2252 = vadd.f32 %v2237, %v2243
        %v2253 = vmax.f32 %v2245, -1.0
        %v2254 = vmax.f32 %v2246, -1.0
        %v2255 = vmax.f32 %v2247, -1.0
        %v2256 = vmax.f32 %v2248, -1.0
        %v2257 = vmax.f32 %v2249, -1.0
        %v2258 = vmax.f32 %v2250, -1.0
        %v2259 = vmax.f32 %v2251, -1.0
        %v2260 = vmax.f32 %v2252, -1.0
        %v2261 = vmin.f32 %v2253, 1.0
        %v2262 = vmin.f32 %v2254, 1.0
        %v2263 = vmin.f32 %v2255, 1.0
        %v2264 = vmin.f32 %v2256, 1.0
        %v2265 = vmin.f32 %v2257, 1.0
        %v2266 = vmin.f32 %v2258, 1.0
        %v2267 = vmin.f32 %v2259, 1.0
        %v2268 = vmin.f32 %v2260, 1.0
        %2269 = vst [vmem:[#allocation2] sm:$0xf] 0
        %2270 = vst [vmem:[#allocation2 + $0x4] sm:$0x1] 0
        %2271 = vst [vmem:[#allocation2 + $0x8] sm:$0xf] 0
        %2272 = vst [vmem:[#allocation2 + $0xc] sm:$0x1] 0
        %2273 = vst [vmem:[#allocation2 + $0x10] sm:$0xf] 0
        %2274 = vst [vmem:[#allocation2 + $0x14] sm:$0x1] 0
        %2275 = vst [vmem:[#allocation2 + $0x18] sm:$0xf] 0
        %2276 = vst [vmem:[#allocation2 + $0x1c] sm:$0x1] 0
        %2277 = vst [vmem:[#allocation2 + $0x20] sm:$0xf] 0
        %2278 = vst [vmem:[#allocation2 + $0x24] sm:$0x1] 0
        %2279 = vst [vmem:[#allocation2 + $0x28] sm:$0xf] 0
        %2280 = vst [vmem:[#allocation2 + $0x2c] sm:$0x1] 0
        %2281 = vst [vmem:[#allocation2 + $0x30] sm:$0xf] 0
        %2282 = vst [vmem:[#allocation2 + $0x34] sm:$0x1] 0
        %2283 = vst [vmem:[#allocation2 + $0x38] sm:$0xf] 0
        %2284 = vst [vmem:[#allocation2 + $0x3c] sm:$0x1] 0
        %2285 = vst [vmem:[#allocation2 + $0x40] sm:$0xf] 0
        %2286 = vst [vmem:[#allocation2 + $0x44] sm:$0x1] 0
        %2287 = vst [vmem:[#allocation2 + $0x48] sm:$0xf] 0
        %2288 = vst [vmem:[#allocation2 + $0x4c] sm:$0x1] 0
        %v2289 = vpack.c.bf16 %v2261, %v2261
        %v2290 = vpack.c.bf16 %v2262, %v2262
        %v2291 = vpack.c.bf16 %v2263, %v2263
        %v2292 = vpack.c.bf16 %v2264, %v2264
        %v2293 = vpack.c.bf16 %v2265, %v2265
        %v2294 = vpack.c.bf16 %v2266, %v2266
        %v2295 = vpack.c.bf16 %v2267, %v2267
        %v2296 = vpack.c.bf16 %v2268, %v2268
        %v2305 = vunpack.c.l.b16 %v2289
        %v2306 = vunpack.c.l.b16 %v2290
        %v2307 = vunpack.c.l.b16 %v2291
        %v2308 = vunpack.c.l.b16 %v2292
        %v2309 = vunpack.c.l.b16 %v2293
        %v2310 = vunpack.c.l.b16 %v2294
        %v2311 = vunpack.c.l.b16 %v2295
        %v2312 = vunpack.c.l.b16 %v2296
        %v2313 = vpack.c.b16 %v2305, %v2305
        %v2314 = vpack.c.b16 %v2306, %v2306
        %v2315 = vpack.c.b16 %v2307, %v2307
        %v2316 = vpack.c.b16 %v2308, %v2308
        %v2317 = vpack.c.b16 %v2309, %v2309
        %v2318 = vpack.c.b16 %v2310, %v2310
        %v2319 = vpack.c.b16 %v2311, %v2311
        %v2320 = vpack.c.b16 %v2312, %v2312
        %v2322 = vshrl.u32 %v2313, 16
        %v2324 = vrot.slane %v2322, 7
        %v2325 = vshll.u32 %v2313, 16
        %v2327 = vor.u32 %v2324, %v2325
        %v2328 = vrot.slane %v2324, 4
        %v2330 = vshrl.u32 %v2314, 16
        %v2332 = vrot.slane %v2330, 7
        %v2333 = vshll.u32 %v2314, 16
        %v2335 = vor.u32 %v2332, %v2333
        %v2336 = vrot.slane %v2332, 4
        %v2338 = vshrl.u32 %v2315, 16
        %v2340 = vrot.slane %v2338, 7
        %v2341 = vshll.u32 %v2315, 16
        %v2343 = vor.u32 %v2340, %v2341
        %v2344 = vrot.slane %v2340, 4
        %v2346 = vshrl.u32 %v2316, 16
        %v2348 = vrot.slane %v2346, 7
        %v2349 = vshll.u32 %v2316, 16
        %v2351 = vor.u32 %v2348, %v2349
        %v2352 = vrot.slane %v2348, 4
        %v2354 = vshrl.u32 %v2317, 16
        %v2356 = vrot.slane %v2354, 7
        %v2357 = vshll.u32 %v2317, 16
        %v2359 = vor.u32 %v2356, %v2357
        %v2360 = vrot.slane %v2356, 4
        %v2362 = vshrl.u32 %v2318, 16
        %v2364 = vrot.slane %v2362, 7
        %v2365 = vshll.u32 %v2318, 16
        %v2367 = vor.u32 %v2364, %v2365
        %v2368 = vrot.slane %v2364, 4
        %v2370 = vshrl.u32 %v2319, 16
        %v2372 = vrot.slane %v2370, 7
        %v2373 = vshll.u32 %v2319, 16
        %v2375 = vor.u32 %v2372, %v2373
        %v2376 = vrot.slane %v2372, 4
        %v2378 = vshrl.u32 %v2320, 16
        %v2380 = vrot.slane %v2378, 7
        %v2381 = vshll.u32 %v2320, 16
        %v2383 = vor.u32 %v2380, %v2381
        %v2384 = vrot.slane %v2380, 4
        %s2401 = scalar_lea.vmem [#allocation2], 8
        %vm2402 = vcmask 1043456
        %vm2403 = vsmask.f32 7938
        %vm2404 = vmand %vm2402, %vm2403
        %v2405 = vld [vmem:[%s2401] sm:$0xf]
        %v2406 = vsel %vm2404, %v2327, %v2405
        %2407 = vst [vmem:[%s2401] sm:$0xf] %v2406
        %vm2408 = vcmask 1040384
        %vm2409 = vsmask.f32 256
        %vm2410 = vmand %vm2408, %vm2409
        %v2411 = vld [vmem:[%s2401 + $0x4] sm:$0x1]
        %v2412 = vsel %vm2410, %v2328, %v2411
        %2413 = vst [vmem:[%s2401 + $0x4] sm:$0x1] %v2412
        %v2414 = vld [vmem:[%s2401 + $0x8] sm:$0xf]
        %v2415 = vsel %vm2404, %v2335, %v2414
        %2416 = vst [vmem:[%s2401 + $0x8] sm:$0xf] %v2415
        %v2417 = vld [vmem:[%s2401 + $0xc] sm:$0x1]
        %v2418 = vsel %vm2410, %v2336, %v2417
        %2419 = vst [vmem:[%s2401 + $0xc] sm:$0x1] %v2418
        %v2420 = vld [vmem:[%s2401 + $0x10] sm:$0xf]
        %v2421 = vsel %vm2404, %v2343, %v2420
        %2422 = vst [vmem:[%s2401 + $0x10] sm:$0xf] %v2421
        %v2423 = vld [vmem:[%s2401 + $0x14] sm:$0x1]
        %v2424 = vsel %vm2410, %v2344, %v2423
        %2425 = vst [vmem:[%s2401 + $0x14] sm:$0x1] %v2424
        %v2426 = vld [vmem:[%s2401 + $0x18] sm:$0xf]
        %v2427 = vsel %vm2404, %v2351, %v2426
        %2428 = vst [vmem:[%s2401 + $0x18] sm:$0xf] %v2427
        %v2429 = vld [vmem:[%s2401 + $0x1c] sm:$0x1]
        %v2430 = vsel %vm2410, %v2352, %v2429
        %2431 = vst [vmem:[%s2401 + $0x1c] sm:$0x1] %v2430
        %v2432 = vld [vmem:[%s2401 + $0x20] sm:$0xf]
        %v2433 = vsel %vm2404, %v2359, %v2432
        %2434 = vst [vmem:[%s2401 + $0x20] sm:$0xf] %v2433
        %v2435 = vld [vmem:[%s2401 + $0x24] sm:$0x1]
        %v2436 = vsel %vm2410, %v2360, %v2435
        %2437 = vst [vmem:[%s2401 + $0x24] sm:$0x1] %v2436
        %v2438 = vld [vmem:[%s2401 + $0x28] sm:$0xf]
        %v2439 = vsel %vm2404, %v2367, %v2438
        %2440 = vst [vmem:[%s2401 + $0x28] sm:$0xf] %v2439
        %v2441 = vld [vmem:[%s2401 + $0x2c] sm:$0x1]
        %v2442 = vsel %vm2410, %v2368, %v2441
        %2443 = vst [vmem:[%s2401 + $0x2c] sm:$0x1] %v2442
        %v2444 = vld [vmem:[%s2401 + $0x30] sm:$0xf]
        %v2445 = vsel %vm2404, %v2375, %v2444
        %2446 = vst [vmem:[%s2401 + $0x30] sm:$0xf] %v2445
        %v2447 = vld [vmem:[%s2401 + $0x34] sm:$0x1]
        %v2448 = vsel %vm2410, %v2376, %v2447
        %2449 = vst [vmem:[%s2401 + $0x34] sm:$0x1] %v2448
        %v2450 = vld [vmem:[%s2401 + $0x38] sm:$0xf]
        %v2451 = vsel %vm2404, %v2383, %v2450
        %2452 = vst [vmem:[%s2401 + $0x38] sm:$0xf] %v2451
        %v2453 = vld [vmem:[%s2401 + $0x3c] sm:$0x1]
        %v2454 = vsel %vm2410, %v2384, %v2453
        %2455 = vst [vmem:[%s2401 + $0x3c] sm:$0x1] %v2454
        %v2456 = vld [vmem:[#allocation2] sm:$0xf]
        %v2457 = vld [vmem:[#allocation2 + $0x8] sm:$0xf]
        %v2458 = vld [vmem:[#allocation2 + $0x10] sm:$0xf]
        %v2459 = vld [vmem:[#allocation2 + $0x18] sm:$0xf]
        %v2460 = vld [vmem:[#allocation2 + $0x20] sm:$0xf]
        %v2461 = vld [vmem:[#allocation2 + $0x28] sm:$0xf]
        %v2462 = vld [vmem:[#allocation2 + $0x30] sm:$0xf]
        %v2463 = vld [vmem:[#allocation2 + $0x38] sm:$0xf]
        %v2464 = vld [vmem:[%s3] sm:$0xf]
        %v2465 = vld [vmem:[%s3 + $0x4] sm:$0xf]
        %v2466 = vld [vmem:[%s3 + $0x8] sm:$0xf]
        %v2467 = vld [vmem:[%s3 + $0xc] sm:$0xf]
        %v2468 = vld [vmem:[%s3 + $0x10] sm:$0xf]
        %v2469 = vld [vmem:[%s3 + $0x14] sm:$0xf]
        %v2470 = vld [vmem:[%s3 + $0x18] sm:$0xf]
        %v2471 = vld [vmem:[%s3 + $0x1c] sm:$0xf]
        %v2472 = vld [vmem:[%s3 + $0x20] sm:$0xf]
        %v2473 = vld [vmem:[%s3 + $0x24] sm:$0xf]
        %v2474 = vld [vmem:[%s3 + $0x28] sm:$0xf]
        %v2475 = vld [vmem:[%s3 + $0x2c] sm:$0xf]
        %v2476 = vld [vmem:[%s3 + $0x30] sm:$0xf]
        %v2477 = vld [vmem:[%s3 + $0x34] sm:$0xf]
        %v2478 = vld [vmem:[%s3 + $0x38] sm:$0xf]
        %v2479 = vld [vmem:[%s3 + $0x3c] sm:$0xf]
        %v2480 = vld [vmem:[#allocation2 + $0x4] sm:$0x1]
        %v2481 = vld [vmem:[#allocation2 + $0xc] sm:$0x1]
        %v2482 = vld [vmem:[#allocation2 + $0x14] sm:$0x1]
        %v2483 = vld [vmem:[#allocation2 + $0x1c] sm:$0x1]
        %v2484 = vld [vmem:[#allocation2 + $0x24] sm:$0x1]
        %v2485 = vld [vmem:[#allocation2 + $0x2c] sm:$0x1]
        %v2486 = vld [vmem:[#allocation2 + $0x34] sm:$0x1]
        %v2487 = vld [vmem:[#allocation2 + $0x3c] sm:$0x1]
        %v2489 = vshrl.u32 %v2456, 16
        %v2491 = vrot.slane %v2489, 4
        %v2492 = vshll.u32 %v2456, 16
        %v2494 = vrot.slane %v2492, 5
        %v2495 = vor.u32 %v2491, %v2494
        %v2496 = vrot.slane %v2495, 4
        %v2498 = vshll.u32 %v2480, 16
        %v2500 = vrot.slane %v2498, 5
        %v2501 = vsel %vm898, %v2496, %v2500
        %v2503 = vshrl.u32 %v2457, 16
        %v2505 = vrot.slane %v2503, 4
        %v2506 = vshll.u32 %v2457, 16
        %v2508 = vrot.slane %v2506, 5
        %v2509 = vor.u32 %v2505, %v2508
        %v2510 = vrot.slane %v2509, 4
        %v2512 = vshll.u32 %v2481, 16
        %v2514 = vrot.slane %v2512, 5
        %v2515 = vsel %vm898, %v2510, %v2514
        %v2517 = vshrl.u32 %v2458, 16
        %v2519 = vrot.slane %v2517, 4
        %v2520 = vshll.u32 %v2458, 16
        %v2522 = vrot.slane %v2520, 5
        %v2523 = vor.u32 %v2519, %v2522
        %v2524 = vrot.slane %v2523, 4
        %v2526 = vshll.u32 %v2482, 16
        %v2528 = vrot.slane %v2526, 5
        %v2529 = vsel %vm898, %v2524, %v2528
        %v2531 = vshrl.u32 %v2459, 16
        %v2533 = vrot.slane %v2531, 4
        %v2534 = vshll.u32 %v2459, 16
        %v2536 = vrot.slane %v2534, 5
        %v2537 = vor.u32 %v2533, %v2536
        %v2538 = vrot.slane %v2537, 4
        %v2540 = vshll.u32 %v2483, 16
        %v2542 = vrot.slane %v2540, 5
        %v2543 = vsel %vm898, %v2538, %v2542
        %v2545 = vshrl.u32 %v2460, 16
        %v2547 = vrot.slane %v2545, 4
        %v2548 = vshll.u32 %v2460, 16
        %v2550 = vrot.slane %v2548, 5
        %v2551 = vor.u32 %v2547, %v2550
        %v2552 = vrot.slane %v2551, 4
        %v2554 = vshll.u32 %v2484, 16
        %v2556 = vrot.slane %v2554, 5
        %v2557 = vsel %vm898, %v2552, %v2556
        %v2559 = vshrl.u32 %v2461, 16
        %v2561 = vrot.slane %v2559, 4
        %v2562 = vshll.u32 %v2461, 16
        %v2564 = vrot.slane %v2562, 5
        %v2565 = vor.u32 %v2561, %v2564
        %v2566 = vrot.slane %v2565, 4
        %v2568 = vshll.u32 %v2485, 16
        %v2570 = vrot.slane %v2568, 5
        %v2571 = vsel %vm898, %v2566, %v2570
        %v2573 = vshrl.u32 %v2462, 16
        %v2575 = vrot.slane %v2573, 4
        %v2576 = vshll.u32 %v2462, 16
        %v2578 = vrot.slane %v2576, 5
        %v2579 = vor.u32 %v2575, %v2578
        %v2580 = vrot.slane %v2579, 4
        %v2582 = vshll.u32 %v2486, 16
        %v2584 = vrot.slane %v2582, 5
        %v2585 = vsel %vm898, %v2580, %v2584
        %v2587 = vshrl.u32 %v2463, 16
        %v2589 = vrot.slane %v2587, 4
        %v2590 = vshll.u32 %v2463, 16
        %v2592 = vrot.slane %v2590, 5
        %v2593 = vor.u32 %v2589, %v2592
        %v2594 = vrot.slane %v2593, 4
        %v2596 = vshll.u32 %v2487, 16
        %v2598 = vrot.slane %v2596, 5
        %v2599 = vsel %vm898, %v2594, %v2598
        %v2600 = vld [vmem:[%s3 + $0x40] sm:$0xf]
        %v2601 = vld [vmem:[%s3 + $0x44] sm:$0xf]
        %v2602 = vld [vmem:[%s3 + $0x48] sm:$0xf]
        %v2603 = vld [vmem:[%s3 + $0x4c] sm:$0xf]
        %v2604 = vld [vmem:[%s3 + $0x50] sm:$0xf]
        %v2605 = vld [vmem:[%s3 + $0x54] sm:$0xf]
        %v2606 = vld [vmem:[%s3 + $0x58] sm:$0xf]
        %v2607 = vld [vmem:[%s3 + $0x5c] sm:$0xf]
        %v2608 = vld [vmem:[%s3 + $0x60] sm:$0xf]
        %v2609 = vld [vmem:[%s3 + $0x64] sm:$0xf]
        %v2610 = vld [vmem:[%s3 + $0x68] sm:$0xf]
        %v2611 = vld [vmem:[%s3 + $0x6c] sm:$0xf]
        %v2612 = vld [vmem:[%s3 + $0x70] sm:$0xf]
        %v2613 = vld [vmem:[%s3 + $0x74] sm:$0xf]
        %v2614 = vld [vmem:[%s3 + $0x78] sm:$0xf]
        %v2615 = vld [vmem:[%s3 + $0x7c] sm:$0xf]
        %v2616 = vunpack.c.l.b16 %v2501
        %v2617 = vunpack.c.l.b16 %v2515
        %v2618 = vunpack.c.l.b16 %v2529
        %v2619 = vunpack.c.l.b16 %v2543
        %v2620 = vunpack.c.l.b16 %v2557
        %v2621 = vunpack.c.l.b16 %v2571
        %v2622 = vunpack.c.l.b16 %v2585
        %v2623 = vunpack.c.l.b16 %v2599
        %v2624 = vpack.c.b16 %v2617, %v2616
        %v2625 = vpack.c.b16 %v2619, %v2618
        %v2626 = vpack.c.b16 %v2621, %v2620
        %v2627 = vpack.c.b16 %v2623, %v2622
        %v2648 = vunpack.c.l.b16 %v2600
        %v2649 = vunpack.c.l.b16 %v2601
        %v2650 = vunpack.c.l.b16 %v2602
        %v2651 = vunpack.c.l.b16 %v2603
        %v2652 = vunpack.c.l.b16 %v2604
        %v2653 = vunpack.c.l.b16 %v2605
        %v2654 = vunpack.c.l.b16 %v2606
        %v2655 = vunpack.c.l.b16 %v2607
        %v2656 = vunpack.c.l.b16 %v2608
        %v2657 = vunpack.c.l.b16 %v2609
        %v2658 = vunpack.c.l.b16 %v2610
        %v2659 = vunpack.c.l.b16 %v2611
        %v2660 = vunpack.c.l.b16 %v2612
        %v2661 = vunpack.c.l.b16 %v2613
        %v2662 = vunpack.c.l.b16 %v2614
        %v2663 = vunpack.c.l.b16 %v2615
        %v2664 = vpack.c.b16 %v2649, %v2648
        %v2665 = vpack.c.b16 %v2651, %v2650
        %v2666 = vpack.c.b16 %v2653, %v2652
        %v2667 = vpack.c.b16 %v2655, %v2654
        %v2668 = vpack.c.b16 %v2657, %v2656
        %v2669 = vpack.c.b16 %v2659, %v2658
        %v2670 = vpack.c.b16 %v2661, %v2660
        %v2671 = vpack.c.b16 %v2663, %v2662
        %2680 = vmatprep.subr.bf16.mxu0 0
        %2681 = vmatpush1.bf16.msra.mxu0 %v2664
        %2682 = vmatprep.subr.bf16.mxu0 0
        %2683 = vmatpush1.bf16.msra.mxu0 %v2665
        %2684 = vmatprep.subr.bf16.mxu0 0
        %2685 = vmatpush1.bf16.msra.mxu0 %v2666
        %2686 = vmatprep.subr.bf16.mxu0 0
        %2687 = vmatpush1.bf16.msra.mxu0 %v2667
        %2688 = vmatprep.subr.bf16.mxu0 0
        %2689 = vmatpush1.bf16.msra.mxu0 %v2668
        %2690 = vmatprep.subr.bf16.mxu0 0
        %2691 = vmatpush1.bf16.msra.mxu0 %v2669
        %2692 = vmatprep.subr.bf16.mxu0 0
        %2693 = vmatpush1.bf16.msra.mxu0 %v2670
        %2694 = vmatprep.subr.bf16.mxu0 0
        %2695 = vmatpush1.bf16.msra.mxu0 %v2671
        %2696 = vmatprep.subr.bf16.mxu0 0
        %2697 = vmatpush1.bf16.msra.mxu0 0
        %2698 = vmatprep.subr.bf16.mxu0 0
        %2699 = vmatpush1.bf16.msra.mxu0 0
        %2700 = vmatprep.subr.bf16.mxu0 0
        %2701 = vmatpush1.bf16.msra.mxu0 0
        %2702 = vmatprep.subr.bf16.mxu0 0
        %2703 = vmatpush1.bf16.msra.mxu0 0
        %2704 = vmatprep.subr.bf16.mxu0 0
        %2705 = vmatpush1.bf16.msra.mxu0 0
        %2706 = vmatprep.subr.bf16.mxu0 0
        %2707 = vmatpush1.bf16.msra.mxu0 0
        %2708 = vmatprep.subr.bf16.mxu0 0
        %2709 = vmatpush1.bf16.msra.mxu0 0
        %2710 = vmatprep.subr.bf16.mxu0 0
        %2711 = vmatpush1.bf16.msra.mxu0 0
        %2712 = vmatprep.mubr.bf16.mxu0 0
        %2713 = vmatmul.mubr.bf16.gmra.mrb[0].mxu0 %v2624
        %v2714 = vpop.f32.mrb[0].mxu0
        %v2715 = vadd.f32 0.0, %v2714
        %v2716 = vpop.f32.mrb[0].mxu0
        %v2717 = vpop.f32.mrb[0].mxu0
        %v2718 = vadd.f32 0.0, %v2717
        %v2719 = vpop.f32.mrb[0].mxu0
        %2720 = vmatprep.mubr.bf16.mxu0 0
        %2721 = vmatmul.mubr.bf16.gmra.mrb[0].mxu0 %v2625
        %v2722 = vpop.f32.mrb[0].mxu0
        %v2723 = vadd.f32 0.0, %v2722
        %v2724 = vpop.f32.mrb[0].mxu0
        %v2725 = vpop.f32.mrb[0].mxu0
        %v2726 = vadd.f32 0.0, %v2725
        %v2727 = vpop.f32.mrb[0].mxu0
        %2728 = vmatprep.mubr.bf16.mxu0 0
        %2729 = vmatmul.mubr.bf16.gmra.mrb[0].mxu0 %v2626
        %v2730 = vpop.f32.mrb[0].mxu0
        %v2731 = vadd.f32 0.0, %v2730
        %v2732 = vpop.f32.mrb[0].mxu0
        %v2733 = vpop.f32.mrb[0].mxu0
        %v2734 = vadd.f32 0.0, %v2733
        %v2735 = vpop.f32.mrb[0].mxu0
        %2736 = vmatprep.mubr.bf16.mxu0 0
        %2737 = vmatmul.mubr.bf16.gmra.mrb[0].mxu0 %v2627
        %v2738 = vpop.f32.mrb[0].mxu0
        %v2739 = vadd.f32 0.0, %v2738
        %v2740 = vpop.f32.mrb[0].mxu0
        %v2741 = vpop.f32.mrb[0].mxu0
        %v2742 = vadd.f32 0.0, %v2741
        %v2743 = vpop.f32.mrb[0].mxu0
        %2744 = vdwg.mxu0
        %v2753 = vunpack.c.l.b16 %v2456
        %v2754 = vunpack.c.l.b16 %v2457
        %v2755 = vunpack.c.l.b16 %v2458
        %v2756 = vunpack.c.l.b16 %v2459
        %v2757 = vunpack.c.l.b16 %v2460
        %v2758 = vunpack.c.l.b16 %v2461
        %v2759 = vunpack.c.l.b16 %v2462
        %v2760 = vunpack.c.l.b16 %v2463
        %v2761 = vpack.c.b16 %v2754, %v2753
        %v2762 = vpack.c.b16 %v2756, %v2755
        %v2763 = vpack.c.b16 %v2758, %v2757
        %v2764 = vpack.c.b16 %v2760, %v2759
        %v2785 = vunpack.c.l.b16 %v2464
        %v2786 = vunpack.c.l.b16 %v2465
        %v2787 = vunpack.c.l.b16 %v2466
        %v2788 = vunpack.c.l.b16 %v2467
        %v2789 = vunpack.c.l.b16 %v2468
        %v2790 = vunpack.c.l.b16 %v2469
        %v2791 = vunpack.c.l.b16 %v2470
        %v2792 = vunpack.c.l.b16 %v2471
        %v2793 = vunpack.c.l.b16 %v2472
        %v2794 = vunpack.c.l.b16 %v2473
        %v2795 = vunpack.c.l.b16 %v2474
        %v2796 = vunpack.c.l.b16 %v2475
        %v2797 = vunpack.c.l.b16 %v2476
        %v2798 = vunpack.c.l.b16 %v2477
        %v2799 = vunpack.c.l.b16 %v2478
        %v2800 = vunpack.c.l.b16 %v2479
        %v2801 = vpack.c.b16 %v2786, %v2785
        %v2802 = vpack.c.b16 %v2788, %v2787
        %v2803 = vpack.c.b16 %v2790, %v2789
        %v2804 = vpack.c.b16 %v2792, %v2791
        %v2805 = vpack.c.b16 %v2794, %v2793
        %v2806 = vpack.c.b16 %v2796, %v2795
        %v2807 = vpack.c.b16 %v2798, %v2797
        %v2808 = vpack.c.b16 %v2800, %v2799
        %2817 = vmatprep.subr.bf16.mxu0 0
        %2818 = vmatpush1.bf16.msra.mxu0 %v2801
        %2819 = vmatprep.subr.bf16.mxu0 0
        %2820 = vmatpush1.bf16.msra.mxu0 %v2802
        %2821 = vmatprep.subr.bf16.mxu0 0
        %2822 = vmatpush1.bf16.msra.mxu0 %v2803
        %2823 = vmatprep.subr.bf16.mxu0 0
        %2824 = vmatpush1.bf16.msra.mxu0 %v2804
        %2825 = vmatprep.subr.bf16.mxu0 0
        %2826 = vmatpush1.bf16.msra.mxu0 %v2805
        %2827 = vmatprep.subr.bf16.mxu0 0
        %2828 = vmatpush1.bf16.msra.mxu0 %v2806
        %2829 = vmatprep.subr.bf16.mxu0 0
        %2830 = vmatpush1.bf16.msra.mxu0 %v2807
        %2831 = vmatprep.subr.bf16.mxu0 0
        %2832 = vmatpush1.bf16.msra.mxu0 %v2808
        %2833 = vmatprep.subr.bf16.mxu0 0
        %2834 = vmatpush1.bf16.msra.mxu0 0
        %2835 = vmatprep.subr.bf16.mxu0 0
        %2836 = vmatpush1.bf16.msra.mxu0 0
        %2837 = vmatprep.subr.bf16.mxu0 0
        %2838 = vmatpush1.bf16.msra.mxu0 0
        %2839 = vmatprep.subr.bf16.mxu0 0
        %2840 = vmatpush1.bf16.msra.mxu0 0
        %2841 = vmatprep.subr.bf16.mxu0 0
        %2842 = vmatpush1.bf16.msra.mxu0 0
        %2843 = vmatprep.subr.bf16.mxu0 0
        %2844 = vmatpush1.bf16.msra.mxu0 0
        %2845 = vmatprep.subr.bf16.mxu0 0
        %2846 = vmatpush1.bf16.msra.mxu0 0
        %2847 = vmatprep.subr.bf16.mxu0 0
        %2848 = vmatpush1.bf16.msra.mxu0 0
        %2849 = vmatprep.mubr.bf16.mxu0 0
        %2850 = vmatmul.mubr.bf16.gmra.mrb[0].mxu0 %v2761
        %v2851 = vpop.f32.mrb[0].mxu0
        %v2852 = vadd.f32 %v2715, %v2851
        %v2853 = vpop.f32.mrb[0].mxu0
        %v2854 = vpop.f32.mrb[0].mxu0
        %v2855 = vadd.f32 %v2718, %v2854
        %v2856 = vpop.f32.mrb[0].mxu0
        %2857 = vmatprep.mubr.bf16.mxu0 0
        %2858 = vmatmul.mubr.bf16.gmra.mrb[0].mxu0 %v2762
        %v2859 = vpop.f32.mrb[0].mxu0
        %v2860 = vadd.f32 %v2723, %v2859
        %v2861 = vpop.f32.mrb[0].mxu0
        %v2862 = vpop.f32.mrb[0].mxu0
        %v2863 = vadd.f32 %v2726, %v2862
        %v2864 = vpop.f32.mrb[0].mxu0
        %2865 = vmatprep.mubr.bf16.mxu0 0
        %2866 = vmatmul.mubr.bf16.gmra.mrb[0].mxu0 %v2763
        %v2867 = vpop.f32.mrb[0].mxu0
        %v2868 = vadd.f32 %v2731, %v2867
        %v2869 = vpop.f32.mrb[0].mxu0
        %v2870 = vpop.f32.mrb[0].mxu0
        %v2871 = vadd.f32 %v2734, %v2870
        %v2872 = vpop.f32.mrb[0].mxu0
        %2873 = vmatprep.mubr.bf16.mxu0 0
        %2874 = vmatmul.mubr.bf16.gmra.mrb[0].mxu0 %v2764
        %v2875 = vpop.f32.mrb[0].mxu0
        %v2876 = vadd.f32 %v2739, %v2875
        %v2877 = vpop.f32.mrb[0].mxu0
        %v2878 = vpop.f32.mrb[0].mxu0
        %v2879 = vadd.f32 %v2742, %v2878
        %v2880 = vpop.f32.mrb[0].mxu0
        %2881 = vdwg.mxu0
        %v2882 = vld [vmem:[#allocation2] sm:$0xe]
        %v2883 = vld [vmem:[#allocation2 + $0x8] sm:$0xe]
        %v2884 = vld [vmem:[#allocation2 + $0x10] sm:$0xe]
        %v2885 = vld [vmem:[#allocation2 + $0x18] sm:$0xe]
        %v2886 = vld [vmem:[#allocation2 + $0x20] sm:$0xe]
        %v2887 = vld [vmem:[#allocation2 + $0x28] sm:$0xe]
        %v2888 = vld [vmem:[#allocation2 + $0x30] sm:$0xe]
        %v2889 = vld [vmem:[#allocation2 + $0x38] sm:$0xe]
        %vm2906 = vcmask 1042432
        %vm2907 = vcmask 1046532
        %vm2908 = vmor %vm2906, %vm2907
        %v2909 = vrot.slane %v2882, 5
        %v2910 = vrot.slane %v2909, 4
        %v2911 = vrot.slane %v2480, 5
        %v2912 = vsel %vm2908, %v2910, %v2911
        %v2913 = vrot.slane %v2883, 5
        %v2914 = vrot.slane %v2913, 4
        %v2915 = vrot.slane %v2481, 5
        %v2916 = vsel %vm2908, %v2914, %v2915
        %v2917 = vrot.slane %v2884, 5
        %v2918 = vrot.slane %v2917, 4
        %v2919 = vrot.slane %v2482, 5
        %v2920 = vsel %vm2908, %v2918, %v2919
        %v2921 = vrot.slane %v2885, 5
        %v2922 = vrot.slane %v2921, 4
        %v2923 = vrot.slane %v2483, 5
        %v2924 = vsel %vm2908, %v2922, %v2923
        %v2925 = vrot.slane %v2886, 5
        %v2926 = vrot.slane %v2925, 4
        %v2927 = vrot.slane %v2484, 5
        %v2928 = vsel %vm2908, %v2926, %v2927
        %v2929 = vrot.slane %v2887, 5
        %v2930 = vrot.slane %v2929, 4
        %v2931 = vrot.slane %v2485, 5
        %v2932 = vsel %vm2908, %v2930, %v2931
        %v2933 = vrot.slane %v2888, 5
        %v2934 = vrot.slane %v2933, 4
        %v2935 = vrot.slane %v2486, 5
        %v2936 = vsel %vm2908, %v2934, %v2935
        %v2937 = vrot.slane %v2889, 5
        %v2938 = vrot.slane %v2937, 4
        %v2939 = vrot.slane %v2487, 5
        %v2940 = vsel %vm2908, %v2938, %v2939
        %v2941 = vld [vmem:[%s3 + $0x80] sm:$0xf]
        %v2942 = vld [vmem:[%s3 + $0x84] sm:$0xf]
        %v2943 = vld [vmem:[%s3 + $0x88] sm:$0xf]
        %v2944 = vld [vmem:[%s3 + $0x8c] sm:$0xf]
        %v2945 = vld [vmem:[%s3 + $0x90] sm:$0xf]
        %v2946 = vld [vmem:[%s3 + $0x94] sm:$0xf]
        %v2947 = vld [vmem:[%s3 + $0x98] sm:$0xf]
        %v2948 = vld [vmem:[%s3 + $0x9c] sm:$0xf]
        %v2949 = vld [vmem:[%s3 + $0xa0] sm:$0xf]
        %v2950 = vld [vmem:[%s3 + $0xa4] sm:$0xf]
        %v2951 = vld [vmem:[%s3 + $0xa8] sm:$0xf]
        %v2952 = vld [vmem:[%s3 + $0xac] sm:$0xf]
        %v2953 = vld [vmem:[%s3 + $0xb0] sm:$0xf]
        %v2954 = vld [vmem:[%s3 + $0xb4] sm:$0xf]
        %v2955 = vld [vmem:[%s3 + $0xb8] sm:$0xf]
        %v2956 = vld [vmem:[%s3 + $0xbc] sm:$0xf]
        %v2957 = vunpack.c.l.b16 %v2912
        %v2958 = vunpack.c.l.b16 %v2916
        %v2959 = vunpack.c.l.b16 %v2920
        %v2960 = vunpack.c.l.b16 %v2924
        %v2961 = vunpack.c.l.b16 %v2928
        %v2962 = vunpack.c.l.b16 %v2932
        %v2963 = vunpack.c.l.b16 %v2936
        %v2964 = vunpack.c.l.b16 %v2940
        %v2965 = vpack.c.b16 %v2958, %v2957
        %v2966 = vpack.c.b16 %v2960, %v2959
        %v2967 = vpack.c.b16 %v2962, %v2961
        %v2968 = vpack.c.b16 %v2964, %v2963
        %v2989 = vunpack.c.l.b16 %v2941
        %v2990 = vunpack.c.l.b16 %v2942
        %v2991 = vunpack.c.l.b16 %v2943
        %v2992 = vunpack.c.l.b16 %v2944
        %v2993 = vunpack.c.l.b16 %v2945
        %v2994 = vunpack.c.l.b16 %v2946
        %v2995 = vunpack.c.l.b16 %v2947
        %v2996 = vunpack.c.l.b16 %v2948
        %v2997 = vunpack.c.l.b16 %v2949
        %v2998 = vunpack.c.l.b16 %v2950
        %v2999 = vunpack.c.l.b16 %v2951
        %v3000 = vunpack.c.l.b16 %v2952
        %v3001 = vunpack.c.l.b16 %v2953
        %v3002 = vunpack.c.l.b16 %v2954
        %v3003 = vunpack.c.l.b16 %v2955
        %v3004 = vunpack.c.l.b16 %v2956
        %v3005 = vpack.c.b16 %v2990, %v2989
        %v3006 = vpack.c.b16 %v2992, %v2991
        %v3007 = vpack.c.b16 %v2994, %v2993
        %v3008 = vpack.c.b16 %v2996, %v2995
        %v3009 = vpack.c.b16 %v2998, %v2997
        %v3010 = vpack.c.b16 %v3000, %v2999
        %v3011 = vpack.c.b16 %v3002, %v3001
        %v3012 = vpack.c.b16 %v3004, %v3003
        %3021 = vmatprep.subr.bf16.mxu0 0
        %3022 = vmatpush1.bf16.msra.mxu0 %v3005
        %3023 = vmatprep.subr.bf16.mxu0 0
        %3024 = vmatpush1.bf16.msra.mxu0 %v3006
        %3025 = vmatprep.subr.bf16.mxu0 0
        %3026 = vmatpush1.bf16.msra.mxu0 %v3007
        %3027 = vmatprep.subr.bf16.mxu0 0
        %3028 = vmatpush1.bf16.msra.mxu0 %v3008
        %3029 = vmatprep.subr.bf16.mxu0 0
        %3030 = vmatpush1.bf16.msra.mxu0 %v3009
        %3031 = vmatprep.subr.bf16.mxu0 0
        %3032 = vmatpush1.bf16.msra.mxu0 %v3010
        %3033 = vmatprep.subr.bf16.mxu0 0
        %3034 = vmatpush1.bf16.msra.mxu0 %v3011
        %3035 = vmatprep.subr.bf16.mxu0 0
        %3036 = vmatpush1.bf16.msra.mxu0 %v3012
        %3037 = vmatprep.subr.bf16.mxu0 0
        %3038 = vmatpush1.bf16.msra.mxu0 0
        %3039 = vmatprep.subr.bf16.mxu0 0
        %3040 = vmatpush1.bf16.msra.mxu0 0
        %3041 = vmatprep.subr.bf16.mxu0 0
        %3042 = vmatpush1.bf16.msra.mxu0 0
        %3043 = vmatprep.subr.bf16.mxu0 0
        %3044 = vmatpush1.bf16.msra.mxu0 0
        %3045 = vmatprep.subr.bf16.mxu0 0
        %3046 = vmatpush1.bf16.msra.mxu0 0
        %3047 = vmatprep.subr.bf16.mxu0 0
        %3048 = vmatpush1.bf16.msra.mxu0 0
        %3049 = vmatprep.subr.bf16.mxu0 0
        %3050 = vmatpush1.bf16.msra.mxu0 0
        %3051 = vmatprep.subr.bf16.mxu0 0
        %3052 = vmatpush1.bf16.msra.mxu0 0
        %3053 = vmatprep.mubr.bf16.mxu0 0
        %3054 = vmatmul.mubr.bf16.gmra.mrb[0].mxu0 %v2965
        %v3055 = vpop.f32.mrb[0].mxu0
        %v3056 = vadd.f32 0.0, %v3055
        %v3057 = vpop.f32.mrb[0].mxu0
        %v3058 = vpop.f32.mrb[0].mxu0
        %v3059 = vadd.f32 0.0, %v3058
        %v3060 = vpop.f32.mrb[0].mxu0
        %3061 = vmatprep.mubr.bf16.mxu0 0
        %3062 = vmatmul.mubr.bf16.gmra.mrb[0].mxu0 %v2966
        %v3063 = vpop.f32.mrb[0].mxu0
        %v3064 = vadd.f32 0.0, %v3063
        %v3065 = vpop.f32.mrb[0].mxu0
        %v3066 = vpop.f32.mrb[0].mxu0
        %v3067 = vadd.f32 0.0, %v3066
        %v3068 = vpop.f32.mrb[0].mxu0
        %3069 = vmatprep.mubr.bf16.mxu0 0
        %3070 = vmatmul.mubr.bf16.gmra.mrb[0].mxu0 %v2967
        %v3071 = vpop.f32.mrb[0].mxu0
        %v3072 = vadd.f32 0.0, %v3071
        %v3073 = vpop.f32.mrb[0].mxu0
        %v3074 = vpop.f32.mrb[0].mxu0
        %v3075 = vadd.f32 0.0, %v3074
        %v3076 = vpop.f32.mrb[0].mxu0
        %3077 = vmatprep.mubr.bf16.mxu0 0
        %3078 = vmatmul.mubr.bf16.gmra.mrb[0].mxu0 %v2968
        %v3079 = vpop.f32.mrb[0].mxu0
        %v3080 = vadd.f32 0.0, %v3079
        %v3081 = vpop.f32.mrb[0].mxu0
        %v3082 = vpop.f32.mrb[0].mxu0
        %v3083 = vadd.f32 0.0, %v3082
        %v3084 = vpop.f32.mrb[0].mxu0
        %3085 = vdwg.mxu0
        %v3086 = vadd.f32 %v2852, %v3056
        %v3087 = vadd.f32 %v2855, %v3059
        %v3088 = vadd.f32 %v2860, %v3064
        %v3089 = vadd.f32 %v2863, %v3067
        %v3090 = vadd.f32 %v2868, %v3072
        %v3091 = vadd.f32 %v2871, %v3075
        %v3092 = vadd.f32 %v2876, %v3080
        %v3093 = vadd.f32 %v2879, %v3083
        %v3094 = vld [vmem:[%s2401] sm:$0xf]
        %v3095 = vld [vmem:[%s2401 + $0x8] sm:$0xf]
        %v3096 = vld [vmem:[%s2401 + $0x10] sm:$0xf]
        %v3097 = vld [vmem:[%s2401 + $0x18] sm:$0xf]
        %v3098 = vld [vmem:[%s2401 + $0x20] sm:$0xf]
        %v3099 = vld [vmem:[%s2401 + $0x28] sm:$0xf]
        %v3100 = vld [vmem:[%s2401 + $0x30] sm:$0xf]
        %v3101 = vld [vmem:[%s2401 + $0x38] sm:$0xf]
        %v3102 = vld [vmem:[%s3 + $0xc0] sm:$0xf]
        %v3103 = vld [vmem:[%s3 + $0xc4] sm:$0xf]
        %v3104 = vld [vmem:[%s3 + $0xc8] sm:$0xf]
        %v3105 = vld [vmem:[%s3 + $0xcc] sm:$0xf]
        %v3106 = vld [vmem:[%s3 + $0xd0] sm:$0xf]
        %v3107 = vld [vmem:[%s3 + $0xd4] sm:$0xf]
        %v3108 = vld [vmem:[%s3 + $0xd8] sm:$0xf]
        %v3109 = vld [vmem:[%s3 + $0xdc] sm:$0xf]
        %v3110 = vld [vmem:[%s3 + $0xe0] sm:$0xf]
        %v3111 = vld [vmem:[%s3 + $0xe4] sm:$0xf]
        %v3112 = vld [vmem:[%s3 + $0xe8] sm:$0xf]
        %v3113 = vld [vmem:[%s3 + $0xec] sm:$0xf]
        %v3114 = vld [vmem:[%s3 + $0xf0] sm:$0xf]
        %v3115 = vld [vmem:[%s3 + $0xf4] sm:$0xf]
        %v3116 = vld [vmem:[%s3 + $0xf8] sm:$0xf]
        %v3117 = vld [vmem:[%s3 + $0xfc] sm:$0xf]
        %v3126 = vunpack.c.l.b16 %v3094
        %v3127 = vunpack.c.l.b16 %v3095
        %v3128 = vunpack.c.l.b16 %v3096
        %v3129 = vunpack.c.l.b16 %v3097
        %v3130 = vunpack.c.l.b16 %v3098
        %v3131 = vunpack.c.l.b16 %v3099
        %v3132 = vunpack.c.l.b16 %v3100
        %v3133 = vunpack.c.l.b16 %v3101
        %v3134 = vpack.c.b16 %v3127, %v3126
        %v3135 = vpack.c.b16 %v3129, %v3128
        %v3136 = vpack.c.b16 %v3131, %v3130
        %v3137 = vpack.c.b16 %v3133, %v3132
        %v3158 = vunpack.c.l.b16 %v3102
        %v3159 = vunpack.c.l.b16 %v3103
        %v3160 = vunpack.c.l.b16 %v3104
        %v3161 = vunpack.c.l.b16 %v3105
        %v3162 = vunpack.c.l.b16 %v3106
        %v3163 = vunpack.c.l.b16 %v3107
        %v3164 = vunpack.c.l.b16 %v3108
        %v3165 = vunpack.c.l.b16 %v3109
        %v3166 = vunpack.c.l.b16 %v3110
        %v3167 = vunpack.c.l.b16 %v3111
        %v3168 = vunpack.c.l.b16 %v3112
        %v3169 = vunpack.c.l.b16 %v3113
        %v3170 = vunpack.c.l.b16 %v3114
        %v3171 = vunpack.c.l.b16 %v3115
        %v3172 = vunpack.c.l.b16 %v3116
        %v3173 = vunpack.c.l.b16 %v3117
        %v3174 = vpack.c.b16 %v3159, %v3158
        %v3175 = vpack.c.b16 %v3161, %v3160
        %v3176 = vpack.c.b16 %v3163, %v3162
        %v3177 = vpack.c.b16 %v3165, %v3164
        %v3178 = vpack.c.b16 %v3167, %v3166
        %v3179 = vpack.c.b16 %v3169, %v3168
        %v3180 = vpack.c.b16 %v3171, %v3170
        %v3181 = vpack.c.b16 %v3173, %v3172
        %3190 = vmatprep.subr.bf16.mxu0 0
        %3191 = vmatpush1.bf16.msra.mxu0 %v3174
        %3192 = vmatprep.subr.bf16.mxu0 0
        %3193 = vmatpush1.bf16.msra.mxu0 %v3175
        %3194 = vmatprep.subr.bf16.mxu0 0
        %3195 = vmatpush1.bf16.msra.mxu0 %v3176
        %3196 = vmatprep.subr.bf16.mxu0 0
        %3197 = vmatpush1.bf16.msra.mxu0 %v3177
        %3198 = vmatprep.subr.bf16.mxu0 0
        %3199 = vmatpush1.bf16.msra.mxu0 %v3178
        %3200 = vmatprep.subr.bf16.mxu0 0
        %3201 = vmatpush1.bf16.msra.mxu0 %v3179
        %3202 = vmatprep.subr.bf16.mxu0 0
        %3203 = vmatpush1.bf16.msra.mxu0 %v3180
        %3204 = vmatprep.subr.bf16.mxu0 0
        %3205 = vmatpush1.bf16.msra.mxu0 %v3181
        %3206 = vmatprep.subr.bf16.mxu0 0
        %3207 = vmatpush1.bf16.msra.mxu0 0
        %3208 = vmatprep.subr.bf16.mxu0 0
        %3209 = vmatpush1.bf16.msra.mxu0 0
        %3210 = vmatprep.subr.bf16.mxu0 0
        %3211 = vmatpush1.bf16.msra.mxu0 0
        %3212 = vmatprep.subr.bf16.mxu0 0
        %3213 = vmatpush1.bf16.msra.mxu0 0
        %3214 = vmatprep.subr.bf16.mxu0 0
        %3215 = vmatpush1.bf16.msra.mxu0 0
        %3216 = vmatprep.subr.bf16.mxu0 0
        %3217 = vmatpush1.bf16.msra.mxu0 0
        %3218 = vmatprep.subr.bf16.mxu0 0
        %3219 = vmatpush1.bf16.msra.mxu0 0
        %3220 = vmatprep.subr.bf16.mxu0 0
        %3221 = vmatpush1.bf16.msra.mxu0 0
        %3222 = vmatprep.mubr.bf16.mxu0 0
        %3223 = vmatmul.mubr.bf16.gmra.mrb[0].mxu0 %v3134
        %v3224 = vpop.f32.mrb[0].mxu0
        %v3225 = vadd.f32 0.0, %v3224
        %v3226 = vpop.f32.mrb[0].mxu0
        %v3227 = vpop.f32.mrb[0].mxu0
        %v3228 = vadd.f32 0.0, %v3227
        %v3229 = vpop.f32.mrb[0].mxu0
        %3230 = vmatprep.mubr.bf16.mxu0 0
        %3231 = vmatmul.mubr.bf16.gmra.mrb[0].mxu0 %v3135
        %v3232 = vpop.f32.mrb[0].mxu0
        %v3233 = vadd.f32 0.0, %v3232
        %v3234 = vpop.f32.mrb[0].mxu0
        %v3235 = vpop.f32.mrb[0].mxu0
        %v3236 = vadd.f32 0.0, %v3235
        %v3237 = vpop.f32.mrb[0].mxu0
        %3238 = vmatprep.mubr.bf16.mxu0 0
        %3239 = vmatmul.mubr.bf16.gmra.mrb[0].mxu0 %v3136
        %v3240 = vpop.f32.mrb[0].mxu0
        %v3241 = vadd.f32 0.0, %v3240
        %v3242 = vpop.f32.mrb[0].mxu0
        %v3243 = vpop.f32.mrb[0].mxu0
        %v3244 = vadd.f32 0.0, %v3243
        %v3245 = vpop.f32.mrb[0].mxu0
        %3246 = vmatprep.mubr.bf16.mxu0 0
        %3247 = vmatmul.mubr.bf16.gmra.mrb[0].mxu0 %v3137
        %v3248 = vpop.f32.mrb[0].mxu0
        %v3249 = vadd.f32 0.0, %v3248
        %v3250 = vpop.f32.mrb[0].mxu0
        %v3251 = vpop.f32.mrb[0].mxu0
        %v3252 = vadd.f32 0.0, %v3251
        %v3253 = vpop.f32.mrb[0].mxu0
        %3254 = vdwg.mxu0
        %v3255 = vadd.f32 %v3086, %v3225
        %v3256 = vadd.f32 %v3087, %v3228
        %v3257 = vadd.f32 %v3088, %v3233
        %v3258 = vadd.f32 %v3089, %v3236
        %v3259 = vadd.f32 %v3090, %v3241
        %v3260 = vadd.f32 %v3091, %v3244
        %v3261 = vadd.f32 %v3092, %v3249
        %v3262 = vadd.f32 %v3093, %v3252
        %v3263 = vld [vmem:[%s2401] sm:$0xf]
        %v3264 = vld [vmem:[%s2401 + $0x4] sm:$0x1]
        %v3265 = vld [vmem:[%s2401 + $0x8] sm:$0xf]
        %v3266 = vld [vmem:[%s2401 + $0xc] sm:$0x1]
        %v3267 = vld [vmem:[%s2401 + $0x10] sm:$0xf]
        %v3268 = vld [vmem:[%s2401 + $0x14] sm:$0x1]
        %v3269 = vld [vmem:[%s2401 + $0x18] sm:$0xf]
        %v3270 = vld [vmem:[%s2401 + $0x1c] sm:$0x1]
        %v3271 = vld [vmem:[%s2401 + $0x20] sm:$0xf]
        %v3272 = vld [vmem:[%s2401 + $0x24] sm:$0x1]
        %v3273 = vld [vmem:[%s2401 + $0x28] sm:$0xf]
        %v3274 = vld [vmem:[%s2401 + $0x2c] sm:$0x1]
        %v3275 = vld [vmem:[%s2401 + $0x30] sm:$0xf]
        %v3276 = vld [vmem:[%s2401 + $0x34] sm:$0x1]
        %v3277 = vld [vmem:[%s2401 + $0x38] sm:$0xf]
        %v3278 = vld [vmem:[%s2401 + $0x3c] sm:$0x1]
        %v3280 = vshrl.u32 %v3263, 16
        %v3282 = vrot.slane %v3280, 4
        %v3283 = vshll.u32 %v3263, 16
        %v3285 = vrot.slane %v3283, 5
        %v3286 = vor.u32 %v3282, %v3285
        %v3287 = vrot.slane %v3286, 4
        %v3289 = vshll.u32 %v3264, 16
        %v3291 = vrot.slane %v3289, 5
        %v3292 = vsel %vm898, %v3287, %v3291
        %v3294 = vshrl.u32 %v3265, 16
        %v3296 = vrot.slane %v3294, 4
        %v3297 = vshll.u32 %v3265, 16
        %v3299 = vrot.slane %v3297, 5
        %v3300 = vor.u32 %v3296, %v3299
        %v3301 = vrot.slane %v3300, 4
        %v3303 = vshll.u32 %v3266, 16
        %v3305 = vrot.slane %v3303, 5
        %v3306 = vsel %vm898, %v3301, %v3305
        %v3308 = vshrl.u32 %v3267, 16
        %v3310 = vrot.slane %v3308, 4
        %v3311 = vshll.u32 %v3267, 16
        %v3313 = vrot.slane %v3311, 5
        %v3314 = vor.u32 %v3310, %v3313
        %v3315 = vrot.slane %v3314, 4
        %v3317 = vshll.u32 %v3268, 16
        %v3319 = vrot.slane %v3317, 5
        %v3320 = vsel %vm898, %v3315, %v3319
        %v3322 = vshrl.u32 %v3269, 16
        %v3324 = vrot.slane %v3322, 4
        %v3325 = vshll.u32 %v3269, 16
        %v3327 = vrot.slane %v3325, 5
        %v3328 = vor.u32 %v3324, %v3327
        %v3329 = vrot.slane %v3328, 4
        %v3331 = vshll.u32 %v3270, 16
        %v3333 = vrot.slane %v3331, 5
        %v3334 = vsel %vm898, %v3329, %v3333
        %v3336 = vshrl.u32 %v3271, 16
        %v3338 = vrot.slane %v3336, 4
        %v3339 = vshll.u32 %v3271, 16
        %v3341 = vrot.slane %v3339, 5
        %v3342 = vor.u32 %v3338, %v3341
        %v3343 = vrot.slane %v3342, 4
        %v3345 = vshll.u32 %v3272, 16
        %v3347 = vrot.slane %v3345, 5
        %v3348 = vsel %vm898, %v3343, %v3347
        %v3350 = vshrl.u32 %v3273, 16
        %v3352 = vrot.slane %v3350, 4
        %v3353 = vshll.u32 %v3273, 16
        %v3355 = vrot.slane %v3353, 5
        %v3356 = vor.u32 %v3352, %v3355
        %v3357 = vrot.slane %v3356, 4
        %v3359 = vshll.u32 %v3274, 16
        %v3361 = vrot.slane %v3359, 5
        %v3362 = vsel %vm898, %v3357, %v3361
        %v3364 = vshrl.u32 %v3275, 16
        %v3366 = vrot.slane %v3364, 4
        %v3367 = vshll.u32 %v3275, 16
        %v3369 = vrot.slane %v3367, 5
        %v3370 = vor.u32 %v3366, %v3369
        %v3371 = vrot.slane %v3370, 4
        %v3373 = vshll.u32 %v3276, 16
        %v3375 = vrot.slane %v3373, 5
        %v3376 = vsel %vm898, %v3371, %v3375
        %v3378 = vshrl.u32 %v3277, 16
        %v3380 = vrot.slane %v3378, 4
        %v3381 = vshll.u32 %v3277, 16
        %v3383 = vrot.slane %v3381, 5
        %v3384 = vor.u32 %v3380, %v3383
        %v3385 = vrot.slane %v3384, 4
        %v3387 = vshll.u32 %v3278, 16
        %v3389 = vrot.slane %v3387, 5
        %v3390 = vsel %vm898, %v3385, %v3389
        %v3391 = vld [vmem:[%s3 + $0x100] sm:$0xf]
        %v3392 = vld [vmem:[%s3 + $0x104] sm:$0xf]
        %v3393 = vld [vmem:[%s3 + $0x108] sm:$0xf]
        %v3394 = vld [vmem:[%s3 + $0x10c] sm:$0xf]
        %v3395 = vld [vmem:[%s3 + $0x110] sm:$0xf]
        %v3396 = vld [vmem:[%s3 + $0x114] sm:$0xf]
        %v3397 = vld [vmem:[%s3 + $0x118] sm:$0xf]
        %v3398 = vld [vmem:[%s3 + $0x11c] sm:$0xf]
        %v3399 = vld [vmem:[%s3 + $0x120] sm:$0xf]
        %v3400 = vld [vmem:[%s3 + $0x124] sm:$0xf]
        %v3401 = vld [vmem:[%s3 + $0x128] sm:$0xf]
        %v3402 = vld [vmem:[%s3 + $0x12c] sm:$0xf]
        %v3403 = vld [vmem:[%s3 + $0x130] sm:$0xf]
        %v3404 = vld [vmem:[%s3 + $0x134] sm:$0xf]
        %v3405 = vld [vmem:[%s3 + $0x138] sm:$0xf]
        %v3406 = vld [vmem:[%s3 + $0x13c] sm:$0xf]
        %v3407 = vunpack.c.l.b16 %v3292
        %v3408 = vunpack.c.l.b16 %v3306
        %v3409 = vunpack.c.l.b16 %v3320
        %v3410 = vunpack.c.l.b16 %v3334
        %v3411 = vunpack.c.l.b16 %v3348
        %v3412 = vunpack.c.l.b16 %v3362
        %v3413 = vunpack.c.l.b16 %v3376
        %v3414 = vunpack.c.l.b16 %v3390
        %v3415 = vpack.c.b16 %v3408, %v3407
        %v3416 = vpack.c.b16 %v3410, %v3409
        %v3417 = vpack.c.b16 %v3412, %v3411
        %v3418 = vpack.c.b16 %v3414, %v3413
        %v3439 = vunpack.c.l.b16 %v3391
        %v3440 = vunpack.c.l.b16 %v3392
        %v3441 = vunpack.c.l.b16 %v3393
        %v3442 = vunpack.c.l.b16 %v3394
        %v3443 = vunpack.c.l.b16 %v3395
        %v3444 = vunpack.c.l.b16 %v3396
        %v3445 = vunpack.c.l.b16 %v3397
        %v3446 = vunpack.c.l.b16 %v3398
        %v3447 = vunpack.c.l.b16 %v3399
        %v3448 = vunpack.c.l.b16 %v3400
        %v3449 = vunpack.c.l.b16 %v3401
        %v3450 = vunpack.c.l.b16 %v3402
        %v3451 = vunpack.c.l.b16 %v3403
        %v3452 = vunpack.c.l.b16 %v3404
        %v3453 = vunpack.c.l.b16 %v3405
        %v3454 = vunpack.c.l.b16 %v3406
        %v3455 = vpack.c.b16 %v3440, %v3439
        %v3456 = vpack.c.b16 %v3442, %v3441
        %v3457 = vpack.c.b16 %v3444, %v3443
        %v3458 = vpack.c.b16 %v3446, %v3445
        %v3459 = vpack.c.b16 %v3448, %v3447
        %v3460 = vpack.c.b16 %v3450, %v3449
        %v3461 = vpack.c.b16 %v3452, %v3451
        %v3462 = vpack.c.b16 %v3454, %v3453
        %3471 = vmatprep.subr.bf16.mxu0 0
        %3472 = vmatpush1.bf16.msra.mxu0 %v3455
        %3473 = vmatprep.subr.bf16.mxu0 0
        %3474 = vmatpush1.bf16.msra.mxu0 %v3456
        %3475 = vmatprep.subr.bf16.mxu0 0
        %3476 = vmatpush1.bf16.msra.mxu0 %v3457
        %3477 = vmatprep.subr.bf16.mxu0 0
        %3478 = vmatpush1.bf16.msra.mxu0 %v3458
        %3479 = vmatprep.subr.bf16.mxu0 0
        %3480 = vmatpush1.bf16.msra.mxu0 %v3459
        %3481 = vmatprep.subr.bf16.mxu0 0
        %3482 = vmatpush1.bf16.msra.mxu0 %v3460
        %3483 = vmatprep.subr.bf16.mxu0 0
        %3484 = vmatpush1.bf16.msra.mxu0 %v3461
        %3485 = vmatprep.subr.bf16.mxu0 0
        %3486 = vmatpush1.bf16.msra.mxu0 %v3462
        %3487 = vmatprep.subr.bf16.mxu0 0
        %3488 = vmatpush1.bf16.msra.mxu0 0
        %3489 = vmatprep.subr.bf16.mxu0 0
        %3490 = vmatpush1.bf16.msra.mxu0 0
        %3491 = vmatprep.subr.bf16.mxu0 0
        %3492 = vmatpush1.bf16.msra.mxu0 0
        %3493 = vmatprep.subr.bf16.mxu0 0
        %3494 = vmatpush1.bf16.msra.mxu0 0
        %3495 = vmatprep.subr.bf16.mxu0 0
        %3496 = vmatpush1.bf16.msra.mxu0 0
        %3497 = vmatprep.subr.bf16.mxu0 0
        %3498 = vmatpush1.bf16.msra.mxu0 0
        %3499 = vmatprep.subr.bf16.mxu0 0
        %3500 = vmatpush1.bf16.msra.mxu0 0
        %3501 = vmatprep.subr.bf16.mxu0 0
        %3502 = vmatpush1.bf16.msra.mxu0 0
        %3503 = vmatprep.mubr.bf16.mxu0 0
        %3504 = vmatmul.mubr.bf16.gmra.mrb[0].mxu0 %v3415
        %v3505 = vpop.f32.mrb[0].mxu0
        %v3506 = vadd.f32 0.0, %v3505
        %v3507 = vpop.f32.mrb[0].mxu0
        %v3508 = vpop.f32.mrb[0].mxu0
        %v3509 = vadd.f32 0.0, %v3508
        %v3510 = vpop.f32.mrb[0].mxu0
        %3511 = vmatprep.mubr.bf16.mxu0 0
        %3512 = vmatmul.mubr.bf16.gmra.mrb[0].mxu0 %v3416
        %v3513 = vpop.f32.mrb[0].mxu0
        %v3514 = vadd.f32 0.0, %v3513
        %v3515 = vpop.f32.mrb[0].mxu0
        %v3516 = vpop.f32.mrb[0].mxu0
        %v3517 = vadd.f32 0.0, %v3516
        %v3518 = vpop.f32.mrb[0].mxu0
        %3519 = vmatprep.mubr.bf16.mxu0 0
        %3520 = vmatmul.mubr.bf16.gmra.mrb[0].mxu0 %v3417
        %v3521 = vpop.f32.mrb[0].mxu0
        %v3522 = vadd.f32 0.0, %v3521
        %v3523 = vpop.f32.mrb[0].mxu0
        %v3524 = vpop.f32.mrb[0].mxu0
        %v3525 = vadd.f32 0.0, %v3524
        %v3526 = vpop.f32.mrb[0].mxu0
        %3527 = vmatprep.mubr.bf16.mxu0 0
        %3528 = vmatmul.mubr.bf16.gmra.mrb[0].mxu0 %v3418
        %v3529 = vpop.f32.mrb[0].mxu0
        %v3530 = vadd.f32 0.0, %v3529
        %v3531 = vpop.f32.mrb[0].mxu0
        %v3532 = vpop.f32.mrb[0].mxu0
        %v3533 = vadd.f32 0.0, %v3532
        %v3534 = vpop.f32.mrb[0].mxu0
        %3535 = vdwg.mxu0
        %v3536 = vadd.f32 %v3255, %v3506
        %v3537 = vadd.f32 %v3256, %v3509
        %v3538 = vadd.f32 %v3257, %v3514
        %v3539 = vadd.f32 %v3258, %v3517
        %v3540 = vadd.f32 %v3259, %v3522
        %v3541 = vadd.f32 %v3260, %v3525
        %v3542 = vadd.f32 %v3261, %v3530
        %v3543 = vadd.f32 %v3262, %v3533
        %v3544 = vld [vmem:[%s2401] sm:$0xe]
        %v3545 = vld [vmem:[%s2401 + $0x8] sm:$0xe]
        %v3546 = vld [vmem:[%s2401 + $0x10] sm:$0xe]
        %v3547 = vld [vmem:[%s2401 + $0x18] sm:$0xe]
        %v3548 = vld [vmem:[%s2401 + $0x20] sm:$0xe]
        %v3549 = vld [vmem:[%s2401 + $0x28] sm:$0xe]
        %v3550 = vld [vmem:[%s2401 + $0x30] sm:$0xe]
        %v3551 = vld [vmem:[%s2401 + $0x38] sm:$0xe]
        %v3568 = vrot.slane %v3544, 5
        %v3569 = vrot.slane %v3568, 4
        %v3570 = vrot.slane %v3264, 5
        %v3571 = vsel %vm2908, %v3569, %v3570
        %v3572 = vrot.slane %v3545, 5
        %v3573 = vrot.slane %v3572, 4
        %v3574 = vrot.slane %v3266, 5
        %v3575 = vsel %vm2908, %v3573, %v3574
        %v3576 = vrot.slane %v3546, 5
        %v3577 = vrot.slane %v3576, 4
        %v3578 = vrot.slane %v3268, 5
        %v3579 = vsel %vm2908, %v3577, %v3578
        %v3580 = vrot.slane %v3547, 5
        %v3581 = vrot.slane %v3580, 4
        %v3582 = vrot.slane %v3270, 5
        %v3583 = vsel %vm2908, %v3581, %v3582
        %v3584 = vrot.slane %v3548, 5
        %v3585 = vrot.slane %v3584, 4
        %v3586 = vrot.slane %v3272, 5
        %v3587 = vsel %vm2908, %v3585, %v3586
        %v3588 = vrot.slane %v3549, 5
        %v3589 = vrot.slane %v3588, 4
        %v3590 = vrot.slane %v3274, 5
        %v3591 = vsel %vm2908, %v3589, %v3590
        %v3592 = vrot.slane %v3550, 5
        %v3593 = vrot.slane %v3592, 4
        %v3594 = vrot.slane %v3276, 5
        %v3595 = vsel %vm2908, %v3593, %v3594
        %v3596 = vrot.slane %v3551, 5
        %v3597 = vrot.slane %v3596, 4
        %v3598 = vrot.slane %v3278, 5
        %v3599 = vsel %vm2908, %v3597, %v3598
        %v3600 = vld [vmem:[%s3 + $0x140] sm:$0xf]
        %v3601 = vld [vmem:[%s3 + $0x144] sm:$0xf]
        %v3602 = vld [vmem:[%s3 + $0x148] sm:$0xf]
        %v3603 = vld [vmem:[%s3 + $0x14c] sm:$0xf]
        %v3604 = vld [vmem:[%s3 + $0x150] sm:$0xf]
        %v3605 = vld [vmem:[%s3 + $0x154] sm:$0xf]
        %v3606 = vld [vmem:[%s3 + $0x158] sm:$0xf]
        %v3607 = vld [vmem:[%s3 + $0x15c] sm:$0xf]
        %v3608 = vld [vmem:[%s3 + $0x160] sm:$0xf]
        %v3609 = vld [vmem:[%s3 + $0x164] sm:$0xf]
        %v3610 = vld [vmem:[%s3 + $0x168] sm:$0xf]
        %v3611 = vld [vmem:[%s3 + $0x16c] sm:$0xf]
        %v3612 = vld [vmem:[%s3 + $0x170] sm:$0xf]
        %v3613 = vld [vmem:[%s3 + $0x174] sm:$0xf]
        %v3614 = vld [vmem:[%s3 + $0x178] sm:$0xf]
        %v3615 = vld [vmem:[%s3 + $0x17c] sm:$0xf]
        %v3616 = vunpack.c.l.b16 %v3571
        %v3617 = vunpack.c.l.b16 %v3575
        %v3618 = vunpack.c.l.b16 %v3579
        %v3619 = vunpack.c.l.b16 %v3583
        %v3620 = vunpack.c.l.b16 %v3587
        %v3621 = vunpack.c.l.b16 %v3591
        %v3622 = vunpack.c.l.b16 %v3595
        %v3623 = vunpack.c.l.b16 %v3599
        %v3624 = vpack.c.b16 %v3617, %v3616
        %v3625 = vpack.c.b16 %v3619, %v3618
        %v3626 = vpack.c.b16 %v3621, %v3620
        %v3627 = vpack.c.b16 %v3623, %v3622
        %v3648 = vunpack.c.l.b16 %v3600
        %v3649 = vunpack.c.l.b16 %v3601
        %v3650 = vunpack.c.l.b16 %v3602
        %v3651 = vunpack.c.l.b16 %v3603
        %v3652 = vunpack.c.l.b16 %v3604
        %v3653 = vunpack.c.l.b16 %v3605
        %v3654 = vunpack.c.l.b16 %v3606
        %v3655 = vunpack.c.l.b16 %v3607
        %v3656 = vunpack.c.l.b16 %v3608
        %v3657 = vunpack.c.l.b16 %v3609
        %v3658 = vunpack.c.l.b16 %v3610
        %v3659 = vunpack.c.l.b16 %v3611
        %v3660 = vunpack.c.l.b16 %v3612
        %v3661 = vunpack.c.l.b16 %v3613
        %v3662 = vunpack.c.l.b16 %v3614
        %v3663 = vunpack.c.l.b16 %v3615
        %v3664 = vpack.c.b16 %v3649, %v3648
        %v3665 = vpack.c.b16 %v3651, %v3650
        %v3666 = vpack.c.b16 %v3653, %v3652
        %v3667 = vpack.c.b16 %v3655, %v3654
        %v3668 = vpack.c.b16 %v3657, %v3656
        %v3669 = vpack.c.b16 %v3659, %v3658
        %v3670 = vpack.c.b16 %v3661, %v3660
        %v3671 = vpack.c.b16 %v3663, %v3662
        %3680 = vmatprep.subr.bf16.mxu0 0
        %3681 = vmatpush1.bf16.msra.mxu0 %v3664
        %3682 = vmatprep.subr.bf16.mxu0 0
        %3683 = vmatpush1.bf16.msra.mxu0 %v3665
        %3684 = vmatprep.subr.bf16.mxu0 0
        %3685 = vmatpush1.bf16.msra.mxu0 %v3666
        %3686 = vmatprep.subr.bf16.mxu0 0
        %3687 = vmatpush1.bf16.msra.mxu0 %v3667
        %3688 = vmatprep.subr.bf16.mxu0 0
        %3689 = vmatpush1.bf16.msra.mxu0 %v3668
        %3690 = vmatprep.subr.bf16.mxu0 0
        %3691 = vmatpush1.bf16.msra.mxu0 %v3669
        %3692 = vmatprep.subr.bf16.mxu0 0
        %3693 = vmatpush1.bf16.msra.mxu0 %v3670
        %3694 = vmatprep.subr.bf16.mxu0 0
        %3695 = vmatpush1.bf16.msra.mxu0 %v3671
        %3696 = vmatprep.subr.bf16.mxu0 0
        %3697 = vmatpush1.bf16.msra.mxu0 0
        %3698 = vmatprep.subr.bf16.mxu0 0
        %3699 = vmatpush1.bf16.msra.mxu0 0
        %3700 = vmatprep.subr.bf16.mxu0 0
        %3701 = vmatpush1.bf16.msra.mxu0 0
        %3702 = vmatprep.subr.bf16.mxu0 0
        %3703 = vmatpush1.bf16.msra.mxu0 0
        %3704 = vmatprep.subr.bf16.mxu0 0
        %3705 = vmatpush1.bf16.msra.mxu0 0
        %3706 = vmatprep.subr.bf16.mxu0 0
        %3707 = vmatpush1.bf16.msra.mxu0 0
        %3708 = vmatprep.subr.bf16.mxu0 0
        %3709 = vmatpush1.bf16.msra.mxu0 0
        %3710 = vmatprep.subr.bf16.mxu0 0
        %3711 = vmatpush1.bf16.msra.mxu0 0
        %3712 = vmatprep.mubr.bf16.mxu0 0
        %3713 = vmatmul.mubr.bf16.gmra.mrb[0].mxu0 %v3624
        %v3714 = vpop.f32.mrb[0].mxu0
        %v3715 = vadd.f32 0.0, %v3714
        %v3716 = vpop.f32.mrb[0].mxu0
        %v3717 = vpop.f32.mrb[0].mxu0
        %v3718 = vadd.f32 0.0, %v3717
        %v3719 = vpop.f32.mrb[0].mxu0
        %3720 = vmatprep.mubr.bf16.mxu0 0
        %3721 = vmatmul.mubr.bf16.gmra.mrb[0].mxu0 %v3625
        %v3722 = vpop.f32.mrb[0].mxu0
        %v3723 = vadd.f32 0.0, %v3722
        %v3724 = vpop.f32.mrb[0].mxu0
        %v3725 = vpop.f32.mrb[0].mxu0
        %v3726 = vadd.f32 0.0, %v3725
        %v3727 = vpop.f32.mrb[0].mxu0
        %3728 = vmatprep.mubr.bf16.mxu0 0
        %3729 = vmatmul.mubr.bf16.gmra.mrb[0].mxu0 %v3626
        %v3730 = vpop.f32.mrb[0].mxu0
        %v3731 = vadd.f32 0.0, %v3730
        %v3732 = vpop.f32.mrb[0].mxu0
        %v3733 = vpop.f32.mrb[0].mxu0
        %v3734 = vadd.f32 0.0, %v3733
        %v3735 = vpop.f32.mrb[0].mxu0
        %3736 = vmatprep.mubr.bf16.mxu0 0
        %3737 = vmatmul.mubr.bf16.gmra.mrb[0].mxu0 %v3627
        %v3738 = vpop.f32.mrb[0].mxu0
        %v3739 = vadd.f32 0.0, %v3738
        %v3740 = vpop.f32.mrb[0].mxu0
        %v3741 = vpop.f32.mrb[0].mxu0
        %v3742 = vadd.f32 0.0, %v3741
        %v3743 = vpop.f32.mrb[0].mxu0
        %3744 = vdwg.mxu0
        %v3745 = vadd.f32 %v3536, %v3715
        %v3746 = vadd.f32 %v3537, %v3718
        %v3747 = vadd.f32 %v3538, %v3723
        %v3748 = vadd.f32 %v3539, %v3726
        %v3749 = vadd.f32 %v3540, %v3731
        %v3750 = vadd.f32 %v3541, %v3734
        %v3751 = vadd.f32 %v3542, %v3739
        %v3752 = vadd.f32 %v3543, %v3742
        %s3753 = scalar_lea.vmem [#allocation2], 16
        %v3754 = vld [vmem:[%s3753] sm:$0xf]
        %v3755 = vld [vmem:[%s3753 + $0x8] sm:$0xf]
        %v3756 = vld [vmem:[%s3753 + $0x10] sm:$0xf]
        %v3757 = vld [vmem:[%s3753 + $0x18] sm:$0xf]
        %v3758 = vld [vmem:[%s3753 + $0x20] sm:$0xf]
        %v3759 = vld [vmem:[%s3753 + $0x28] sm:$0xf]
        %v3760 = vld [vmem:[%s3753 + $0x30] sm:$0xf]
        %v3761 = vld [vmem:[%s3753 + $0x38] sm:$0xf]
        %v3762 = vld [vmem:[%s3 + $0x180] sm:$0xf]
        %v3763 = vld [vmem:[%s3 + $0x184] sm:$0xf]
        %v3764 = vld [vmem:[%s3 + $0x188] sm:$0xf]
        %v3765 = vld [vmem:[%s3 + $0x18c] sm:$0xf]
        %v3766 = vld [vmem:[%s3 + $0x190] sm:$0xf]
        %v3767 = vld [vmem:[%s3 + $0x194] sm:$0xf]
        %v3768 = vld [vmem:[%s3 + $0x198] sm:$0xf]
        %v3769 = vld [vmem:[%s3 + $0x19c] sm:$0xf]
        %v3770 = vld [vmem:[%s3 + $0x1a0] sm:$0xf]
        %v3771 = vld [vmem:[%s3 + $0x1a4] sm:$0xf]
        %v3772 = vld [vmem:[%s3 + $0x1a8] sm:$0xf]
        %v3773 = vld [vmem:[%s3 + $0x1ac] sm:$0xf]
        %v3774 = vld [vmem:[%s3 + $0x1b0] sm:$0xf]
        %v3775 = vld [vmem:[%s3 + $0x1b4] sm:$0xf]
        %v3776 = vld [vmem:[%s3 + $0x1b8] sm:$0xf]
        %v3777 = vld [vmem:[%s3 + $0x1bc] sm:$0xf]
        %v3786 = vunpack.c.l.b16 %v3754
        %v3787 = vunpack.c.l.b16 %v3755
        %v3788 = vunpack.c.l.b16 %v3756
        %v3789 = vunpack.c.l.b16 %v3757
        %v3790 = vunpack.c.l.b16 %v3758
        %v3791 = vunpack.c.l.b16 %v3759
        %v3792 = vunpack.c.l.b16 %v3760
        %v3793 = vunpack.c.l.b16 %v3761
        %v3794 = vpack.c.b16 %v3787, %v3786
        %v3795 = vpack.c.b16 %v3789, %v3788
        %v3796 = vpack.c.b16 %v3791, %v3790
        %v3797 = vpack.c.b16 %v3793, %v3792
        %v3818 = vunpack.c.l.b16 %v3762
        %v3819 = vunpack.c.l.b16 %v3763
        %v3820 = vunpack.c.l.b16 %v3764
        %v3821 = vunpack.c.l.b16 %v3765
        %v3822 = vunpack.c.l.b16 %v3766
        %v3823 = vunpack.c.l.b16 %v3767
        %v3824 = vunpack.c.l.b16 %v3768
        %v3825 = vunpack.c.l.b16 %v3769
        %v3826 = vunpack.c.l.b16 %v3770
        %v3827 = vunpack.c.l.b16 %v3771
        %v3828 = vunpack.c.l.b16 %v3772
        %v3829 = vunpack.c.l.b16 %v3773
        %v3830 = vunpack.c.l.b16 %v3774
        %v3831 = vunpack.c.l.b16 %v3775
        %v3832 = vunpack.c.l.b16 %v3776
        %v3833 = vunpack.c.l.b16 %v3777
        %v3834 = vpack.c.b16 %v3819, %v3818
        %v3835 = vpack.c.b16 %v3821, %v3820
        %v3836 = vpack.c.b16 %v3823, %v3822
        %v3837 = vpack.c.b16 %v3825, %v3824
        %v3838 = vpack.c.b16 %v3827, %v3826
        %v3839 = vpack.c.b16 %v3829, %v3828
        %v3840 = vpack.c.b16 %v3831, %v3830
        %v3841 = vpack.c.b16 %v3833, %v3832
        %3850 = vmatprep.subr.bf16.mxu0 0
        %3851 = vmatpush1.bf16.msra.mxu0 %v3834
        %3852 = vmatprep.subr.bf16.mxu0 0
        %3853 = vmatpush1.bf16.msra.mxu0 %v3835
        %3854 = vmatprep.subr.bf16.mxu0 0
        %3855 = vmatpush1.bf16.msra.mxu0 %v3836
        %3856 = vmatprep.subr.bf16.mxu0 0
        %3857 = vmatpush1.bf16.msra.mxu0 %v3837
        %3858 = vmatprep.subr.bf16.mxu0 0
        %3859 = vmatpush1.bf16.msra.mxu0 %v3838
        %3860 = vmatprep.subr.bf16.mxu0 0
        %3861 = vmatpush1.bf16.msra.mxu0 %v3839
        %3862 = vmatprep.subr.bf16.mxu0 0
        %3863 = vmatpush1.bf16.msra.mxu0 %v3840
        %3864 = vmatprep.subr.bf16.mxu0 0
        %3865 = vmatpush1.bf16.msra.mxu0 %v3841
        %3866 = vmatprep.subr.bf16.mxu0 0
        %3867 = vmatpush1.bf16.msra.mxu0 0
        %3868 = vmatprep.subr.bf16.mxu0 0
        %3869 = vmatpush1.bf16.msra.mxu0 0
        %3870 = vmatprep.subr.bf16.mxu0 0
        %3871 = vmatpush1.bf16.msra.mxu0 0
        %3872 = vmatprep.subr.bf16.mxu0 0
        %3873 = vmatpush1.bf16.msra.mxu0 0
        %3874 = vmatprep.subr.bf16.mxu0 0
        %3875 = vmatpush1.bf16.msra.mxu0 0
        %3876 = vmatprep.subr.bf16.mxu0 0
        %3877 = vmatpush1.bf16.msra.mxu0 0
        %3878 = vmatprep.subr.bf16.mxu0 0
        %3879 = vmatpush1.bf16.msra.mxu0 0
        %3880 = vmatprep.subr.bf16.mxu0 0
        %3881 = vmatpush1.bf16.msra.mxu0 0
        %3882 = vmatprep.mubr.bf16.mxu0 0
        %3883 = vmatmul.mubr.bf16.gmra.mrb[0].mxu0 %v3794
        %v3884 = vpop.f32.mrb[0].mxu0
        %v3885 = vadd.f32 0.0, %v3884
        %v3886 = vpop.f32.mrb[0].mxu0
        %v3887 = vpop.f32.mrb[0].mxu0
        %v3888 = vadd.f32 0.0, %v3887
        %v3889 = vpop.f32.mrb[0].mxu0
        %3890 = vmatprep.mubr.bf16.mxu0 0
        %3891 = vmatmul.mubr.bf16.gmra.mrb[0].mxu0 %v3795
        %v3892 = vpop.f32.mrb[0].mxu0
        %v3893 = vadd.f32 0.0, %v3892
        %v3894 = vpop.f32.mrb[0].mxu0
        %v3895 = vpop.f32.mrb[0].mxu0
        %v3896 = vadd.f32 0.0, %v3895
        %v3897 = vpop.f32.mrb[0].mxu0
        %3898 = vmatprep.mubr.bf16.mxu0 0
        %3899 = vmatmul.mubr.bf16.gmra.mrb[0].mxu0 %v3796
        %v3900 = vpop.f32.mrb[0].mxu0
        %v3901 = vadd.f32 0.0, %v3900
        %v3902 = vpop.f32.mrb[0].mxu0
        %v3903 = vpop.f32.mrb[0].mxu0
        %v3904 = vadd.f32 0.0, %v3903
        %v3905 = vpop.f32.mrb[0].mxu0
        %3906 = vmatprep.mubr.bf16.mxu0 0
        %3907 = vmatmul.mubr.bf16.gmra.mrb[0].mxu0 %v3797
        %v3908 = vpop.f32.mrb[0].mxu0
        %v3909 = vadd.f32 0.0, %v3908
        %v3910 = vpop.f32.mrb[0].mxu0
        %v3911 = vpop.f32.mrb[0].mxu0
        %v3912 = vadd.f32 0.0, %v3911
        %v3913 = vpop.f32.mrb[0].mxu0
        %3914 = vdwg.mxu0
        %v3915 = vadd.f32 %v3745, %v3885
        %v3916 = vadd.f32 %v3746, %v3888
        %v3917 = vadd.f32 %v3747, %v3893
        %v3918 = vadd.f32 %v3748, %v3896
        %v3919 = vadd.f32 %v3749, %v3901
        %v3920 = vadd.f32 %v3750, %v3904
        %v3921 = vadd.f32 %v3751, %v3909
        %v3922 = vadd.f32 %v3752, %v3912
        %v3923 = vld [vmem:[%s3753] sm:$0xf]
        %v3924 = vld [vmem:[%s3753 + $0x4] sm:$0x1]
        %v3925 = vld [vmem:[%s3753 + $0x8] sm:$0xf]
        %v3926 = vld [vmem:[%s3753 + $0xc] sm:$0x1]
        %v3927 = vld [vmem:[%s3753 + $0x10] sm:$0xf]
        %v3928 = vld [vmem:[%s3753 + $0x14] sm:$0x1]
        %v3929 = vld [vmem:[%s3753 + $0x18] sm:$0xf]
        %v3930 = vld [vmem:[%s3753 + $0x1c] sm:$0x1]
        %v3931 = vld [vmem:[%s3753 + $0x20] sm:$0xf]
        %v3932 = vld [vmem:[%s3753 + $0x24] sm:$0x1]
        %v3933 = vld [vmem:[%s3753 + $0x28] sm:$0xf]
        %v3934 = vld [vmem:[%s3753 + $0x2c] sm:$0x1]
        %v3935 = vld [vmem:[%s3753 + $0x30] sm:$0xf]
        %v3936 = vld [vmem:[%s3753 + $0x34] sm:$0x1]
        %v3937 = vld [vmem:[%s3753 + $0x38] sm:$0xf]
        %v3938 = vld [vmem:[%s3753 + $0x3c] sm:$0x1]
        %v3940 = vshrl.u32 %v3923, 16
        %v3942 = vrot.slane %v3940, 4
        %v3943 = vshll.u32 %v3923, 16
        %v3945 = vrot.slane %v3943, 5
        %v3946 = vor.u32 %v3942, %v3945
        %v3947 = vrot.slane %v3946, 4
        %v3949 = vshll.u32 %v3924, 16
        %v3951 = vrot.slane %v3949, 5
        %v3952 = vsel %vm898, %v3947, %v3951
        %v3954 = vshrl.u32 %v3925, 16
        %v3956 = vrot.slane %v3954, 4
        %v3957 = vshll.u32 %v3925, 16
        %v3959 = vrot.slane %v3957, 5
        %v3960 = vor.u32 %v3956, %v3959
        %v3961 = vrot.slane %v3960, 4
        %v3963 = vshll.u32 %v3926, 16
        %v3965 = vrot.slane %v3963, 5
        %v3966 = vsel %vm898, %v3961, %v3965
        %v3968 = vshrl.u32 %v3927, 16
        %v3970 = vrot.slane %v3968, 4
        %v3971 = vshll.u32 %v3927, 16
        %v3973 = vrot.slane %v3971, 5
        %v3974 = vor.u32 %v3970, %v3973
        %v3975 = vrot.slane %v3974, 4
        %v3977 = vshll.u32 %v3928, 16
        %v3979 = vrot.slane %v3977, 5
        %v3980 = vsel %vm898, %v3975, %v3979
        %v3982 = vshrl.u32 %v3929, 16
        %v3984 = vrot.slane %v3982, 4
        %v3985 = vshll.u32 %v3929, 16
        %v3987 = vrot.slane %v3985, 5
        %v3988 = vor.u32 %v3984, %v3987
        %v3989 = vrot.slane %v3988, 4
        %v3991 = vshll.u32 %v3930, 16
        %v3993 = vrot.slane %v3991, 5
        %v3994 = vsel %vm898, %v3989, %v3993
        %v3996 = vshrl.u32 %v3931, 16
        %v3998 = vrot.slane %v3996, 4
        %v3999 = vshll.u32 %v3931, 16
        %v4001 = vrot.slane %v3999, 5
        %v4002 = vor.u32 %v3998, %v4001
        %v4003 = vrot.slane %v4002, 4
        %v4005 = vshll.u32 %v3932, 16
        %v4007 = vrot.slane %v4005, 5
        %v4008 = vsel %vm898, %v4003, %v4007
        %v4010 = vshrl.u32 %v3933, 16
        %v4012 = vrot.slane %v4010, 4
        %v4013 = vshll.u32 %v3933, 16
        %v4015 = vrot.slane %v4013, 5
        %v4016 = vor.u32 %v4012, %v4015
        %v4017 = vrot.slane %v4016, 4
        %v4019 = vshll.u32 %v3934, 16
        %v4021 = vrot.slane %v4019, 5
        %v4022 = vsel %vm898, %v4017, %v4021
        %v4024 = vshrl.u32 %v3935, 16
        %v4026 = vrot.slane %v4024, 4
        %v4027 = vshll.u32 %v3935, 16
        %v4029 = vrot.slane %v4027, 5
        %v4030 = vor.u32 %v4026, %v4029
        %v4031 = vrot.slane %v4030, 4
        %v4033 = vshll.u32 %v3936, 16
        %v4035 = vrot.slane %v4033, 5
        %v4036 = vsel %vm898, %v4031, %v4035
        %v4038 = vshrl.u32 %v3937, 16
        %v4040 = vrot.slane %v4038, 4
        %v4041 = vshll.u32 %v3937, 16
        %v4043 = vrot.slane %v4041, 5
        %v4044 = vor.u32 %v4040, %v4043
        %v4045 = vrot.slane %v4044, 4
        %v4047 = vshll.u32 %v3938, 16
        %v4049 = vrot.slane %v4047, 5
        %v4050 = vsel %vm898, %v4045, %v4049
        %v4051 = vld [vmem:[%s3 + $0x1c0] sm:$0xf]
        %v4052 = vld [vmem:[%s3 + $0x1c4] sm:$0xf]
        %v4053 = vld [vmem:[%s3 + $0x1c8] sm:$0xf]
        %v4054 = vld [vmem:[%s3 + $0x1cc] sm:$0xf]
        %v4055 = vld [vmem:[%s3 + $0x1d0] sm:$0xf]
        %v4056 = vld [vmem:[%s3 + $0x1d4] sm:$0xf]
        %v4057 = vld [vmem:[%s3 + $0x1d8] sm:$0xf]
        %v4058 = vld [vmem:[%s3 + $0x1dc] sm:$0xf]
        %v4059 = vld [vmem:[%s3 + $0x1e0] sm:$0xf]
        %v4060 = vld [vmem:[%s3 + $0x1e4] sm:$0xf]
        %v4061 = vld [vmem:[%s3 + $0x1e8] sm:$0xf]
        %v4062 = vld [vmem:[%s3 + $0x1ec] sm:$0xf]
        %v4063 = vld [vmem:[%s3 + $0x1f0] sm:$0xf]
        %v4064 = vld [vmem:[%s3 + $0x1f4] sm:$0xf]
        %v4065 = vld [vmem:[%s3 + $0x1f8] sm:$0xf]
        %v4066 = vld [vmem:[%s3 + $0x1fc] sm:$0xf]
        %v4067 = vunpack.c.l.b16 %v3952
        %v4068 = vunpack.c.l.b16 %v3966
        %v4069 = vunpack.c.l.b16 %v3980
        %v4070 = vunpack.c.l.b16 %v3994
        %v4071 = vunpack.c.l.b16 %v4008
        %v4072 = vunpack.c.l.b16 %v4022
        %v4073 = vunpack.c.l.b16 %v4036
        %v4074 = vunpack.c.l.b16 %v4050
        %v4075 = vpack.c.b16 %v4068, %v4067
        %v4076 = vpack.c.b16 %v4070, %v4069
        %v4077 = vpack.c.b16 %v4072, %v4071
        %v4078 = vpack.c.b16 %v4074, %v4073
        %v4099 = vunpack.c.l.b16 %v4051
        %v4100 = vunpack.c.l.b16 %v4052
        %v4101 = vunpack.c.l.b16 %v4053
        %v4102 = vunpack.c.l.b16 %v4054
        %v4103 = vunpack.c.l.b16 %v4055
        %v4104 = vunpack.c.l.b16 %v4056
        %v4105 = vunpack.c.l.b16 %v4057
        %v4106 = vunpack.c.l.b16 %v4058
        %v4107 = vunpack.c.l.b16 %v4059
        %v4108 = vunpack.c.l.b16 %v4060
        %v4109 = vunpack.c.l.b16 %v4061
        %v4110 = vunpack.c.l.b16 %v4062
        %v4111 = vunpack.c.l.b16 %v4063
        %v4112 = vunpack.c.l.b16 %v4064
        %v4113 = vunpack.c.l.b16 %v4065
        %v4114 = vunpack.c.l.b16 %v4066
        %v4115 = vpack.c.b16 %v4100, %v4099
        %v4116 = vpack.c.b16 %v4102, %v4101
        %v4117 = vpack.c.b16 %v4104, %v4103
        %v4118 = vpack.c.b16 %v4106, %v4105
        %v4119 = vpack.c.b16 %v4108, %v4107
        %v4120 = vpack.c.b16 %v4110, %v4109
        %v4121 = vpack.c.b16 %v4112, %v4111
        %v4122 = vpack.c.b16 %v4114, %v4113
        %4131 = vmatprep.subr.bf16.mxu0 0
        %4132 = vmatpush1.bf16.msra.mxu0 %v4115
        %4133 = vmatprep.subr.bf16.mxu0 0
        %4134 = vmatpush1.bf16.msra.mxu0 %v4116
        %4135 = vmatprep.subr.bf16.mxu0 0
        %4136 = vmatpush1.bf16.msra.mxu0 %v4117
        %4137 = vmatprep.subr.bf16.mxu0 0
        %4138 = vmatpush1.bf16.msra.mxu0 %v4118
        %4139 = vmatprep.subr.bf16.mxu0 0
        %4140 = vmatpush1.bf16.msra.mxu0 %v4119
        %4141 = vmatprep.subr.bf16.mxu0 0
        %4142 = vmatpush1.bf16.msra.mxu0 %v4120
        %4143 = vmatprep.subr.bf16.mxu0 0
        %4144 = vmatpush1.bf16.msra.mxu0 %v4121
        %4145 = vmatprep.subr.bf16.mxu0 0
        %4146 = vmatpush1.bf16.msra.mxu0 %v4122
        %4147 = vmatprep.subr.bf16.mxu0 0
        %4148 = vmatpush1.bf16.msra.mxu0 0
        %4149 = vmatprep.subr.bf16.mxu0 0
        %4150 = vmatpush1.bf16.msra.mxu0 0
        %4151 = vmatprep.subr.bf16.mxu0 0
        %4152 = vmatpush1.bf16.msra.mxu0 0
        %4153 = vmatprep.subr.bf16.mxu0 0
        %4154 = vmatpush1.bf16.msra.mxu0 0
        %4155 = vmatprep.subr.bf16.mxu0 0
        %4156 = vmatpush1.bf16.msra.mxu0 0
        %4157 = vmatprep.subr.bf16.mxu0 0
        %4158 = vmatpush1.bf16.msra.mxu0 0
        %4159 = vmatprep.subr.bf16.mxu0 0
        %4160 = vmatpush1.bf16.msra.mxu0 0
        %4161 = vmatprep.subr.bf16.mxu0 0
        %4162 = vmatpush1.bf16.msra.mxu0 0
        %4163 = vmatprep.mubr.bf16.mxu0 0
        %4164 = vmatmul.mubr.bf16.gmra.mrb[0].mxu0 %v4075
        %v4165 = vpop.f32.mrb[0].mxu0
        %v4166 = vadd.f32 0.0, %v4165
        %v4167 = vpop.f32.mrb[0].mxu0
        %v4168 = vpop.f32.mrb[0].mxu0
        %v4169 = vadd.f32 0.0, %v4168
        %v4170 = vpop.f32.mrb[0].mxu0
        %4171 = vmatprep.mubr.bf16.mxu0 0
        %4172 = vmatmul.mubr.bf16.gmra.mrb[0].mxu0 %v4076
        %v4173 = vpop.f32.mrb[0].mxu0
        %v4174 = vadd.f32 0.0, %v4173
        %v4175 = vpop.f32.mrb[0].mxu0
        %v4176 = vpop.f32.mrb[0].mxu0
        %v4177 = vadd.f32 0.0, %v4176
        %v4178 = vpop.f32.mrb[0].mxu0
        %4179 = vmatprep.mubr.bf16.mxu0 0
        %4180 = vmatmul.mubr.bf16.gmra.mrb[0].mxu0 %v4077
        %v4181 = vpop.f32.mrb[0].mxu0
        %v4182 = vadd.f32 0.0, %v4181
        %v4183 = vpop.f32.mrb[0].mxu0
        %v4184 = vpop.f32.mrb[0].mxu0
        %v4185 = vadd.f32 0.0, %v4184
        %v4186 = vpop.f32.mrb[0].mxu0
        %4187 = vmatprep.mubr.bf16.mxu0 0
        %4188 = vmatmul.mubr.bf16.gmra.mrb[0].mxu0 %v4078
        %v4189 = vpop.f32.mrb[0].mxu0
        %v4190 = vadd.f32 0.0, %v4189
        %v4191 = vpop.f32.mrb[0].mxu0
        %v4192 = vpop.f32.mrb[0].mxu0
        %v4193 = vadd.f32 0.0, %v4192
        %v4194 = vpop.f32.mrb[0].mxu0
        %4195 = vdwg.mxu0
        %v4196 = vadd.f32 %v3915, %v4166
        %v4197 = vadd.f32 %v3916, %v4169
        %v4198 = vadd.f32 %v3917, %v4174
        %v4199 = vadd.f32 %v3918, %v4177
        %v4200 = vadd.f32 %v3919, %v4182
        %v4201 = vadd.f32 %v3920, %v4185
        %v4202 = vadd.f32 %v3921, %v4190
        %v4203 = vadd.f32 %v3922, %v4193
        %v4204 = vld [vmem:[%s3753] sm:$0xe]
        %v4205 = vld [vmem:[%s3753 + $0x8] sm:$0xe]
        %v4206 = vld [vmem:[%s3753 + $0x10] sm:$0xe]
        %v4207 = vld [vmem:[%s3753 + $0x18] sm:$0xe]
        %v4208 = vld [vmem:[%s3753 + $0x20] sm:$0xe]
        %v4209 = vld [vmem:[%s3753 + $0x28] sm:$0xe]
        %v4210 = vld [vmem:[%s3753 + $0x30] sm:$0xe]
        %v4211 = vld [vmem:[%s3753 + $0x38] sm:$0xe]
        %v4228 = vrot.slane %v4204, 5
        %v4229 = vrot.slane %v4228, 4
        %v4230 = vrot.slane %v3924, 5
        %v4231 = vsel %vm2908, %v4229, %v4230
        %v4232 = vrot.slane %v4205, 5
        %v4233 = vrot.slane %v4232, 4
        %v4234 = vrot.slane %v3926, 5
        %v4235 = vsel %vm2908, %v4233, %v4234
        %v4236 = vrot.slane %v4206, 5
        %v4237 = vrot.slane %v4236, 4
        %v4238 = vrot.slane %v3928, 5
        %v4239 = vsel %vm2908, %v4237, %v4238
        %v4240 = vrot.slane %v4207, 5
        %v4241 = vrot.slane %v4240, 4
        %v4242 = vrot.slane %v3930, 5
        %v4243 = vsel %vm2908, %v4241, %v4242
        %v4244 = vrot.slane %v4208, 5
        %v4245 = vrot.slane %v4244, 4
        %v4246 = vrot.slane %v3932, 5
        %v4247 = vsel %vm2908, %v4245, %v4246
        %v4248 = vrot.slane %v4209, 5
        %v4249 = vrot.slane %v4248, 4
        %v4250 = vrot.slane %v3934, 5
        %v4251 = vsel %vm2908, %v4249, %v4250
        %v4252 = vrot.slane %v4210, 5
        %v4253 = vrot.slane %v4252, 4
        %v4254 = vrot.slane %v3936, 5
        %v4255 = vsel %vm2908, %v4253, %v4254
        %v4256 = vrot.slane %v4211, 5
        %v4257 = vrot.slane %v4256, 4
        %v4258 = vrot.slane %v3938, 5
        %v4259 = vsel %vm2908, %v4257, %v4258
        %v4260 = vld [vmem:[%s3 + $0x200] sm:$0xf]
        %v4261 = vld [vmem:[%s3 + $0x204] sm:$0xf]
        %v4262 = vld [vmem:[%s3 + $0x208] sm:$0xf]
        %v4263 = vld [vmem:[%s3 + $0x20c] sm:$0xf]
        %v4264 = vld [vmem:[%s3 + $0x210] sm:$0xf]
        %v4265 = vld [vmem:[%s3 + $0x214] sm:$0xf]
        %v4266 = vld [vmem:[%s3 + $0x218] sm:$0xf]
        %v4267 = vld [vmem:[%s3 + $0x21c] sm:$0xf]
        %v4268 = vld [vmem:[%s3 + $0x220] sm:$0xf]
        %v4269 = vld [vmem:[%s3 + $0x224] sm:$0xf]
        %v4270 = vld [vmem:[%s3 + $0x228] sm:$0xf]
        %v4271 = vld [vmem:[%s3 + $0x22c] sm:$0xf]
        %v4272 = vld [vmem:[%s3 + $0x230] sm:$0xf]
        %v4273 = vld [vmem:[%s3 + $0x234] sm:$0xf]
        %v4274 = vld [vmem:[%s3 + $0x238] sm:$0xf]
        %v4275 = vld [vmem:[%s3 + $0x23c] sm:$0xf]
        %v4276 = vunpack.c.l.b16 %v4231
        %v4277 = vunpack.c.l.b16 %v4235
        %v4278 = vunpack.c.l.b16 %v4239
        %v4279 = vunpack.c.l.b16 %v4243
        %v4280 = vunpack.c.l.b16 %v4247
        %v4281 = vunpack.c.l.b16 %v4251
        %v4282 = vunpack.c.l.b16 %v4255
        %v4283 = vunpack.c.l.b16 %v4259
        %v4284 = vpack.c.b16 %v4277, %v4276
        %v4285 = vpack.c.b16 %v4279, %v4278
        %v4286 = vpack.c.b16 %v4281, %v4280
        %v4287 = vpack.c.b16 %v4283, %v4282
        %v4308 = vunpack.c.l.b16 %v4260
        %v4309 = vunpack.c.l.b16 %v4261
        %v4310 = vunpack.c.l.b16 %v4262
        %v4311 = vunpack.c.l.b16 %v4263
        %v4312 = vunpack.c.l.b16 %v4264
        %v4313 = vunpack.c.l.b16 %v4265
        %v4314 = vunpack.c.l.b16 %v4266
        %v4315 = vunpack.c.l.b16 %v4267
        %v4316 = vunpack.c.l.b16 %v4268
        %v4317 = vunpack.c.l.b16 %v4269
        %v4318 = vunpack.c.l.b16 %v4270
        %v4319 = vunpack.c.l.b16 %v4271
        %v4320 = vunpack.c.l.b16 %v4272
        %v4321 = vunpack.c.l.b16 %v4273
        %v4322 = vunpack.c.l.b16 %v4274
        %v4323 = vunpack.c.l.b16 %v4275
        %v4324 = vpack.c.b16 %v4309, %v4308
        %v4325 = vpack.c.b16 %v4311, %v4310
        %v4326 = vpack.c.b16 %v4313, %v4312
        %v4327 = vpack.c.b16 %v4315, %v4314
        %v4328 = vpack.c.b16 %v4317, %v4316
        %v4329 = vpack.c.b16 %v4319, %v4318
        %v4330 = vpack.c.b16 %v4321, %v4320
        %v4331 = vpack.c.b16 %v4323, %v4322
        %4340 = vmatprep.subr.bf16.mxu0 0
        %4341 = vmatpush1.bf16.msra.mxu0 %v4324
        %4342 = vmatprep.subr.bf16.mxu0 0
        %4343 = vmatpush1.bf16.msra.mxu0 %v4325
        %4344 = vmatprep.subr.bf16.mxu0 0
        %4345 = vmatpush1.bf16.msra.mxu0 %v4326
        %4346 = vmatprep.subr.bf16.mxu0 0
        %4347 = vmatpush1.bf16.msra.mxu0 %v4327
        %4348 = vmatprep.subr.bf16.mxu0 0
        %4349 = vmatpush1.bf16.msra.mxu0 %v4328
        %4350 = vmatprep.subr.bf16.mxu0 0
        %4351 = vmatpush1.bf16.msra.mxu0 %v4329
        %4352 = vmatprep.subr.bf16.mxu0 0
        %4353 = vmatpush1.bf16.msra.mxu0 %v4330
        %4354 = vmatprep.subr.bf16.mxu0 0
        %4355 = vmatpush1.bf16.msra.mxu0 %v4331
        %4356 = vmatprep.subr.bf16.mxu0 0
        %4357 = vmatpush1.bf16.msra.mxu0 0
        %4358 = vmatprep.subr.bf16.mxu0 0
        %4359 = vmatpush1.bf16.msra.mxu0 0
        %4360 = vmatprep.subr.bf16.mxu0 0
        %4361 = vmatpush1.bf16.msra.mxu0 0
        %4362 = vmatprep.subr.bf16.mxu0 0
        %4363 = vmatpush1.bf16.msra.mxu0 0
        %4364 = vmatprep.subr.bf16.mxu0 0
        %4365 = vmatpush1.bf16.msra.mxu0 0
        %4366 = vmatprep.subr.bf16.mxu0 0
        %4367 = vmatpush1.bf16.msra.mxu0 0
        %4368 = vmatprep.subr.bf16.mxu0 0
        %4369 = vmatpush1.bf16.msra.mxu0 0
        %4370 = vmatprep.subr.bf16.mxu0 0
        %4371 = vmatpush1.bf16.msra.mxu0 0
        %4372 = vmatprep.mubr.bf16.mxu0 0
        %4373 = vmatmul.mubr.bf16.gmra.mrb[0].mxu0 %v4284
        %v4374 = vpop.f32.mrb[0].mxu0
        %v4375 = vadd.f32 0.0, %v4374
        %v4376 = vpop.f32.mrb[0].mxu0
        %v4377 = vpop.f32.mrb[0].mxu0
        %v4378 = vadd.f32 0.0, %v4377
        %v4379 = vpop.f32.mrb[0].mxu0
        %4380 = vmatprep.mubr.bf16.mxu0 0
        %4381 = vmatmul.mubr.bf16.gmra.mrb[0].mxu0 %v4285
        %v4382 = vpop.f32.mrb[0].mxu0
        %v4383 = vadd.f32 0.0, %v4382
        %v4384 = vpop.f32.mrb[0].mxu0
        %v4385 = vpop.f32.mrb[0].mxu0
        %v4386 = vadd.f32 0.0, %v4385
        %v4387 = vpop.f32.mrb[0].mxu0
        %4388 = vmatprep.mubr.bf16.mxu0 0
        %4389 = vmatmul.mubr.bf16.gmra.mrb[0].mxu0 %v4286
        %v4390 = vpop.f32.mrb[0].mxu0
        %v4391 = vadd.f32 0.0, %v4390
        %v4392 = vpop.f32.mrb[0].mxu0
        %v4393 = vpop.f32.mrb[0].mxu0
        %v4394 = vadd.f32 0.0, %v4393
        %v4395 = vpop.f32.mrb[0].mxu0
        %4396 = vmatprep.mubr.bf16.mxu0 0
        %4397 = vmatmul.mubr.bf16.gmra.mrb[0].mxu0 %v4287
        %v4398 = vpop.f32.mrb[0].mxu0
        %v4399 = vadd.f32 0.0, %v4398
        %v4400 = vpop.f32.mrb[0].mxu0
        %v4401 = vpop.f32.mrb[0].mxu0
        %v4402 = vadd.f32 0.0, %v4401
        %v4403 = vpop.f32.mrb[0].mxu0
        %4404 = vdwg.mxu0
        %v4405 = vadd.f32 %v4196, %v4375
        %v4406 = vadd.f32 %v4197, %v4378
        %v4407 = vadd.f32 %v4198, %v4383
        %v4408 = vadd.f32 %v4199, %v4386
        %v4409 = vadd.f32 %v4200, %v4391
        %v4410 = vadd.f32 %v4201, %v4394
        %v4411 = vadd.f32 %v4202, %v4399
        %v4412 = vadd.f32 %v4203, %v4402
        %v4413 = vld [vmem:[%s4] sm:$0x1]
        %v4415 = vlaneseq
        %v4416 = vshrl.u32 %v4415, 7
        %v4417 = vsub.s32 0, %v4416
        %v4418 = vrot.slane %v4413, %v4417
        %v4420 = vadd.f32 %v4405, %v4418
        %v4421 = vadd.f32 %v4406, %v4418
        %v4422 = vadd.f32 %v4407, %v4418
        %v4423 = vadd.f32 %v4408, %v4418
        %v4424 = vadd.f32 %v4409, %v4418
        %v4425 = vadd.f32 %v4410, %v4418
        %v4426 = vadd.f32 %v4411, %v4418
        %v4427 = vadd.f32 %v4412, %v4418
        %v4428 = vld [vmem:[%s1286] sm:$0xf]
        %v4429 = vld [vmem:[%s1286 + $0x8] sm:$0xf]
        %v4430 = vld [vmem:[%s1286 + $0x10] sm:$0xf]
        %v4431 = vld [vmem:[%s1286 + $0x18] sm:$0xf]
        %v4432 = vld [vmem:[%s1286 + $0x20] sm:$0xf]
        %v4433 = vld [vmem:[%s1286 + $0x28] sm:$0xf]
        %v4434 = vld [vmem:[%s1286 + $0x30] sm:$0xf]
        %v4435 = vld [vmem:[%s1286 + $0x38] sm:$0xf]
        %v4436 = vld [vmem:[%s5] sm:$0xf]
        %v4437 = vld [vmem:[%s5 + $0x4] sm:$0xf]
        %v4438 = vld [vmem:[%s5 + $0x8] sm:$0xf]
        %v4439 = vld [vmem:[%s5 + $0xc] sm:$0xf]
        %v4440 = vld [vmem:[%s5 + $0x10] sm:$0xf]
        %v4441 = vld [vmem:[%s5 + $0x14] sm:$0xf]
        %v4442 = vld [vmem:[%s5 + $0x18] sm:$0xf]
        %v4443 = vld [vmem:[%s5 + $0x1c] sm:$0xf]
        %v4444 = vld [vmem:[%s6] sm:$0x1]
        %v4446 = vlaneseq
        %v4447 = vshrl.u32 %v4446, 7
        %v4448 = vsub.s32 0, %v4447
        %v4449 = vrot.slane %v4444, %v4448
        %v4459 = vunpack.c.l.b16 %v4428
        %v4460 = vunpack.c.l.b16 %v4429
        %v4461 = vunpack.c.l.b16 %v4430
        %v4462 = vunpack.c.l.b16 %v4431
        %v4463 = vunpack.c.l.b16 %v4432
        %v4464 = vunpack.c.l.b16 %v4433
        %v4465 = vunpack.c.l.b16 %v4434
        %v4466 = vunpack.c.l.b16 %v4435
        %v4467 = vpack.c.b16 %v4460, %v4459
        %v4468 = vpack.c.b16 %v4462, %v4461
        %v4469 = vpack.c.b16 %v4464, %v4463
        %v4470 = vpack.c.b16 %v4466, %v4465
        %v4479 = vunpack.c.l.b16 %v4436
        %v4480 = vunpack.c.l.b16 %v4437
        %v4481 = vunpack.c.l.b16 %v4438
        %v4482 = vunpack.c.l.b16 %v4439
        %v4483 = vunpack.c.l.b16 %v4440
        %v4484 = vunpack.c.l.b16 %v4441
        %v4485 = vunpack.c.l.b16 %v4442
        %v4486 = vunpack.c.l.b16 %v4443
        %v4487 = vpack.c.b16 %v4480, %v4479
        %v4488 = vpack.c.b16 %v4482, %v4481
        %v4489 = vpack.c.b16 %v4484, %v4483
        %v4490 = vpack.c.b16 %v4486, %v4485
        %v4496 = vsel %vm681, %v4467, 0
        %v4499 = vsel %vm681, %v4468, 0
        %v4502 = vsel %vm681, %v4469, 0
        %v4505 = vsel %vm681, %v4470, 0
        %4507 = vmatprep.subr.bf16.mxu0 0
        %4508 = vmatpush1.bf16.msra.mxu0 %v4487
        %4509 = vmatprep.subr.bf16.mxu0 0
        %4510 = vmatpush1.bf16.msra.mxu0 %v4488
        %4511 = vmatprep.subr.bf16.mxu0 0
        %4512 = vmatpush1.bf16.msra.mxu0 %v4489
        %4513 = vmatprep.subr.bf16.mxu0 0
        %4514 = vmatpush1.bf16.msra.mxu0 %v4490
        %4515 = vmatprep.subr.bf16.mxu0 0
        %4516 = vmatpush1.bf16.msra.mxu0 0
        %4517 = vmatprep.subr.bf16.mxu0 0
        %4518 = vmatpush1.bf16.msra.mxu0 0
        %4519 = vmatprep.subr.bf16.mxu0 0
        %4520 = vmatpush1.bf16.msra.mxu0 0
        %4521 = vmatprep.subr.bf16.mxu0 0
        %4522 = vmatpush1.bf16.msra.mxu0 0
        %4523 = vmatprep.subr.bf16.mxu0 0
        %4524 = vmatpush1.bf16.msra.mxu0 0
        %4525 = vmatprep.subr.bf16.mxu0 0
        %4526 = vmatpush1.bf16.msra.mxu0 0
        %4527 = vmatprep.subr.bf16.mxu0 0
        %4528 = vmatpush1.bf16.msra.mxu0 0
        %4529 = vmatprep.subr.bf16.mxu0 0
        %4530 = vmatpush1.bf16.msra.mxu0 0
        %4531 = vmatprep.subr.bf16.mxu0 0
        %4532 = vmatpush1.bf16.msra.mxu0 0
        %4533 = vmatprep.subr.bf16.mxu0 0
        %4534 = vmatpush1.bf16.msra.mxu0 0
        %4535 = vmatprep.subr.bf16.mxu0 0
        %4536 = vmatpush1.bf16.msra.mxu0 0
        %4537 = vmatprep.subr.bf16.mxu0 0
        %4538 = vmatpush1.bf16.msra.mxu0 0
        %4539 = vmatprep.mubr.bf16.mxu0 0
        %4540 = vmatmul.mubr.bf16.gmra.mrb[0].mxu0 %v4496
        %v4541 = vpop.f32.mrb[0].mxu0
        %v4542 = vadd.f32 %v4449, %v4541
        %v4543 = vpop.f32.mrb[0].mxu0
        %v4544 = vpop.f32.mrb[0].mxu0
        %v4545 = vadd.f32 %v4449, %v4544
        %v4546 = vpop.f32.mrb[0].mxu0
        %4547 = vmatprep.mubr.bf16.mxu0 0
        %4548 = vmatmul.mubr.bf16.gmra.mrb[0].mxu0 %v4499
        %v4549 = vpop.f32.mrb[0].mxu0
        %v4550 = vadd.f32 %v4449, %v4549
        %v4551 = vpop.f32.mrb[0].mxu0
        %v4552 = vpop.f32.mrb[0].mxu0
        %v4553 = vadd.f32 %v4449, %v4552
        %v4554 = vpop.f32.mrb[0].mxu0
        %4555 = vmatprep.mubr.bf16.mxu0 0
        %4556 = vmatmul.mubr.bf16.gmra.mrb[0].mxu0 %v4502
        %v4557 = vpop.f32.mrb[0].mxu0
        %v4558 = vadd.f32 %v4449, %v4557
        %v4559 = vpop.f32.mrb[0].mxu0
        %v4560 = vpop.f32.mrb[0].mxu0
        %v4561 = vadd.f32 %v4449, %v4560
        %v4562 = vpop.f32.mrb[0].mxu0
        %4563 = vmatprep.mubr.bf16.mxu0 0
        %4564 = vmatmul.mubr.bf16.gmra.mrb[0].mxu0 %v4505
        %v4565 = vpop.f32.mrb[0].mxu0
        %v4566 = vadd.f32 %v4449, %v4565
        %v4567 = vpop.f32.mrb[0].mxu0
        %v4568 = vpop.f32.mrb[0].mxu0
        %v4569 = vadd.f32 %v4449, %v4568
        %v4570 = vpop.f32.mrb[0].mxu0
        %4571 = vdwg.mxu0
        %v4572 = vadd.f32 %v4420, %v4542
        %v4573 = vadd.f32 %v4421, %v4545
        %v4574 = vadd.f32 %v4422, %v4550
        %v4575 = vadd.f32 %v4423, %v4553
        %v4576 = vadd.f32 %v4424, %v4558
        %v4577 = vadd.f32 %v4425, %v4561
        %v4578 = vadd.f32 %v4426, %v4566
        %v4579 = vadd.f32 %v4427, %v4569
        %v4580 = vmax.f32 %v4572, -1.0
        %v4581 = vmax.f32 %v4573, -1.0
        %v4582 = vmax.f32 %v4574, -1.0
        %v4583 = vmax.f32 %v4575, -1.0
        %v4584 = vmax.f32 %v4576, -1.0
        %v4585 = vmax.f32 %v4577, -1.0
        %v4586 = vmax.f32 %v4578, -1.0
        %v4587 = vmax.f32 %v4579, -1.0
        %v4588 = vmin.f32 %v4580, 1.0
        %v4589 = vmin.f32 %v4581, 1.0
        %v4590 = vmin.f32 %v4582, 1.0
        %v4591 = vmin.f32 %v4583, 1.0
        %v4592 = vmin.f32 %v4584, 1.0
        %v4593 = vmin.f32 %v4585, 1.0
        %v4594 = vmin.f32 %v4586, 1.0
        %v4595 = vmin.f32 %v4587, 1.0
        %v4596 = vpack.c.bf16 %v4589, %v4588
        %v4597 = vpack.c.bf16 %v4591, %v4590
        %v4598 = vpack.c.bf16 %v4593, %v4592
        %v4599 = vpack.c.bf16 %v4595, %v4594
        %v4604 = vunpack.c.l.b16 %v4596
        %v4605 = vunpack.c.h.b16 %v4596
        %v4606 = vunpack.c.l.b16 %v4597
        %v4607 = vunpack.c.h.b16 %v4597
        %v4608 = vunpack.c.l.b16 %v4598
        %v4609 = vunpack.c.h.b16 %v4598
        %v4610 = vunpack.c.l.b16 %v4599
        %v4611 = vunpack.c.h.b16 %v4599
        %v4612 = vpack.c.b16 %v4604, %v4604
        %v4613 = vpack.c.b16 %v4605, %v4605
        %v4614 = vpack.c.b16 %v4606, %v4606
        %v4615 = vpack.c.b16 %v4607, %v4607
        %v4616 = vpack.c.b16 %v4608, %v4608
        %v4617 = vpack.c.b16 %v4609, %v4609
        %v4618 = vpack.c.b16 %v4610, %v4610
        %v4619 = vpack.c.b16 %v4611, %v4611
        %4628 = vst [vmem:[%s602] sm:$0xf] %v4612
        %4629 = vst [vmem:[%s602 + $0x4] sm:$0xf] %v4613
        %4630 = vst [vmem:[%s602 + $0x8] sm:$0xf] %v4614
        %4631 = vst [vmem:[%s602 + $0xc] sm:$0xf] %v4615
        %4632 = vst [vmem:[%s602 + $0x10] sm:$0xf] %v4616
        %4633 = vst [vmem:[%s602 + $0x14] sm:$0xf] %v4617
        %4634 = vst [vmem:[%s602 + $0x18] sm:$0xf] %v4618
        %4635 = vst [vmem:[%s602 + $0x1c] sm:$0xf] %v4619
        %s4636 = sand.u32 %s181, 1
        %s4637 = scalar_lea.sflag [#allocation5], %s4636
        %s4638 = sand.u32 %s181, 1
        %s4639 = smul.addr %s4638, 32
        %s4640 = scalar_lea.vmem [#allocation4], %s4639
        // Predicated region
        $region90: #{basic_block_forward.1} parent=84 // pred_check
          %p4641 = pneg %p191
        $region91: #{basic_block_forward.1} parent=84 // pred_check_branch
          %4643 = sbr.rel (%p4641) target = $region93
        $region92: #{basic_block_forward.1} parent=84 // pred_region
          %s4645 = ssub.s32 512, 512
          %4646 = vsyncadd %s4637, %s4645
          %s4647 = smul.addr %s21, 8
          %s4648 = smul.addr %s4647, 64
          %s4649 = scalar_lea.hbm %s7, %s4648
          %s4650 = sshll.u32 %s4640, 4
          %s4651 = int_to_ptr.vmem [resolvable:$true] %s4650
          %4656 = dma.vmem_to_hbm [thread:$0]  %s4651, 512, %s4649, %s4637, 64, 64, 4
        $region93: #{basic_block_forward.1} parent=84 // pred_fallthru
          _
      $region85: #{basic_block_forward.1} parent=5 // pred_fallthru
        _
      %p4657 = scmp.le.s32.totalorder 2, %s16
      // Predicated region
      $region94: #{basic_block_forward.1} parent=5 // pred_check
        %p4658 = pneg %p4657
      $region95: #{basic_block_forward.1} parent=5 // pred_check_branch
        %4660 = sbr.rel (%p4658) target = $region97
      $region96: #{basic_block_forward.1} parent=5 // pred_region
        %s4661 = ssub.s32 %s16, 2
        // Predicated region
        $region98: #{basic_block_forward.1} parent=96 // pred_check
          %p4662 = pneg %p197
        $region99: #{basic_block_forward.1} parent=96 // pred_check_branch
          %4664 = sbr.rel (%p4662) target = $region101
        $region100: #{basic_block_forward.1} parent=96 // pred_region
          %s4665 = sand.u32 %s182, 1
          %s4666 = scalar_lea.sflag [#allocation5], %s4665
          %s4667 = sand.u32 %s182, 1
          %s4668 = smul.addr %s4667, 32
          %s4669 = scalar_lea.vmem [#allocation4], %s4668
          %4670 = dma.done %s4666, 512
        $region101: #{basic_block_forward.1} parent=96 // pred_fallthru
          _
      $region97: #{basic_block_forward.1} parent=5 // pred_fallthru
        _
    $region6: #{basic_block_forward.1} parent=1 // loop_footer
      %s20 = sadd.s32 1, %s16
    $region7: #{basic_block_forward.1} parent=1 // loop_footer_branch
      %15 = sbr.rel target = $region3
    $region8: #{basic_block_forward.1} parent=1 // loop_exit
      _
    %4671 = vsyncpa [#allocation5], 1
    %s4672 = scalar_lea.sflag [#allocation5], 1
    %4673 = vsyncpa %s4672, 1

</llo_original>
